<compile_context>
chip_gen: v5e
topology: v5e:2x2
jax: 0.10.0
libtpu: 0.0.40
codegen_flags: <defaults>
</compile_context>

<pallas_src>
import functools
import math

import jax
import jax.numpy as jnp
from jax.experimental import pallas as pl
from jax.experimental.pallas import tpu as pltpu

EPS = 1e-6


def _encoder_layer_kernel(
    # grid inputs
    x_ref, mask_ref,
    # layernorm 1
    ln1a_ref, ln1b_ref,
    # fused attention projections
    wqkv_ref, bqkv_ref,          # (D, 3D) mm_dtype, (1, 3D) f32  (1/sqrt(dk) folded into q part)
    wo_ref, bo_ref,              # (D, D)  mm_dtype, (1, D)  f32
    # layernorm 2
    ln2a_ref, ln2b_ref,
    # feed-forward
    w1_ref, b1_ref, w2_ref, b2_ref,
    # output
    out_ref,
    *, num_heads, mm_dtype, approx_recip,
):
    x = x_ref[0]                 # (S, D) f32
    m = mask_ref[0]              # (1, S) f32

    S, D = x.shape
    H = num_heads
    dk = D // H

    def layer_norm(v, a, b):
        # torch module: unbiased std (N-1), divide by (std + eps)
        mean = jnp.mean(v, axis=-1, keepdims=True)
        var = jnp.sum((v - mean) ** 2, axis=-1, keepdims=True) / (D - 1)
        std = jnp.sqrt(var)
        return a * (v - mean) / (std + EPS) + b

    # Additive mask bias, computed once per batch element, broadcast over (S, S).
    bias = jnp.where(m == 0.0, jnp.float32(-1e9), jnp.float32(0.0))   # (1, S)

    # ---- sublayer 0: pre-norm multi-head self-attention ----
    h = layer_norm(x, ln1a_ref[...], ln1b_ref[...]).astype(mm_dtype)  # (S, D)
    # One fused lane-dense projection: (S, D) @ (D, 3D) -> (S, 3D), f32 accumulation.
    qkv = jnp.dot(h, wqkv_ref[...],
                  preferred_element_type=jnp.float32) + bqkv_ref[...]  # (S, 3D) f32

    # Per-head attention with 2-D static column slices (no reshape/transpose of
    # activations needed; head loop is fully unrolled, H matmuls are inherent).
    ctx_heads = []
    for head in range(H):
        lo = head * dk
        qh = qkv[:, lo:lo + dk].astype(mm_dtype)                 # (S, dk), pre-scaled
        kh = qkv[:, D + lo:D + lo + dk].astype(mm_dtype)         # (S, dk)
        vh = qkv[:, 2 * D + lo:2 * D + lo + dk].astype(mm_dtype)  # (S, dk)

        # scores = q k^T (contraction on dk for both operands)
        s = jax.lax.dot_general(qh, kh, (((1,), (1,)), ((), ())),
                                preferred_element_type=jnp.float32)   # (S, S)
        s = s + bias
        s = s - jnp.max(s, axis=-1, keepdims=True)
        p = jnp.exp(s)                                           # unnormalized probs, f32
        inv = pl.reciprocal(jnp.sum(p, axis=-1, keepdims=True),
                            approx=approx_recip)                 # (S, 1)
        # Normalize AFTER the PV matmul: dk multiplies/row instead of S.
        c = jnp.dot(p.astype(mm_dtype), vh,
                    preferred_element_type=jnp.float32) * inv    # (S, dk) f32
        ctx_heads.append(c)

    ctx = jnp.concatenate(ctx_heads, axis=-1)                    # (S, D) f32
    # One fused output projection: (S, D) @ (D, D).
    attn = jnp.dot(ctx.astype(mm_dtype), wo_ref[...],
                   preferred_element_type=jnp.float32) + bo_ref[...]
    x1 = x + attn                                                # residual

    # ---- sublayer 1: pre-norm feed-forward ----
    h2 = layer_norm(x1, ln2a_ref[...], ln2b_ref[...]).astype(mm_dtype)
    ff = jnp.dot(h2, w1_ref[...],
                 preferred_element_type=jnp.float32) + b1_ref[...]
    ff = jnp.maximum(ff, 0.0)
    ff = jnp.dot(ff.astype(mm_dtype), w2_ref[...],
                 preferred_element_type=jnp.float32) + b2_ref[...]
    out_ref[0] = (x1 + ff).astype(out_ref.dtype)


def _vmem_capacity_bytes():
    """Per-core VMEM capacity; conservative fallback if the query is unavailable."""
    try:
        return int(pltpu.get_tpu_info().vmem_capacity_bytes)
    except Exception:
        return 64 * 1024 * 1024   # v7x per-TC size = safe lower bound


def encoder_layer_pallas(x, mask, params, *, num_heads, use_bf16=True,
                         single_buffer_weights=True):
    B, S, D = x.shape
    F = params["w1"].shape[1]
    H = num_heads
    dk = D // H
    mm_dtype = jnp.bfloat16 if use_bf16 else jnp.float32
    inv_sqrt_dk = 1.0 / math.sqrt(dk)

    # Fused QKV weight/bias; fold 1/sqrt(dk) into BOTH the q weight and q bias.
    wqkv = jnp.concatenate(
        [params["wq"] * inv_sqrt_dk, params["wk"], params["wv"]], axis=1
    ).astype(mm_dtype)                                           # (D, 3D)
    bqkv = jnp.concatenate(
        [params["bq"] * inv_sqrt_dk, params["bk"], params["bv"]], axis=1
    )                                                            # (1, 3D) f32
    wo = params["wo"].astype(mm_dtype)                           # (D, D)
    w1 = params["w1"].astype(mm_dtype)                           # (D, F)
    w2 = params["w2"].astype(mm_dtype)                           # (F, D)

    operands = (
        x, mask,
        params["ln1_a"], params["ln1_b"],
        wqkv, bqkv, wo, params["bo"],
        params["ln2_a"], params["ln2_b"],
        w1, params["b1"], w2, params["b2"],
    )

    def resident(arr, single_buffer):
        # Full-array block with a constant index -> stays in VMEM across grid steps.
        zeros = (0,) * arr.ndim
        idx = lambda b, z=zeros: z
        if single_buffer:
            # Constant-index operands don't need double-buffering; halve their VMEM.
            return pl.BlockSpec(arr.shape, idx, pipeline_mode=pl.Buffered(1))
        return pl.BlockSpec(arr.shape, idx)

    kernel = functools.partial(
        _encoder_layer_kernel,
        num_heads=num_heads, mm_dtype=mm_dtype, approx_recip=use_bf16,
    )

    # Cost estimate: fused QKV + scores + PV + O-proj + 2 FFN matmuls, exp per score.
    itemsize = 2 if use_bf16 else 4
    weight_bytes = (4 * D * D + 2 * D * F) * itemsize + (9 * D + F) * 4
    flops = int(B * 2 * S * D * (4 * D + 2 * S + 2 * F))
    transcendentals = int(B * H * S * (S + 1))
    bytes_accessed = int(2 * B * S * D * 4 + B * S * 4 + weight_bytes)

    # VMEM budget: working set (weights + activations + score tiles) with headroom,
    # capped per-generation from the hardware query (v7x ~52 MiB, v5e/v6e ~116 MiB).
    act_bytes = (10 * S * D + 2 * S * F + 4 * S * S) * 4
    vmem_cap = max(_vmem_capacity_bytes() - 12 * 1024 * 1024, 32 * 1024 * 1024)
    vmem_limit = int(min(max(4 * (weight_bytes + act_bytes), 32 * 1024 * 1024),
                         vmem_cap))

    def build(single_buffer):
        in_specs = [
            pl.BlockSpec((1, S, D), lambda b: (b, 0, 0)),   # x
            pl.BlockSpec((1, 1, S), lambda b: (b, 0, 0)),   # mask
        ] + [resident(a, single_buffer) for a in operands[2:]]
        return pl.pallas_call(
            kernel,
            out_shape=jax.ShapeDtypeStruct((B, S, D), x.dtype),
            grid_spec=pltpu.PrefetchScalarGridSpec(
                num_scalar_prefetch=0,
                grid=(B,),
                in_specs=in_specs,
                out_specs=pl.BlockSpec((1, S, D), lambda b: (b, 0, 0)),
            ),
            compiler_params=pltpu.CompilerParams(
                dimension_semantics=("parallel",),
                vmem_limit_bytes=vmem_limit,
            ),
            cost_estimate=pl.CostEstimate(
                flops=flops, transcendentals=transcendentals,
                bytes_accessed=bytes_accessed),
        )

    if single_buffer_weights:
        try:
            return build(True)(*operands)
        except Exception:
            # pl.Buffered(1) not supported by this JAX/Mosaic version; fall back
            # to default double-buffered resident weights (correctness identical).
            pass
    return build(False)(*operands)


def encoder_layer_ref(x, mask, params, *, num_heads):
    """Pure-JAX reference mirroring the torch module (eval mode)."""
    B, S, D = x.shape
    dk = D // num_heads

    def layer_norm(v, a, b):
        mean = jnp.mean(v, axis=-1, keepdims=True)
        var = jnp.sum((v - mean) ** 2, axis=-1, keepdims=True) / (D - 1)
        std = jnp.sqrt(var)
        return a[0] * (v - mean) / (std + EPS) + b[0]

    h = layer_norm(x, params["ln1_a"], params["ln1_b"])
    q = h @ params["wq"] + params["bq"][0]
    k = h @ params["wk"] + params["bk"][0]
    v = h @ params["wv"] + params["bv"][0]

    def split(t):
        return t.reshape(B, S, num_heads, dk).transpose(0, 2, 1, 3)

    qh, kh, vh = split(q), split(k), split(v)
    scores = jnp.einsum("bhqd,bhkd->bhqk", qh, kh) / math.sqrt(dk)
    m = mask[:, None, :, :]  # (B,1,1,S)
    scores = jnp.where(m == 0.0, -1e9, scores)
    p = jax.nn.softmax(scores, axis=-1)
    ctx = jnp.einsum("bhqk,bhkd->bhqd", p, vh).transpose(0, 2, 1, 3).reshape(B, S, D)
    attn_out = ctx @ params["wo"] + params["bo"][0]
    x1 = x + attn_out
    h2 = layer_norm(x1, params["ln2_a"], params["ln2_b"])
    ff = jnp.maximum(h2 @ params["w1"] + params["b1"][0], 0.0) @ params["w2"] + params["b2"][0]
    return x1 + ff


def init_params(key, D, F):
    keys = jax.random.split(key, 12)
    scale_d = 1.0 / math.sqrt(D)
    scale_f = 1.0 / math.sqrt(F)
    return {
        "ln1_a": jnp.ones((1, D), jnp.float32),
        "ln1_b": jnp.zeros((1, D), jnp.float32),
        "ln2_a": jnp.ones((1, D), jnp.float32),
        "ln2_b": jnp.zeros((1, D), jnp.float32),
        "wq": jax.random.normal(keys[0], (D, D), jnp.float32) * scale_d,
        "bq": jax.random.normal(keys[1], (1, D), jnp.float32) * 0.01,
        "wk": jax.random.normal(keys[2], (D, D), jnp.float32) * scale_d,
        "bk": jax.random.normal(keys[3], (1, D), jnp.float32) * 0.01,
        "wv": jax.random.normal(keys[4], (D, D), jnp.float32) * scale_d,
        "bv": jax.random.normal(keys[5], (1, D), jnp.float32) * 0.01,
        "wo": jax.random.normal(keys[6], (D, D), jnp.float32) * scale_d,
        "bo": jax.random.normal(keys[7], (1, D), jnp.float32) * 0.01,
        "w1": jax.random.normal(keys[8], (D, F), jnp.float32) * scale_d,
        "b1": jax.random.normal(keys[9], (1, F), jnp.float32) * 0.01,
        "w2": jax.random.normal(keys[10], (F, D), jnp.float32) * scale_f,
        "b2": jax.random.normal(keys[11], (1, D), jnp.float32) * 0.01,
    }


if __name__ == "__main__":
    B, S, D, H, FF = 2, 8, 32, 4, 64

    key = jax.random.PRNGKey(0)
    kx, kp = jax.random.split(key)
    x = jax.random.normal(kx, (B, S, D), jnp.float32)

    # mask: (B, 1, S); batch 0 fully visible, batch 1 has last 2 positions masked.
    mask = jnp.ones((B, 1, S), jnp.float32)
    mask = mask.at[1, 0, S - 2:].set(0.0)

    params = init_params(kp, D, FF)
    ref = encoder_layer_ref(x, mask, params, num_heads=H)

    # Exact-math path (f32 matmul operands, exact reciprocal): structural check.
    out_f32 = jax.block_until_ready(
        encoder_layer_pallas(x, mask, params, num_heads=H, use_bf16=False))
    assert out_f32.shape == (B, S, D)
    err32 = float(jnp.max(jnp.abs(out_f32 - ref)))
    assert jnp.allclose(out_f32, ref, atol=1e-3, rtol=1e-3), f"f32 max abs err {err32}"

    # Fast path (bf16 MXU operands, f32 accumulation, approx EUP reciprocal).
    out_bf16 = jax.block_until_ready(
        encoder_layer_pallas(x, mask, params, num_heads=H, use_bf16=True))
    err16 = float(jnp.max(jnp.abs(out_bf16 - ref)))
    assert jnp.allclose(out_bf16, ref, atol=7.5e-2, rtol=7.5e-2), f"bf16 max abs err {err16}"

    print("KERNEL_OK")
</pallas_src>

<mosaic_0001>
module attributes {stable_mosaic.version = 11 : i64} {
  func.func @_encoder_layer_kernel(%arg0: i32, %arg1: memref<1x8x32xf32, #tpu.memory_space<vmem>>, %arg2: memref<1x1x8xf32, #tpu.memory_space<vmem>>, %arg3: memref<1x32xf32, #tpu.memory_space<vmem>>, %arg4: memref<1x32xf32, #tpu.memory_space<vmem>>, %arg5: memref<32x96xf32, #tpu.memory_space<vmem>>, %arg6: memref<1x96xf32, #tpu.memory_space<vmem>>, %arg7: memref<32x32xf32, #tpu.memory_space<vmem>>, %arg8: memref<1x32xf32, #tpu.memory_space<vmem>>, %arg9: memref<1x32xf32, #tpu.memory_space<vmem>>, %arg10: memref<1x32xf32, #tpu.memory_space<vmem>>, %arg11: memref<32x64xf32, #tpu.memory_space<vmem>>, %arg12: memref<1x64xf32, #tpu.memory_space<vmem>>, %arg13: memref<64x32xf32, #tpu.memory_space<vmem>>, %arg14: memref<1x32xf32, #tpu.memory_space<vmem>>, %arg15: memref<1x8x32xf32, #tpu.memory_space<vmem>>) attributes {dimension_semantics = [#tpu.dimension_semantics<parallel>], iteration_bounds = array<i64: 2>, scalar_prefetch = 0 : i64, scratch_operands = 0 : i64, tpu.core_type = #tpu.core_type<tc>, window_params = [{transform_indices = @transform_0, window_bounds = array<i64: 1, 8, 32>}, {transform_indices = @transform_1, window_bounds = array<i64: 1, 1, 8>}, {pipeline_mode = #tpu.pipeline_mode<synchronous>, transform_indices = @transform_2, window_bounds = array<i64: 1, 32>}, {pipeline_mode = #tpu.pipeline_mode<synchronous>, transform_indices = @transform_3, window_bounds = array<i64: 1, 32>}, {pipeline_mode = #tpu.pipeline_mode<synchronous>, transform_indices = @transform_4, window_bounds = array<i64: 32, 96>}, {pipeline_mode = #tpu.pipeline_mode<synchronous>, transform_indices = @transform_5, window_bounds = array<i64: 1, 96>}, {pipeline_mode = #tpu.pipeline_mode<synchronous>, transform_indices = @transform_6, window_bounds = array<i64: 32, 32>}, {pipeline_mode = #tpu.pipeline_mode<synchronous>, transform_indices = @transform_7, window_bounds = array<i64: 1, 32>}, {pipeline_mode = #tpu.pipeline_mode<synchronous>, transform_indices = @transform_8, window_bounds = array<i64: 1, 32>}, {pipeline_mode = #tpu.pipeline_mode<synchronous>, transform_indices = @transform_9, window_bounds = array<i64: 1, 32>}, {pipeline_mode = #tpu.pipeline_mode<synchronous>, transform_indices = @transform_10, window_bounds = array<i64: 32, 64>}, {pipeline_mode = #tpu.pipeline_mode<synchronous>, transform_indices = @transform_11, window_bounds = array<i64: 1, 64>}, {pipeline_mode = #tpu.pipeline_mode<synchronous>, transform_indices = @transform_12, window_bounds = array<i64: 64, 32>}, {pipeline_mode = #tpu.pipeline_mode<synchronous>, transform_indices = @transform_13, window_bounds = array<i64: 1, 32>}, {transform_indices = @transform_14, window_bounds = array<i64: 1, 8, 32>}]} {
    %c0 = arith.constant 0 : index
    %c0_0 = arith.constant 0 : index
    %c0_1 = arith.constant 0 : index
    %0 = vector.load %arg1[%c0, %c0_0, %c0_1] : memref<1x8x32xf32, #tpu.memory_space<vmem>>, vector<1x8x32xf32>
    %1 = vector.shape_cast %0 : vector<1x8x32xf32> to vector<8x32xf32>
    %c0_2 = arith.constant 0 : index
    %c0_3 = arith.constant 0 : index
    %c0_4 = arith.constant 0 : index
    %2 = vector.load %arg2[%c0_2, %c0_3, %c0_4] : memref<1x1x8xf32, #tpu.memory_space<vmem>>, vector<1x1x8xf32>
    %3 = vector.shape_cast %2 : vector<1x1x8xf32> to vector<1x8xf32>
    %cst = arith.constant 0.000000e+00 : f32
    %4 = vector.broadcast %cst : f32 to vector<1x8xf32>
    %5 = arith.cmpf oeq, %3, %4 : vector<1x8xf32>
    %cst_5 = arith.constant -1.000000e+09 : f32
    %cst_6 = arith.constant 0.000000e+00 : f32
    %6 = vector.broadcast %cst_5 : f32 to vector<1x8xf32>
    %7 = vector.broadcast %cst_6 : f32 to vector<1x8xf32>
    %8 = arith.select %5, %6, %7 : vector<1x8xi1>, vector<1x8xf32>
    %c0_7 = arith.constant 0 : index
    %c0_8 = arith.constant 0 : index
    %9 = vector.load %arg3[%c0_7, %c0_8] : memref<1x32xf32, #tpu.memory_space<vmem>>, vector<1x32xf32>
    %c0_9 = arith.constant 0 : index
    %c0_10 = arith.constant 0 : index
    %10 = vector.load %arg4[%c0_9, %c0_10] : memref<1x32xf32, #tpu.memory_space<vmem>>, vector<1x32xf32>
    %cst_11 = arith.constant dense<0.000000e+00> : vector<8xf32>
    %11 = vector.multi_reduction <add>, %1, %cst_11 [1] : vector<8x32xf32> to vector<8xf32>
    %12 = vector.shape_cast %11 : vector<8xf32> to vector<8x1xf32>
    %cst_12 = arith.constant 3.200000e+01 : f32
    %13 = vector.broadcast %cst_12 : f32 to vector<8x1xf32>
    %14 = arith.divf %12, %13 : vector<8x1xf32>
    %15 = vector.broadcast %14 : vector<8x1xf32> to vector<8x32xf32>
    %16 = arith.subf %1, %15 : vector<8x32xf32>
    %17 = arith.mulf %16, %16 : vector<8x32xf32>
    %cst_13 = arith.constant dense<0.000000e+00> : vector<8xf32>
    %18 = vector.multi_reduction <add>, %17, %cst_13 [1] : vector<8x32xf32> to vector<8xf32>
    %19 = vector.shape_cast %18 : vector<8xf32> to vector<8x1xf32>
    %cst_14 = arith.constant 3.100000e+01 : f32
    %20 = vector.broadcast %cst_14 : f32 to vector<8x1xf32>
    %21 = arith.divf %19, %20 : vector<8x1xf32>
    %22 = math.sqrt %21 : vector<8x1xf32>
    %23 = vector.broadcast %14 : vector<8x1xf32> to vector<8x32xf32>
    %24 = arith.subf %1, %23 : vector<8x32xf32>
    %25 = vector.broadcast %9 : vector<1x32xf32> to vector<8x32xf32>
    %26 = arith.mulf %25, %24 : vector<8x32xf32>
    %cst_15 = arith.constant 9.99999997E-7 : f32
    %27 = vector.broadcast %cst_15 : f32 to vector<8x1xf32>
    %28 = arith.addf %22, %27 : vector<8x1xf32>
    %29 = vector.broadcast %28 : vector<8x1xf32> to vector<8x32xf32>
    %30 = arith.divf %26, %29 : vector<8x32xf32>
    %31 = vector.broadcast %10 : vector<1x32xf32> to vector<8x32xf32>
    %32 = arith.addf %30, %31 : vector<8x32xf32>
    %c0_16 = arith.constant 0 : index
    %c0_17 = arith.constant 0 : index
    %33 = vector.load %arg5[%c0_16, %c0_17] : memref<32x96xf32, #tpu.memory_space<vmem>>, vector<32x96xf32>
    %cst_18 = arith.constant dense<0.000000e+00> : vector<8x96xf32>
    %34 = tpu.matmul %32, %33, %cst_18 {dimension_numbers = #tpu.dot_dimension_numbers<[1], [0], [0], [1], [0, 0, 1, 1], [], []>} : vector<8x32xf32>, vector<32x96xf32>, vector<8x96xf32> -> vector<8x96xf32>
    %c0_19 = arith.constant 0 : index
    %c0_20 = arith.constant 0 : index
    %35 = vector.load %arg6[%c0_19, %c0_20] : memref<1x96xf32, #tpu.memory_space<vmem>>, vector<1x96xf32>
    %36 = vector.broadcast %35 : vector<1x96xf32> to vector<8x96xf32>
    %37 = arith.addf %34, %36 : vector<8x96xf32>
    %38 = vector.extract_strided_slice %37 {offsets = [0, 0], sizes = [8, 8], strides = [1, 1]} : vector<8x96xf32> to vector<8x8xf32>
    %39 = vector.extract_strided_slice %37 {offsets = [0, 32], sizes = [8, 8], strides = [1, 1]} : vector<8x96xf32> to vector<8x8xf32>
    %40 = vector.extract_strided_slice %37 {offsets = [0, 64], sizes = [8, 8], strides = [1, 1]} : vector<8x96xf32> to vector<8x8xf32>
    %cst_21 = arith.constant dense<0.000000e+00> : vector<8x8xf32>
    %41 = tpu.matmul %38, %39, %cst_21 {dimension_numbers = #tpu.dot_dimension_numbers<[1], [1], [0], [0], [0, 0, 1, 0], [], []>} : vector<8x8xf32>, vector<8x8xf32>, vector<8x8xf32> -> vector<8x8xf32>
    %42 = vector.broadcast %8 : vector<1x8xf32> to vector<8x8xf32>
    %43 = arith.addf %41, %42 : vector<8x8xf32>
    %cst_22 = arith.constant dense<0xFF800000> : vector<8xf32>
    %44 = vector.multi_reduction <maximumf>, %43, %cst_22 [1] : vector<8x8xf32> to vector<8xf32>
    %45 = vector.shape_cast %44 : vector<8xf32> to vector<8x1xf32>
    %46 = vector.broadcast %45 : vector<8x1xf32> to vector<8x8xf32>
    %47 = arith.subf %43, %46 : vector<8x8xf32>
    %48 = math.exp %47 : vector<8x8xf32>
    %cst_23 = arith.constant dense<0.000000e+00> : vector<8xf32>
    %49 = vector.multi_reduction <add>, %48, %cst_23 [1] : vector<8x8xf32> to vector<8xf32>
    %50 = vector.shape_cast %49 : vector<8xf32> to vector<8x1xf32>
    %51 = tpu.reciprocal %50 : vector<8x1xf32> -> vector<8x1xf32>
    %cst_24 = arith.constant dense<0.000000e+00> : vector<8x8xf32>
    %52 = tpu.matmul %48, %40, %cst_24 {dimension_numbers = #tpu.dot_dimension_numbers<[1], [0], [0], [1], [0, 0, 1, 1], [], []>} : vector<8x8xf32>, vector<8x8xf32>, vector<8x8xf32> -> vector<8x8xf32>
    %53 = vector.broadcast %51 : vector<8x1xf32> to vector<8x8xf32>
    %54 = arith.mulf %52, %53 : vector<8x8xf32>
    %55 = vector.extract_strided_slice %37 {offsets = [0, 8], sizes = [8, 8], strides = [1, 1]} : vector<8x96xf32> to vector<8x8xf32>
    %56 = vector.extract_strided_slice %37 {offsets = [0, 40], sizes = [8, 8], strides = [1, 1]} : vector<8x96xf32> to vector<8x8xf32>
    %57 = vector.extract_strided_slice %37 {offsets = [0, 72], sizes = [8, 8], strides = [1, 1]} : vector<8x96xf32> to vector<8x8xf32>
    %cst_25 = arith.constant dense<0.000000e+00> : vector<8x8xf32>
    %58 = tpu.matmul %55, %56, %cst_25 {dimension_numbers = #tpu.dot_dimension_numbers<[1], [1], [0], [0], [0, 0, 1, 0], [], []>} : vector<8x8xf32>, vector<8x8xf32>, vector<8x8xf32> -> vector<8x8xf32>
    %59 = vector.broadcast %8 : vector<1x8xf32> to vector<8x8xf32>
    %60 = arith.addf %58, %59 : vector<8x8xf32>
    %cst_26 = arith.constant dense<0xFF800000> : vector<8xf32>
    %61 = vector.multi_reduction <maximumf>, %60, %cst_26 [1] : vector<8x8xf32> to vector<8xf32>
    %62 = vector.shape_cast %61 : vector<8xf32> to vector<8x1xf32>
    %63 = vector.broadcast %62 : vector<8x1xf32> to vector<8x8xf32>
    %64 = arith.subf %60, %63 : vector<8x8xf32>
    %65 = math.exp %64 : vector<8x8xf32>
    %cst_27 = arith.constant dense<0.000000e+00> : vector<8xf32>
    %66 = vector.multi_reduction <add>, %65, %cst_27 [1] : vector<8x8xf32> to vector<8xf32>
    %67 = vector.shape_cast %66 : vector<8xf32> to vector<8x1xf32>
    %68 = tpu.reciprocal %67 : vector<8x1xf32> -> vector<8x1xf32>
    %cst_28 = arith.constant dense<0.000000e+00> : vector<8x8xf32>
    %69 = tpu.matmul %65, %57, %cst_28 {dimension_numbers = #tpu.dot_dimension_numbers<[1], [0], [0], [1], [0, 0, 1, 1], [], []>} : vector<8x8xf32>, vector<8x8xf32>, vector<8x8xf32> -> vector<8x8xf32>
    %70 = vector.broadcast %68 : vector<8x1xf32> to vector<8x8xf32>
    %71 = arith.mulf %69, %70 : vector<8x8xf32>
    %72 = vector.extract_strided_slice %37 {offsets = [0, 16], sizes = [8, 8], strides = [1, 1]} : vector<8x96xf32> to vector<8x8xf32>
    %73 = vector.extract_strided_slice %37 {offsets = [0, 48], sizes = [8, 8], strides = [1, 1]} : vector<8x96xf32> to vector<8x8xf32>
    %74 = vector.extract_strided_slice %37 {offsets = [0, 80], sizes = [8, 8], strides = [1, 1]} : vector<8x96xf32> to vector<8x8xf32>
    %cst_29 = arith.constant dense<0.000000e+00> : vector<8x8xf32>
    %75 = tpu.matmul %72, %73, %cst_29 {dimension_numbers = #tpu.dot_dimension_numbers<[1], [1], [0], [0], [0, 0, 1, 0], [], []>} : vector<8x8xf32>, vector<8x8xf32>, vector<8x8xf32> -> vector<8x8xf32>
    %76 = vector.broadcast %8 : vector<1x8xf32> to vector<8x8xf32>
    %77 = arith.addf %75, %76 : vector<8x8xf32>
    %cst_30 = arith.constant dense<0xFF800000> : vector<8xf32>
    %78 = vector.multi_reduction <maximumf>, %77, %cst_30 [1] : vector<8x8xf32> to vector<8xf32>
    %79 = vector.shape_cast %78 : vector<8xf32> to vector<8x1xf32>
    %80 = vector.broadcast %79 : vector<8x1xf32> to vector<8x8xf32>
    %81 = arith.subf %77, %80 : vector<8x8xf32>
    %82 = math.exp %81 : vector<8x8xf32>
    %cst_31 = arith.constant dense<0.000000e+00> : vector<8xf32>
    %83 = vector.multi_reduction <add>, %82, %cst_31 [1] : vector<8x8xf32> to vector<8xf32>
    %84 = vector.shape_cast %83 : vector<8xf32> to vector<8x1xf32>
    %85 = tpu.reciprocal %84 : vector<8x1xf32> -> vector<8x1xf32>
    %cst_32 = arith.constant dense<0.000000e+00> : vector<8x8xf32>
    %86 = tpu.matmul %82, %74, %cst_32 {dimension_numbers = #tpu.dot_dimension_numbers<[1], [0], [0], [1], [0, 0, 1, 1], [], []>} : vector<8x8xf32>, vector<8x8xf32>, vector<8x8xf32> -> vector<8x8xf32>
    %87 = vector.broadcast %85 : vector<8x1xf32> to vector<8x8xf32>
    %88 = arith.mulf %86, %87 : vector<8x8xf32>
    %89 = vector.extract_strided_slice %37 {offsets = [0, 24], sizes = [8, 8], strides = [1, 1]} : vector<8x96xf32> to vector<8x8xf32>
    %90 = vector.extract_strided_slice %37 {offsets = [0, 56], sizes = [8, 8], strides = [1, 1]} : vector<8x96xf32> to vector<8x8xf32>
    %91 = vector.extract_strided_slice %37 {offsets = [0, 88], sizes = [8, 8], strides = [1, 1]} : vector<8x96xf32> to vector<8x8xf32>
    %cst_33 = arith.constant dense<0.000000e+00> : vector<8x8xf32>
    %92 = tpu.matmul %89, %90, %cst_33 {dimension_numbers = #tpu.dot_dimension_numbers<[1], [1], [0], [0], [0, 0, 1, 0], [], []>} : vector<8x8xf32>, vector<8x8xf32>, vector<8x8xf32> -> vector<8x8xf32>
    %93 = vector.broadcast %8 : vector<1x8xf32> to vector<8x8xf32>
    %94 = arith.addf %92, %93 : vector<8x8xf32>
    %cst_34 = arith.constant dense<0xFF800000> : vector<8xf32>
    %95 = vector.multi_reduction <maximumf>, %94, %cst_34 [1] : vector<8x8xf32> to vector<8xf32>
    %96 = vector.shape_cast %95 : vector<8xf32> to vector<8x1xf32>
    %97 = vector.broadcast %96 : vector<8x1xf32> to vector<8x8xf32>
    %98 = arith.subf %94, %97 : vector<8x8xf32>
    %99 = math.exp %98 : vector<8x8xf32>
    %cst_35 = arith.constant dense<0.000000e+00> : vector<8xf32>
    %100 = vector.multi_reduction <add>, %99, %cst_35 [1] : vector<8x8xf32> to vector<8xf32>
    %101 = vector.shape_cast %100 : vector<8xf32> to vector<8x1xf32>
    %102 = tpu.reciprocal %101 : vector<8x1xf32> -> vector<8x1xf32>
    %cst_36 = arith.constant dense<0.000000e+00> : vector<8x8xf32>
    %103 = tpu.matmul %99, %91, %cst_36 {dimension_numbers = #tpu.dot_dimension_numbers<[1], [0], [0], [1], [0, 0, 1, 1], [], []>} : vector<8x8xf32>, vector<8x8xf32>, vector<8x8xf32> -> vector<8x8xf32>
    %104 = vector.broadcast %102 : vector<8x1xf32> to vector<8x8xf32>
    %105 = arith.mulf %103, %104 : vector<8x8xf32>
    %106 = tpu.concatenate %54, %71, %88, %105 in 1 : vector<8x8xf32>, vector<8x8xf32>, vector<8x8xf32>, vector<8x8xf32> -> vector<8x32xf32>
    %c0_37 = arith.constant 0 : index
    %c0_38 = arith.constant 0 : index
    %107 = vector.load %arg7[%c0_37, %c0_38] : memref<32x32xf32, #tpu.memory_space<vmem>>, vector<32x32xf32>
    %cst_39 = arith.constant dense<0.000000e+00> : vector<8x32xf32>
    %108 = tpu.matmul %106, %107, %cst_39 {dimension_numbers = #tpu.dot_dimension_numbers<[1], [0], [0], [1], [0, 0, 1, 1], [], []>} : vector<8x32xf32>, vector<32x32xf32>, vector<8x32xf32> -> vector<8x32xf32>
    %c0_40 = arith.constant 0 : index
    %c0_41 = arith.constant 0 : index
    %109 = vector.load %arg8[%c0_40, %c0_41] : memref<1x32xf32, #tpu.memory_space<vmem>>, vector<1x32xf32>
    %110 = vector.broadcast %109 : vector<1x32xf32> to vector<8x32xf32>
    %111 = arith.addf %108, %110 : vector<8x32xf32>
    %112 = arith.addf %1, %111 : vector<8x32xf32>
    %c0_42 = arith.constant 0 : index
    %c0_43 = arith.constant 0 : index
    %113 = vector.load %arg9[%c0_42, %c0_43] : memref<1x32xf32, #tpu.memory_space<vmem>>, vector<1x32xf32>
    %c0_44 = arith.constant 0 : index
    %c0_45 = arith.constant 0 : index
    %114 = vector.load %arg10[%c0_44, %c0_45] : memref<1x32xf32, #tpu.memory_space<vmem>>, vector<1x32xf32>
    %cst_46 = arith.constant dense<0.000000e+00> : vector<8xf32>
    %115 = vector.multi_reduction <add>, %112, %cst_46 [1] : vector<8x32xf32> to vector<8xf32>
    %116 = vector.shape_cast %115 : vector<8xf32> to vector<8x1xf32>
    %cst_47 = arith.constant 3.200000e+01 : f32
    %117 = vector.broadcast %cst_47 : f32 to vector<8x1xf32>
    %118 = arith.divf %116, %117 : vector<8x1xf32>
    %119 = vector.broadcast %118 : vector<8x1xf32> to vector<8x32xf32>
    %120 = arith.subf %112, %119 : vector<8x32xf32>
    %121 = arith.mulf %120, %120 : vector<8x32xf32>
    %cst_48 = arith.constant dense<0.000000e+00> : vector<8xf32>
    %122 = vector.multi_reduction <add>, %121, %cst_48 [1] : vector<8x32xf32> to vector<8xf32>
    %123 = vector.shape_cast %122 : vector<8xf32> to vector<8x1xf32>
    %cst_49 = arith.constant 3.100000e+01 : f32
    %124 = vector.broadcast %cst_49 : f32 to vector<8x1xf32>
    %125 = arith.divf %123, %124 : vector<8x1xf32>
    %126 = math.sqrt %125 : vector<8x1xf32>
    %127 = vector.broadcast %118 : vector<8x1xf32> to vector<8x32xf32>
    %128 = arith.subf %112, %127 : vector<8x32xf32>
    %129 = vector.broadcast %113 : vector<1x32xf32> to vector<8x32xf32>
    %130 = arith.mulf %129, %128 : vector<8x32xf32>
    %cst_50 = arith.constant 9.99999997E-7 : f32
    %131 = vector.broadcast %cst_50 : f32 to vector<8x1xf32>
    %132 = arith.addf %126, %131 : vector<8x1xf32>
    %133 = vector.broadcast %132 : vector<8x1xf32> to vector<8x32xf32>
    %134 = arith.divf %130, %133 : vector<8x32xf32>
    %135 = vector.broadcast %114 : vector<1x32xf32> to vector<8x32xf32>
    %136 = arith.addf %134, %135 : vector<8x32xf32>
    %c0_51 = arith.constant 0 : index
    %c0_52 = arith.constant 0 : index
    %137 = vector.load %arg11[%c0_51, %c0_52] : memref<32x64xf32, #tpu.memory_space<vmem>>, vector<32x64xf32>
    %cst_53 = arith.constant dense<0.000000e+00> : vector<8x64xf32>
    %138 = tpu.matmul %136, %137, %cst_53 {dimension_numbers = #tpu.dot_dimension_numbers<[1], [0], [0], [1], [0, 0, 1, 1], [], []>} : vector<8x32xf32>, vector<32x64xf32>, vector<8x64xf32> -> vector<8x64xf32>
    %c0_54 = arith.constant 0 : index
    %c0_55 = arith.constant 0 : index
    %139 = vector.load %arg12[%c0_54, %c0_55] : memref<1x64xf32, #tpu.memory_space<vmem>>, vector<1x64xf32>
    %140 = vector.broadcast %139 : vector<1x64xf32> to vector<8x64xf32>
    %141 = arith.addf %138, %140 : vector<8x64xf32>
    %cst_56 = arith.constant 0.000000e+00 : f32
    %142 = vector.broadcast %cst_56 : f32 to vector<8x64xf32>
    %143 = arith.maximumf %141, %142 : vector<8x64xf32>
    %c0_57 = arith.constant 0 : index
    %c0_58 = arith.constant 0 : index
    %144 = vector.load %arg13[%c0_57, %c0_58] : memref<64x32xf32, #tpu.memory_space<vmem>>, vector<64x32xf32>
    %cst_59 = arith.constant dense<0.000000e+00> : vector<8x32xf32>
    %145 = tpu.matmul %143, %144, %cst_59 {dimension_numbers = #tpu.dot_dimension_numbers<[1], [0], [0], [1], [0, 0, 1, 1], [], []>} : vector<8x64xf32>, vector<64x32xf32>, vector<8x32xf32> -> vector<8x32xf32>
    %c0_60 = arith.constant 0 : index
    %c0_61 = arith.constant 0 : index
    %146 = vector.load %arg14[%c0_60, %c0_61] : memref<1x32xf32, #tpu.memory_space<vmem>>, vector<1x32xf32>
    %147 = vector.broadcast %146 : vector<1x32xf32> to vector<8x32xf32>
    %148 = arith.addf %145, %147 : vector<8x32xf32>
    %149 = arith.addf %112, %148 : vector<8x32xf32>
    %c0_62 = arith.constant 0 : index
    %c0_63 = arith.constant 0 : index
    %c0_64 = arith.constant 0 : index
    %150 = vector.load %arg15[%c0_62, %c0_63, %c0_64] : memref<1x8x32xf32, #tpu.memory_space<vmem>>, vector<1x8x32xf32>
    %151 = vector.shape_cast %150 : vector<1x8x32xf32> to vector<8x32xf32>
    %152 = vector.shape_cast %149 : vector<8x32xf32> to vector<1x8x32xf32>
    tpu.vector_store %arg15[%c0_62, %c0_63, %c0_64], %152 {strides = array<i32>} : memref<1x8x32xf32, #tpu.memory_space<vmem>>, vector<1x8x32xf32>,
    return
  }
  func.func @transform_0(%arg0: i32) -> (i32, i32, i32) {
    %c0_i32 = arith.constant 0 : i32
    %c0_i32_0 = arith.constant 0 : i32
    %c0_i32_1 = arith.constant 0 : i32
    return %arg0, %c0_i32, %c0_i32_0 : i32, i32, i32
  }
  func.func @transform_1(%arg0: i32) -> (i32, i32, i32) {
    %c0_i32 = arith.constant 0 : i32
    %c0_i32_0 = arith.constant 0 : i32
    %c0_i32_1 = arith.constant 0 : i32
    return %arg0, %c0_i32, %c0_i32_0 : i32, i32, i32
  }
  func.func @transform_2(%arg0: i32) -> (i32, i32) {
    %c0_i32 = arith.constant 0 : i32
    %c0_i32_0 = arith.constant 0 : i32
    %c0_i32_1 = arith.constant 0 : i32
    return %c0_i32, %c0_i32_0 : i32, i32
  }
  func.func @transform_3(%arg0: i32) -> (i32, i32) {
    %c0_i32 = arith.constant 0 : i32
    %c0_i32_0 = arith.constant 0 : i32
    %c0_i32_1 = arith.constant 0 : i32
    return %c0_i32, %c0_i32_0 : i32, i32
  }
  func.func @transform_4(%arg0: i32) -> (i32, i32) {
    %c0_i32 = arith.constant 0 : i32
    %c0_i32_0 = arith.constant 0 : i32
    %c0_i32_1 = arith.constant 0 : i32
    return %c0_i32, %c0_i32_0 : i32, i32
  }
  func.func @transform_5(%arg0: i32) -> (i32, i32) {
    %c0_i32 = arith.constant 0 : i32
    %c0_i32_0 = arith.constant 0 : i32
    %c0_i32_1 = arith.constant 0 : i32
    return %c0_i32, %c0_i32_0 : i32, i32
  }
  func.func @transform_6(%arg0: i32) -> (i32, i32) {
    %c0_i32 = arith.constant 0 : i32
    %c0_i32_0 = arith.constant 0 : i32
    %c0_i32_1 = arith.constant 0 : i32
    return %c0_i32, %c0_i32_0 : i32, i32
  }
  func.func @transform_7(%arg0: i32) -> (i32, i32) {
    %c0_i32 = arith.constant 0 : i32
    %c0_i32_0 = arith.constant 0 : i32
    %c0_i32_1 = arith.constant 0 : i32
    return %c0_i32, %c0_i32_0 : i32, i32
  }
  func.func @transform_8(%arg0: i32) -> (i32, i32) {
    %c0_i32 = arith.constant 0 : i32
    %c0_i32_0 = arith.constant 0 : i32
    %c0_i32_1 = arith.constant 0 : i32
    return %c0_i32, %c0_i32_0 : i32, i32
  }
  func.func @transform_9(%arg0: i32) -> (i32, i32) {
    %c0_i32 = arith.constant 0 : i32
    %c0_i32_0 = arith.constant 0 : i32
    %c0_i32_1 = arith.constant 0 : i32
    return %c0_i32, %c0_i32_0 : i32, i32
  }
  func.func @transform_10(%arg0: i32) -> (i32, i32) {
    %c0_i32 = arith.constant 0 : i32
    %c0_i32_0 = arith.constant 0 : i32
    %c0_i32_1 = arith.constant 0 : i32
    return %c0_i32, %c0_i32_0 : i32, i32
  }
  func.func @transform_11(%arg0: i32) -> (i32, i32) {
    %c0_i32 = arith.constant 0 : i32
    %c0_i32_0 = arith.constant 0 : i32
    %c0_i32_1 = arith.constant 0 : i32
    return %c0_i32, %c0_i32_0 : i32, i32
  }
  func.func @transform_12(%arg0: i32) -> (i32, i32) {
    %c0_i32 = arith.constant 0 : i32
    %c0_i32_0 = arith.constant 0 : i32
    %c0_i32_1 = arith.constant 0 : i32
    return %c0_i32, %c0_i32_0 : i32, i32
  }
  func.func @transform_13(%arg0: i32) -> (i32, i32) {
    %c0_i32 = arith.constant 0 : i32
    %c0_i32_0 = arith.constant 0 : i32
    %c0_i32_1 = arith.constant 0 : i32
    return %c0_i32, %c0_i32_0 : i32, i32
  }
  func.func @transform_14(%arg0: i32) -> (i32, i32, i32) {
    %c0_i32 = arith.constant 0 : i32
    %c0_i32_0 = arith.constant 0 : i32
    %c0_i32_1 = arith.constant 0 : i32
    return %arg0, %c0_i32, %c0_i32_0 : i32, i32, i32
  }
}

module attributes {stable_mosaic.version = 11 : i64} {
  func.func @_encoder_layer_kernel(%arg0: i32, %arg1: memref<1x8x32xf32, #tpu.memory_space<vmem>>, %arg2: memref<1x1x8xf32, #tpu.memory_space<vmem>>, %arg3: memref<1x32xf32, #tpu.memory_space<vmem>>, %arg4: memref<1x32xf32, #tpu.memory_space<vmem>>, %arg5: memref<32x96xf32, #tpu.memory_space<vmem>>, %arg6: memref<1x96xf32, #tpu.memory_space<vmem>>, %arg7: memref<32x32xf32, #tpu.memory_space<vmem>>, %arg8: memref<1x32xf32, #tpu.memory_space<vmem>>, %arg9: memref<1x32xf32, #tpu.memory_space<vmem>>, %arg10: memref<1x32xf32, #tpu.memory_space<vmem>>, %arg11: memref<32x64xf32, #tpu.memory_space<vmem>>, %arg12: memref<1x64xf32, #tpu.memory_space<vmem>>, %arg13: memref<64x32xf32, #tpu.memory_space<vmem>>, %arg14: memref<1x32xf32, #tpu.memory_space<vmem>>, %arg15: memref<1x8x32xf32, #tpu.memory_space<vmem>>) attributes {dimension_semantics = [#tpu.dimension_semantics<parallel>], iteration_bounds = array<i64: 2>, scalar_prefetch = 0 : i64, scratch_operands = 0 : i64, tpu.core_type = #tpu.core_type<tc>, window_params = [{transform_indices = @transform_0, window_bounds = array<i64: 1, 8, 32>}, {transform_indices = @transform_1, window_bounds = array<i64: 1, 1, 8>}, {pipeline_mode = #tpu.pipeline_mode<synchronous>, transform_indices = @transform_2, window_bounds = array<i64: 1, 32>}, {pipeline_mode = #tpu.pipeline_mode<synchronous>, transform_indices = @transform_3, window_bounds = array<i64: 1, 32>}, {pipeline_mode = #tpu.pipeline_mode<synchronous>, transform_indices = @transform_4, window_bounds = array<i64: 32, 96>}, {pipeline_mode = #tpu.pipeline_mode<synchronous>, transform_indices = @transform_5, window_bounds = array<i64: 1, 96>}, {pipeline_mode = #tpu.pipeline_mode<synchronous>, transform_indices = @transform_6, window_bounds = array<i64: 32, 32>}, {pipeline_mode = #tpu.pipeline_mode<synchronous>, transform_indices = @transform_7, window_bounds = array<i64: 1, 32>}, {pipeline_mode = #tpu.pipeline_mode<synchronous>, transform_indices = @transform_8, window_bounds = array<i64: 1, 32>}, {pipeline_mode = #tpu.pipeline_mode<synchronous>, transform_indices = @transform_9, window_bounds = array<i64: 1, 32>}, {pipeline_mode = #tpu.pipeline_mode<synchronous>, transform_indices = @transform_10, window_bounds = array<i64: 32, 64>}, {pipeline_mode = #tpu.pipeline_mode<synchronous>, transform_indices = @transform_11, window_bounds = array<i64: 1, 64>}, {pipeline_mode = #tpu.pipeline_mode<synchronous>, transform_indices = @transform_12, window_bounds = array<i64: 64, 32>}, {pipeline_mode = #tpu.pipeline_mode<synchronous>, transform_indices = @transform_13, window_bounds = array<i64: 1, 32>}, {transform_indices = @transform_14, window_bounds = array<i64: 1, 8, 32>}]} {
    %c0 = arith.constant 0 : index
    %c0_0 = arith.constant 0 : index
    %c0_1 = arith.constant 0 : index
    %0 = vector.load %arg1[%c0, %c0_0, %c0_1] : memref<1x8x32xf32, #tpu.memory_space<vmem>>, vector<1x8x32xf32>
    %1 = vector.shape_cast %0 : vector<1x8x32xf32> to vector<8x32xf32>
    %c0_2 = arith.constant 0 : index
    %c0_3 = arith.constant 0 : index
    %c0_4 = arith.constant 0 : index
    %2 = vector.load %arg2[%c0_2, %c0_3, %c0_4] : memref<1x1x8xf32, #tpu.memory_space<vmem>>, vector<1x1x8xf32>
    %3 = vector.shape_cast %2 : vector<1x1x8xf32> to vector<1x8xf32>
    %cst = arith.constant 0.000000e+00 : f32
    %4 = vector.broadcast %cst : f32 to vector<1x8xf32>
    %5 = arith.cmpf oeq, %3, %4 : vector<1x8xf32>
    %cst_5 = arith.constant -1.000000e+09 : f32
    %cst_6 = arith.constant 0.000000e+00 : f32
    %6 = vector.broadcast %cst_5 : f32 to vector<1x8xf32>
    %7 = vector.broadcast %cst_6 : f32 to vector<1x8xf32>
    %8 = arith.select %5, %6, %7 : vector<1x8xi1>, vector<1x8xf32>
    %c0_7 = arith.constant 0 : index
    %c0_8 = arith.constant 0 : index
    %9 = vector.load %arg3[%c0_7, %c0_8] : memref<1x32xf32, #tpu.memory_space<vmem>>, vector<1x32xf32>
    %c0_9 = arith.constant 0 : index
    %c0_10 = arith.constant 0 : index
    %10 = vector.load %arg4[%c0_9, %c0_10] : memref<1x32xf32, #tpu.memory_space<vmem>>, vector<1x32xf32>
    %cst_11 = arith.constant dense<0.000000e+00> : vector<8xf32>
    %11 = vector.multi_reduction <add>, %1, %cst_11 [1] : vector<8x32xf32> to vector<8xf32>
    %12 = vector.shape_cast %11 : vector<8xf32> to vector<8x1xf32>
    %cst_12 = arith.constant 3.200000e+01 : f32
    %13 = vector.broadcast %cst_12 : f32 to vector<8x1xf32>
    %14 = arith.divf %12, %13 : vector<8x1xf32>
    %15 = vector.broadcast %14 : vector<8x1xf32> to vector<8x32xf32>
    %16 = arith.subf %1, %15 : vector<8x32xf32>
    %17 = arith.mulf %16, %16 : vector<8x32xf32>
    %cst_13 = arith.constant dense<0.000000e+00> : vector<8xf32>
    %18 = vector.multi_reduction <add>, %17, %cst_13 [1] : vector<8x32xf32> to vector<8xf32>
    %19 = vector.shape_cast %18 : vector<8xf32> to vector<8x1xf32>
    %cst_14 = arith.constant 3.100000e+01 : f32
    %20 = vector.broadcast %cst_14 : f32 to vector<8x1xf32>
    %21 = arith.divf %19, %20 : vector<8x1xf32>
    %22 = math.sqrt %21 : vector<8x1xf32>
    %23 = vector.broadcast %14 : vector<8x1xf32> to vector<8x32xf32>
    %24 = arith.subf %1, %23 : vector<8x32xf32>
    %25 = vector.broadcast %9 : vector<1x32xf32> to vector<8x32xf32>
    %26 = arith.mulf %25, %24 : vector<8x32xf32>
    %cst_15 = arith.constant 9.99999997E-7 : f32
    %27 = vector.broadcast %cst_15 : f32 to vector<8x1xf32>
    %28 = arith.addf %22, %27 : vector<8x1xf32>
    %29 = vector.broadcast %28 : vector<8x1xf32> to vector<8x32xf32>
    %30 = arith.divf %26, %29 : vector<8x32xf32>
    %31 = vector.broadcast %10 : vector<1x32xf32> to vector<8x32xf32>
    %32 = arith.addf %30, %31 : vector<8x32xf32>
    %c0_16 = arith.constant 0 : index
    %c0_17 = arith.constant 0 : index
    %33 = vector.load %arg5[%c0_16, %c0_17] : memref<32x96xf32, #tpu.memory_space<vmem>>, vector<32x96xf32>
    %cst_18 = arith.constant dense<0.000000e+00> : vector<8x96xf32>
    %34 = tpu.matmul %32, %33, %cst_18 {dimension_numbers = #tpu.dot_dimension_numbers<[1], [0], [0], [1], [0, 0, 1, 1], [], []>} : vector<8x32xf32>, vector<32x96xf32>, vector<8x96xf32> -> vector<8x96xf32>
    %c0_19 = arith.constant 0 : index
    %c0_20 = arith.constant 0 : index
    %35 = vector.load %arg6[%c0_19, %c0_20] : memref<1x96xf32, #tpu.memory_space<vmem>>, vector<1x96xf32>
    %36 = vector.broadcast %35 : vector<1x96xf32> to vector<8x96xf32>
    %37 = arith.addf %34, %36 : vector<8x96xf32>
    %38 = vector.extract_strided_slice %37 {offsets = [0, 0], sizes = [8, 8], strides = [1, 1]} : vector<8x96xf32> to vector<8x8xf32>
    %39 = vector.extract_strided_slice %37 {offsets = [0, 32], sizes = [8, 8], strides = [1, 1]} : vector<8x96xf32> to vector<8x8xf32>
    %40 = vector.extract_strided_slice %37 {offsets = [0, 64], sizes = [8, 8], strides = [1, 1]} : vector<8x96xf32> to vector<8x8xf32>
    %cst_21 = arith.constant dense<0.000000e+00> : vector<8x8xf32>
    %41 = tpu.matmul %38, %39, %cst_21 {dimension_numbers = #tpu.dot_dimension_numbers<[1], [1], [0], [0], [0, 0, 1, 0], [], []>} : vector<8x8xf32>, vector<8x8xf32>, vector<8x8xf32> -> vector<8x8xf32>
    %42 = vector.broadcast %8 : vector<1x8xf32> to vector<8x8xf32>
    %43 = arith.addf %41, %42 : vector<8x8xf32>
    %cst_22 = arith.constant dense<0xFF800000> : vector<8xf32>
    %44 = vector.multi_reduction <maximumf>, %43, %cst_22 [1] : vector<8x8xf32> to vector<8xf32>
    %45 = vector.shape_cast %44 : vector<8xf32> to vector<8x1xf32>
    %46 = vector.broadcast %45 : vector<8x1xf32> to vector<8x8xf32>
    %47 = arith.subf %43, %46 : vector<8x8xf32>
    %48 = math.exp %47 : vector<8x8xf32>
    %cst_23 = arith.constant dense<0.000000e+00> : vector<8xf32>
    %49 = vector.multi_reduction <add>, %48, %cst_23 [1] : vector<8x8xf32> to vector<8xf32>
    %50 = vector.shape_cast %49 : vector<8xf32> to vector<8x1xf32>
    %51 = tpu.reciprocal %50 : vector<8x1xf32> -> vector<8x1xf32>
    %cst_24 = arith.constant dense<0.000000e+00> : vector<8x8xf32>
    %52 = tpu.matmul %48, %40, %cst_24 {dimension_numbers = #tpu.dot_dimension_numbers<[1], [0], [0], [1], [0, 0, 1, 1], [], []>} : vector<8x8xf32>, vector<8x8xf32>, vector<8x8xf32> -> vector<8x8xf32>
    %53 = vector.broadcast %51 : vector<8x1xf32> to vector<8x8xf32>
    %54 = arith.mulf %52, %53 : vector<8x8xf32>
    %55 = vector.extract_strided_slice %37 {offsets = [0, 8], sizes = [8, 8], strides = [1, 1]} : vector<8x96xf32> to vector<8x8xf32>
    %56 = vector.extract_strided_slice %37 {offsets = [0, 40], sizes = [8, 8], strides = [1, 1]} : vector<8x96xf32> to vector<8x8xf32>
    %57 = vector.extract_strided_slice %37 {offsets = [0, 72], sizes = [8, 8], strides = [1, 1]} : vector<8x96xf32> to vector<8x8xf32>
    %cst_25 = arith.constant dense<0.000000e+00> : vector<8x8xf32>
    %58 = tpu.matmul %55, %56, %cst_25 {dimension_numbers = #tpu.dot_dimension_numbers<[1], [1], [0], [0], [0, 0, 1, 0], [], []>} : vector<8x8xf32>, vector<8x8xf32>, vector<8x8xf32> -> vector<8x8xf32>
    %59 = vector.broadcast %8 : vector<1x8xf32> to vector<8x8xf32>
    %60 = arith.addf %58, %59 : vector<8x8xf32>
    %cst_26 = arith.constant dense<0xFF800000> : vector<8xf32>
    %61 = vector.multi_reduction <maximumf>, %60, %cst_26 [1] : vector<8x8xf32> to vector<8xf32>
    %62 = vector.shape_cast %61 : vector<8xf32> to vector<8x1xf32>
    %63 = vector.broadcast %62 : vector<8x1xf32> to vector<8x8xf32>
    %64 = arith.subf %60, %63 : vector<8x8xf32>
    %65 = math.exp %64 : vector<8x8xf32>
    %cst_27 = arith.constant dense<0.000000e+00> : vector<8xf32>
    %66 = vector.multi_reduction <add>, %65, %cst_27 [1] : vector<8x8xf32> to vector<8xf32>
    %67 = vector.shape_cast %66 : vector<8xf32> to vector<8x1xf32>
    %68 = tpu.reciprocal %67 : vector<8x1xf32> -> vector<8x1xf32>
    %cst_28 = arith.constant dense<0.000000e+00> : vector<8x8xf32>
    %69 = tpu.matmul %65, %57, %cst_28 {dimension_numbers = #tpu.dot_dimension_numbers<[1], [0], [0], [1], [0, 0, 1, 1], [], []>} : vector<8x8xf32>, vector<8x8xf32>, vector<8x8xf32> -> vector<8x8xf32>
    %70 = vector.broadcast %68 : vector<8x1xf32> to vector<8x8xf32>
    %71 = arith.mulf %69, %70 : vector<8x8xf32>
    %72 = vector.extract_strided_slice %37 {offsets = [0, 16], sizes = [8, 8], strides = [1, 1]} : vector<8x96xf32> to vector<8x8xf32>
    %73 = vector.extract_strided_slice %37 {offsets = [0, 48], sizes = [8, 8], strides = [1, 1]} : vector<8x96xf32> to vector<8x8xf32>
    %74 = vector.extract_strided_slice %37 {offsets = [0, 80], sizes = [8, 8], strides = [1, 1]} : vector<8x96xf32> to vector<8x8xf32>
    %cst_29 = arith.constant dense<0.000000e+00> : vector<8x8xf32>
    %75 = tpu.matmul %72, %73, %cst_29 {dimension_numbers = #tpu.dot_dimension_numbers<[1], [1], [0], [0], [0, 0, 1, 0], [], []>} : vector<8x8xf32>, vector<8x8xf32>, vector<8x8xf32> -> vector<8x8xf32>
    %76 = vector.broadcast %8 : vector<1x8xf32> to vector<8x8xf32>
    %77 = arith.addf %75, %76 : vector<8x8xf32>
    %cst_30 = arith.constant dense<0xFF800000> : vector<8xf32>
    %78 = vector.multi_reduction <maximumf>, %77, %cst_30 [1] : vector<8x8xf32> to vector<8xf32>
    %79 = vector.shape_cast %78 : vector<8xf32> to vector<8x1xf32>
    %80 = vector.broadcast %79 : vector<8x1xf32> to vector<8x8xf32>
    %81 = arith.subf %77, %80 : vector<8x8xf32>
    %82 = math.exp %81 : vector<8x8xf32>
    %cst_31 = arith.constant dense<0.000000e+00> : vector<8xf32>
    %83 = vector.multi_reduction <add>, %82, %cst_31 [1] : vector<8x8xf32> to vector<8xf32>
    %84 = vector.shape_cast %83 : vector<8xf32> to vector<8x1xf32>
    %85 = tpu.reciprocal %84 : vector<8x1xf32> -> vector<8x1xf32>
    %cst_32 = arith.constant dense<0.000000e+00> : vector<8x8xf32>
    %86 = tpu.matmul %82, %74, %cst_32 {dimension_numbers = #tpu.dot_dimension_numbers<[1], [0], [0], [1], [0, 0, 1, 1], [], []>} : vector<8x8xf32>, vector<8x8xf32>, vector<8x8xf32> -> vector<8x8xf32>
    %87 = vector.broadcast %85 : vector<8x1xf32> to vector<8x8xf32>
    %88 = arith.mulf %86, %87 : vector<8x8xf32>
    %89 = vector.extract_strided_slice %37 {offsets = [0, 24], sizes = [8, 8], strides = [1, 1]} : vector<8x96xf32> to vector<8x8xf32>
    %90 = vector.extract_strided_slice %37 {offsets = [0, 56], sizes = [8, 8], strides = [1, 1]} : vector<8x96xf32> to vector<8x8xf32>
    %91 = vector.extract_strided_slice %37 {offsets = [0, 88], sizes = [8, 8], strides = [1, 1]} : vector<8x96xf32> to vector<8x8xf32>
    %cst_33 = arith.constant dense<0.000000e+00> : vector<8x8xf32>
    %92 = tpu.matmul %89, %90, %cst_33 {dimension_numbers = #tpu.dot_dimension_numbers<[1], [1], [0], [0], [0, 0, 1, 0], [], []>} : vector<8x8xf32>, vector<8x8xf32>, vector<8x8xf32> -> vector<8x8xf32>
    %93 = vector.broadcast %8 : vector<1x8xf32> to vector<8x8xf32>
    %94 = arith.addf %92, %93 : vector<8x8xf32>
    %cst_34 = arith.constant dense<0xFF800000> : vector<8xf32>
    %95 = vector.multi_reduction <maximumf>, %94, %cst_34 [1] : vector<8x8xf32> to vector<8xf32>
    %96 = vector.shape_cast %95 : vector<8xf32> to vector<8x1xf32>
    %97 = vector.broadcast %96 : vector<8x1xf32> to vector<8x8xf32>
    %98 = arith.subf %94, %97 : vector<8x8xf32>
    %99 = math.exp %98 : vector<8x8xf32>
    %cst_35 = arith.constant dense<0.000000e+00> : vector<8xf32>
    %100 = vector.multi_reduction <add>, %99, %cst_35 [1] : vector<8x8xf32> to vector<8xf32>
    %101 = vector.shape_cast %100 : vector<8xf32> to vector<8x1xf32>
    %102 = tpu.reciprocal %101 : vector<8x1xf32> -> vector<8x1xf32>
    %cst_36 = arith.constant dense<0.000000e+00> : vector<8x8xf32>
    %103 = tpu.matmul %99, %91, %cst_36 {dimension_numbers = #tpu.dot_dimension_numbers<[1], [0], [0], [1], [0, 0, 1, 1], [], []>} : vector<8x8xf32>, vector<8x8xf32>, vector<8x8xf32> -> vector<8x8xf32>
    %104 = vector.broadcast %102 : vector<8x1xf32> to vector<8x8xf32>
    %105 = arith.mulf %103, %104 : vector<8x8xf32>
    %106 = tpu.concatenate %54, %71, %88, %105 in 1 : vector<8x8xf32>, vector<8x8xf32>, vector<8x8xf32>, vector<8x8xf32> -> vector<8x32xf32>
    %c0_37 = arith.constant 0 : index
    %c0_38 = arith.constant 0 : index
    %107 = vector.load %arg7[%c0_37, %c0_38] : memref<32x32xf32, #tpu.memory_space<vmem>>, vector<32x32xf32>
    %cst_39 = arith.constant dense<0.000000e+00> : vector<8x32xf32>
    %108 = tpu.matmul %106, %107, %cst_39 {dimension_numbers = #tpu.dot_dimension_numbers<[1], [0], [0], [1], [0, 0, 1, 1], [], []>} : vector<8x32xf32>, vector<32x32xf32>, vector<8x32xf32> -> vector<8x32xf32>
    %c0_40 = arith.constant 0 : index
    %c0_41 = arith.constant 0 : index
    %109 = vector.load %arg8[%c0_40, %c0_41] : memref<1x32xf32, #tpu.memory_space<vmem>>, vector<1x32xf32>
    %110 = vector.broadcast %109 : vector<1x32xf32> to vector<8x32xf32>
    %111 = arith.addf %108, %110 : vector<8x32xf32>
    %112 = arith.addf %1, %111 : vector<8x32xf32>
    %c0_42 = arith.constant 0 : index
    %c0_43 = arith.constant 0 : index
    %113 = vector.load %arg9[%c0_42, %c0_43] : memref<1x32xf32, #tpu.memory_space<vmem>>, vector<1x32xf32>
    %c0_44 = arith.constant 0 : index
    %c0_45 = arith.constant 0 : index
    %114 = vector.load %arg10[%c0_44, %c0_45] : memref<1x32xf32, #tpu.memory_space<vmem>>, vector<1x32xf32>
    %cst_46 = arith.constant dense<0.000000e+00> : vector<8xf32>
    %115 = vector.multi_reduction <add>, %112, %cst_46 [1] : vector<8x32xf32> to vector<8xf32>
    %116 = vector.shape_cast %115 : vector<8xf32> to vector<8x1xf32>
    %cst_47 = arith.constant 3.200000e+01 : f32
    %117 = vector.broadcast %cst_47 : f32 to vector<8x1xf32>
    %118 = arith.divf %116, %117 : vector<8x1xf32>
    %119 = vector.broadcast %118 : vector<8x1xf32> to vector<8x32xf32>
    %120 = arith.subf %112, %119 : vector<8x32xf32>
    %121 = arith.mulf %120, %120 : vector<8x32xf32>
    %cst_48 = arith.constant dense<0.000000e+00> : vector<8xf32>
    %122 = vector.multi_reduction <add>, %121, %cst_48 [1] : vector<8x32xf32> to vector<8xf32>
    %123 = vector.shape_cast %122 : vector<8xf32> to vector<8x1xf32>
    %cst_49 = arith.constant 3.100000e+01 : f32
    %124 = vector.broadcast %cst_49 : f32 to vector<8x1xf32>
    %125 = arith.divf %123, %124 : vector<8x1xf32>
    %126 = math.sqrt %125 : vector<8x1xf32>
    %127 = vector.broadcast %118 : vector<8x1xf32> to vector<8x32xf32>
    %128 = arith.subf %112, %127 : vector<8x32xf32>
    %129 = vector.broadcast %113 : vector<1x32xf32> to vector<8x32xf32>
    %130 = arith.mulf %129, %128 : vector<8x32xf32>
    %cst_50 = arith.constant 9.99999997E-7 : f32
    %131 = vector.broadcast %cst_50 : f32 to vector<8x1xf32>
    %132 = arith.addf %126, %131 : vector<8x1xf32>
    %133 = vector.broadcast %132 : vector<8x1xf32> to vector<8x32xf32>
    %134 = arith.divf %130, %133 : vector<8x32xf32>
    %135 = vector.broadcast %114 : vector<1x32xf32> to vector<8x32xf32>
    %136 = arith.addf %134, %135 : vector<8x32xf32>
    %c0_51 = arith.constant 0 : index
    %c0_52 = arith.constant 0 : index
    %137 = vector.load %arg11[%c0_51, %c0_52] : memref<32x64xf32, #tpu.memory_space<vmem>>, vector<32x64xf32>
    %cst_53 = arith.constant dense<0.000000e+00> : vector<8x64xf32>
    %138 = tpu.matmul %136, %137, %cst_53 {dimension_numbers = #tpu.dot_dimension_numbers<[1], [0], [0], [1], [0, 0, 1, 1], [], []>} : vector<8x32xf32>, vector<32x64xf32>, vector<8x64xf32> -> vector<8x64xf32>
    %c0_54 = arith.constant 0 : index
    %c0_55 = arith.constant 0 : index
    %139 = vector.load %arg12[%c0_54, %c0_55] : memref<1x64xf32, #tpu.memory_space<vmem>>, vector<1x64xf32>
    %140 = vector.broadcast %139 : vector<1x64xf32> to vector<8x64xf32>
    %141 = arith.addf %138, %140 : vector<8x64xf32>
    %cst_56 = arith.constant 0.000000e+00 : f32
    %142 = vector.broadcast %cst_56 : f32 to vector<8x64xf32>
    %143 = arith.maximumf %141, %142 : vector<8x64xf32>
    %c0_57 = arith.constant 0 : index
    %c0_58 = arith.constant 0 : index
    %144 = vector.load %arg13[%c0_57, %c0_58] : memref<64x32xf32, #tpu.memory_space<vmem>>, vector<64x32xf32>
    %cst_59 = arith.constant dense<0.000000e+00> : vector<8x32xf32>
    %145 = tpu.matmul %143, %144, %cst_59 {dimension_numbers = #tpu.dot_dimension_numbers<[1], [0], [0], [1], [0, 0, 1, 1], [], []>} : vector<8x64xf32>, vector<64x32xf32>, vector<8x32xf32> -> vector<8x32xf32>
    %c0_60 = arith.constant 0 : index
    %c0_61 = arith.constant 0 : index
    %146 = vector.load %arg14[%c0_60, %c0_61] : memref<1x32xf32, #tpu.memory_space<vmem>>, vector<1x32xf32>
    %147 = vector.broadcast %146 : vector<1x32xf32> to vector<8x32xf32>
    %148 = arith.addf %145, %147 : vector<8x32xf32>
    %149 = arith.addf %112, %148 : vector<8x32xf32>
    %c0_62 = arith.constant 0 : index
    %c0_63 = arith.constant 0 : index
    %c0_64 = arith.constant 0 : index
    %150 = vector.load %arg15[%c0_62, %c0_63, %c0_64] : memref<1x8x32xf32, #tpu.memory_space<vmem>>, vector<1x8x32xf32>
    %151 = vector.shape_cast %150 : vector<1x8x32xf32> to vector<8x32xf32>
    %152 = vector.shape_cast %149 : vector<8x32xf32> to vector<1x8x32xf32>
    tpu.vector_store %arg15[%c0_62, %c0_63, %c0_64], %152 {strides = array<i32>} : memref<1x8x32xf32, #tpu.memory_space<vmem>>, vector<1x8x32xf32>,
    return
  }
  func.func @transform_0(%arg0: i32) -> (i32, i32, i32) {
    %c0_i32 = arith.constant 0 : i32
    %c0_i32_0 = arith.constant 0 : i32
    %c0_i32_1 = arith.constant 0 : i32
    return %arg0, %c0_i32, %c0_i32_0 : i32, i32, i32
  }
  func.func @transform_1(%arg0: i32) -> (i32, i32, i32) {
    %c0_i32 = arith.constant 0 : i32
    %c0_i32_0 = arith.constant 0 : i32
    %c0_i32_1 = arith.constant 0 : i32
    return %arg0, %c0_i32, %c0_i32_0 : i32, i32, i32
  }
  func.func @transform_2(%arg0: i32) -> (i32, i32) {
    %c0_i32 = arith.constant 0 : i32
    %c0_i32_0 = arith.constant 0 : i32
    %c0_i32_1 = arith.constant 0 : i32
    return %c0_i32, %c0_i32_0 : i32, i32
  }
  func.func @transform_3(%arg0: i32) -> (i32, i32) {
    %c0_i32 = arith.constant 0 : i32
    %c0_i32_0 = arith.constant 0 : i32
    %c0_i32_1 = arith.constant 0 : i32
    return %c0_i32, %c0_i32_0 : i32, i32
  }
  func.func @transform_4(%arg0: i32) -> (i32, i32) {
    %c0_i32 = arith.constant 0 : i32
    %c0_i32_0 = arith.constant 0 : i32
    %c0_i32_1 = arith.constant 0 : i32
    return %c0_i32, %c0_i32_0 : i32, i32
  }
  func.func @transform_5(%arg0: i32) -> (i32, i32) {
    %c0_i32 = arith.constant 0 : i32
    %c0_i32_0 = arith.constant 0 : i32
    %c0_i32_1 = arith.constant 0 : i32
    return %c0_i32, %c0_i32_0 : i32, i32
  }
  func.func @transform_6(%arg0: i32) -> (i32, i32) {
    %c0_i32 = arith.constant 0 : i32
    %c0_i32_0 = arith.constant 0 : i32
    %c0_i32_1 = arith.constant 0 : i32
    return %c0_i32, %c0_i32_0 : i32, i32
  }
  func.func @transform_7(%arg0: i32) -> (i32, i32) {
    %c0_i32 = arith.constant 0 : i32
    %c0_i32_0 = arith.constant 0 : i32
    %c0_i32_1 = arith.constant 0 : i32
    return %c0_i32, %c0_i32_0 : i32, i32
  }
  func.func @transform_8(%arg0: i32) -> (i32, i32) {
    %c0_i32 = arith.constant 0 : i32
    %c0_i32_0 = arith.constant 0 : i32
    %c0_i32_1 = arith.constant 0 : i32
    return %c0_i32, %c0_i32_0 : i32, i32
  }
  func.func @transform_9(%arg0: i32) -> (i32, i32) {
    %c0_i32 = arith.constant 0 : i32
    %c0_i32_0 = arith.constant 0 : i32
    %c0_i32_1 = arith.constant 0 : i32
    return %c0_i32, %c0_i32_0 : i32, i32
  }
  func.func @transform_10(%arg0: i32) -> (i32, i32) {
    %c0_i32 = arith.constant 0 : i32
    %c0_i32_0 = arith.constant 0 : i32
    %c0_i32_1 = arith.constant 0 : i32
    return %c0_i32, %c0_i32_0 : i32, i32
  }
  func.func @transform_11(%arg0: i32) -> (i32, i32) {
    %c0_i32 = arith.constant 0 : i32
    %c0_i32_0 = arith.constant 0 : i32
    %c0_i32_1 = arith.constant 0 : i32
    return %c0_i32, %c0_i32_0 : i32, i32
  }
  func.func @transform_12(%arg0: i32) -> (i32, i32) {
    %c0_i32 = arith.constant 0 : i32
    %c0_i32_0 = arith.constant 0 : i32
    %c0_i32_1 = arith.constant 0 : i32
    return %c0_i32, %c0_i32_0 : i32, i32
  }
  func.func @transform_13(%arg0: i32) -> (i32, i32) {
    %c0_i32 = arith.constant 0 : i32
    %c0_i32_0 = arith.constant 0 : i32
    %c0_i32_1 = arith.constant 0 : i32
    return %c0_i32, %c0_i32_0 : i32, i32
  }
  func.func @transform_14(%arg0: i32) -> (i32, i32, i32) {
    %c0_i32 = arith.constant 0 : i32
    %c0_i32_0 = arith.constant 0 : i32
    %c0_i32_1 = arith.constant 0 : i32
    return %arg0, %c0_i32, %c0_i32_0 : i32, i32, i32
  }
}

</mosaic_0001>

<llo_original>
// kernel: tpu_custom_call.1
$region0: #{tpu_custom_call.1}
  #allocation0 [shape = 'u32[]', space=smem, size = 0x4, offset = 0x4, fixed_abs, tag = 'smem constant byte address 0x4 - core index']
  #allocation1 [shape = 'u32[72,128]{1,0:T(1,128)}', space=vmem, size = 0x9000, scoped, tag = 'internal scratch']
  %s0 = inlined_call_operand.hbm [shape: f32[2,8,32], index: 0, kind: input, shape index: {}]
  %s1 = inlined_call_operand.hbm [shape: f32[2,1,8], index: 1, kind: input, shape index: {}]
  %s2 = inlined_call_operand.vmem [shape: f32[1,32], index: 2, kind: input, shape index: {}]
  %s3 = inlined_call_operand.hbm [shape: f32[1,32], index: 3, kind: input, shape index: {}]
  %s4 = inlined_call_operand.vmem [shape: f32[32,96], index: 4, kind: input, shape index: {}]
  %s5 = inlined_call_operand.vmem [shape: f32[1,96], index: 5, kind: input, shape index: {}]
  %s6 = inlined_call_operand.vmem [shape: f32[32,32], index: 6, kind: input, shape index: {}]
  %s7 = inlined_call_operand.vmem [shape: f32[1,32], index: 7, kind: input, shape index: {}]
  %s8 = inlined_call_operand.vmem [shape: f32[1,32], index: 8, kind: input, shape index: {}]
  %s9 = inlined_call_operand.vmem [shape: f32[1,32], index: 9, kind: input, shape index: {}]
  %s10 = inlined_call_operand.vmem [shape: f32[32,64], index: 10, kind: input, shape index: {}]
  %s11 = inlined_call_operand.vmem [shape: f32[1,64], index: 11, kind: input, shape index: {}]
  %s12 = inlined_call_operand.vmem [shape: f32[64,32], index: 12, kind: input, shape index: {}]
  %s13 = inlined_call_operand.vmem [shape: f32[1,32], index: 13, kind: input, shape index: {}]
  %s14 = inlined_call_operand.hbm [shape: f32[2,8,32], index: 14, kind: output, shape index: {}]
  %s15 = sld [smem:[#allocation0]]
  $region101: #{tpu_custom_call.1} parent=0
    _
  %s17 = ssub.s32 1, %s15
  %s18 = scalar_select 0, %s17, %s15
  $region1: #{tpu_custom_call.1} parent=0
    #allocation2 [shape = 'u8[8192]{0}', space=vmem, size = 0x2000, scoped, tag = 'input window, operand 0']
    #allocation3 [shape = 's32[2]{0}', space=sflag, size = 0x8, scoped, tag = 'scoped memory for tpu_custom_call.1']
    #allocation4 [shape = 's32[2]{0}', space=sflag, size = 0x8, scoped, tag = 'scoped memory for tpu_custom_call.1']
    #allocation5 [shape = 'u8[1024]{0}', space=vmem, size = 0x400, scoped, tag = 'input window, operand 1']
    #allocation6 [shape = 's32[2]{0}', space=sflag, size = 0x8, scoped, tag = 'scoped memory for tpu_custom_call.1']
    #allocation7 [shape = 'u8[512]{0}', space=vmem, size = 0x400, scoped, tag = 'input window, operand 3, single buffered']
    #allocation8 [shape = 'u8[8192]{0}', space=vmem, size = 0x2000, scoped, tag = 'output window, operand 0']
    %19 = vsyncpa [#allocation3], 0
    %s20 = scalar_lea.sflag [#allocation3], 1
    %21 = vsyncpa %s20, 0
    %22 = vsyncpa [#allocation6], 0
    %s23 = scalar_lea.sflag [#allocation6], 1
    %24 = vsyncpa %s23, 0
    %25 = vsyncpa [#allocation4], 0
    %s26 = scalar_lea.sflag [#allocation4], 1
    %27 = vsyncpa %s26, 0
    loop: start=0, step=1, limit=4
    $region2: #{tpu_custom_call.1} parent=1 // loop_pre_header
      _
    $region3: #{tpu_custom_call.1} parent=1 // loop_header
      %s29 = sphi 0, %s33
      %p30 = scmp.ge.s32.totalorder %s29, 4
      %s39 = sphi 0, %s41
      %s42 = sphi 0, %s39
      %s43 = sphi 0, %s42
      %s59 = sphi 0, %s43
      %s65 = sphi 0, %s67
      %s68 = sphi 0, %s65
      %s69 = sphi 0, %s68
      %s85 = sphi 0, %s69
      %s89 = sphi 0, %s89
      %s91 = sphi 0, %s89
      %s92 = sphi 0, %s91
      %s106 = sphi 0, %s92
      %s110 = sphi 0, %s110
      %s112 = sphi 0, %s110
      %s113 = sphi 0, %s112
      %s127 = sphi 0, %s113
      %s131 = sphi 0, %s131
      %s133 = sphi 0, %s131
      %s134 = sphi 0, %s133
      %s148 = sphi 0, %s134
      %s152 = sphi 0, %s152
      %s154 = sphi 0, %s152
      %s155 = sphi 0, %s154
      %s169 = sphi 0, %s155
      %s173 = sphi 0, %s173
      %s175 = sphi 0, %s173
      %s176 = sphi 0, %s175
      %s190 = sphi 0, %s176
      %s194 = sphi 0, %s194
      %s196 = sphi 0, %s194
      %s197 = sphi 0, %s196
      %s211 = sphi 0, %s197
      %s215 = sphi 0, %s215
      %s217 = sphi 0, %s215
      %s218 = sphi 0, %s217
      %s232 = sphi 0, %s218
      %s236 = sphi 0, %s236
      %s238 = sphi 0, %s236
      %s239 = sphi 0, %s238
      %s253 = sphi 0, %s239
      %s257 = sphi 0, %s257
      %s259 = sphi 0, %s257
      %s260 = sphi 0, %s259
      %s274 = sphi 0, %s260
      %s278 = sphi 0, %s278
      %s280 = sphi 0, %s278
      %s281 = sphi 0, %s280
      %s295 = sphi 0, %s281
      %s299 = sphi 0, %s299
      %s301 = sphi 0, %s299
      %s302 = sphi 0, %s301
      %s316 = sphi 0, %s302
      %s320 = sphi 0, %s320
      %s322 = sphi 0, %s320
      %s323 = sphi 0, %s322
      %s337 = sphi 0, %s323
      %s343 = sphi 0, %s345
      %s346 = sphi 0, %s343
      %s347 = sphi 0, %s346
      %s363 = sphi 0, %s347
    $region4: #{tpu_custom_call.1} parent=1 // loop_header_branch
      %32 = sbr.rel (%p30) target = $region8
    $region5: #{tpu_custom_call.1} parent=1 // loop_body
      %s34 = ssub.s32 %s29, 1
      %s35 = ssub.s32 %s29, 2
      %s36 = sadd.s32 %s29, 1
      %s37 = ssub.s32 %s29, %s36
      %p38 = scmp.eq.s32.totalorder %s37, 0
      %s40 = sadd.s32 %s39, 1
      %s41 = scalar_select %p38, %s39, %s40
      %p44 = pneg %p38
      %p45 = scmp.eq.s32.totalorder %s29, 1
      %p46 = por %p44, %p45
      %p47 = scmp.ne.s32.totalorder %s39, %s42
      %p48 = scmp.eq.s32.totalorder %s29, 0
      %p49 = por %p47, %p48
      %p50 = scmp.ne.s32.totalorder %s39, %s42
      %p51 = scmp.eq.s32.totalorder %s34, 1
      %p52 = por %p50, %p51
      %p53 = scmp.ne.s32.totalorder %s42, %s43
      %p54 = scmp.eq.s32.totalorder %s34, 0
      %p55 = por %p53, %p54
      %p56 = scmp.ne.s32.totalorder %s42, %s43
      %p57 = scmp.eq.s32.totalorder %s35, 1
      %p58 = por %p56, %p57
      %p60 = scmp.ne.s32.totalorder %s43, %s59
      %p61 = scmp.eq.s32.totalorder %s35, 0
      %p62 = por %p60, %p61
      %s63 = ssub.s32 %s29, %s36
      %p64 = scmp.eq.s32.totalorder %s63, 0
      %s66 = sadd.s32 %s65, 1
      %s67 = scalar_select %p64, %s65, %s66
      %p70 = pneg %p64
      %p71 = scmp.eq.s32.totalorder %s29, 1
      %p72 = por %p70, %p71
      %p73 = scmp.ne.s32.totalorder %s65, %s68
      %p74 = scmp.eq.s32.totalorder %s29, 0
      %p75 = por %p73, %p74
      %p76 = scmp.ne.s32.totalorder %s65, %s68
      %p77 = scmp.eq.s32.totalorder %s34, 1
      %p78 = por %p76, %p77
      %p79 = scmp.ne.s32.totalorder %s68, %s69
      %p80 = scmp.eq.s32.totalorder %s34, 0
      %p81 = por %p79, %p80
      %p82 = scmp.ne.s32.totalorder %s68, %s69
      %p83 = scmp.eq.s32.totalorder %s35, 1
      %p84 = por %p82, %p83
      %p86 = scmp.ne.s32.totalorder %s69, %s85
      %p87 = scmp.eq.s32.totalorder %s35, 0
      %p88 = por %p86, %p87
      %s90 = sadd.s32 %s89, 1
      %p93 = scmp.eq.s32.totalorder %s29, 1
      %p94 = scmp.ne.s32.totalorder %s89, %s91
      %p95 = scmp.eq.s32.totalorder %s29, 0
      %p96 = por %p94, %p95
      %p97 = scmp.ne.s32.totalorder %s89, %s91
      %p98 = scmp.eq.s32.totalorder %s34, 1
      %p99 = por %p97, %p98
      %p100 = scmp.ne.s32.totalorder %s91, %s92
      %p101 = scmp.eq.s32.totalorder %s34, 0
      %p102 = por %p100, %p101
      %p103 = scmp.ne.s32.totalorder %s91, %s92
      %p104 = scmp.eq.s32.totalorder %s35, 1
      %p105 = por %p103, %p104
      %p107 = scmp.ne.s32.totalorder %s92, %s106
      %p108 = scmp.eq.s32.totalorder %s35, 0
      %p109 = por %p107, %p108
      %s111 = sadd.s32 %s110, 1
      %p114 = scmp.eq.s32.totalorder %s29, 1
      %p115 = scmp.ne.s32.totalorder %s110, %s112
      %p116 = scmp.eq.s32.totalorder %s29, 0
      %p117 = por %p115, %p116
      %p118 = scmp.ne.s32.totalorder %s110, %s112
      %p119 = scmp.eq.s32.totalorder %s34, 1
      %p120 = por %p118, %p119
      %p121 = scmp.ne.s32.totalorder %s112, %s113
      %p122 = scmp.eq.s32.totalorder %s34, 0
      %p123 = por %p121, %p122
      %p124 = scmp.ne.s32.totalorder %s112, %s113
      %p125 = scmp.eq.s32.totalorder %s35, 1
      %p126 = por %p124, %p125
      %p128 = scmp.ne.s32.totalorder %s113, %s127
      %p129 = scmp.eq.s32.totalorder %s35, 0
      %p130 = por %p128, %p129
      %s132 = sadd.s32 %s131, 1
      %p135 = scmp.eq.s32.totalorder %s29, 1
      %p136 = scmp.ne.s32.totalorder %s131, %s133
      %p137 = scmp.eq.s32.totalorder %s29, 0
      %p138 = por %p136, %p137
      %p139 = scmp.ne.s32.totalorder %s131, %s133
      %p140 = scmp.eq.s32.totalorder %s34, 1
      %p141 = por %p139, %p140
      %p142 = scmp.ne.s32.totalorder %s133, %s134
      %p143 = scmp.eq.s32.totalorder %s34, 0
      %p144 = por %p142, %p143
      %p145 = scmp.ne.s32.totalorder %s133, %s134
      %p146 = scmp.eq.s32.totalorder %s35, 1
      %p147 = por %p145, %p146
      %p149 = scmp.ne.s32.totalorder %s134, %s148
      %p150 = scmp.eq.s32.totalorder %s35, 0
      %p151 = por %p149, %p150
      %s153 = sadd.s32 %s152, 1
      %p156 = scmp.eq.s32.totalorder %s29, 1
      %p157 = scmp.ne.s32.totalorder %s152, %s154
      %p158 = scmp.eq.s32.totalorder %s29, 0
      %p159 = por %p157, %p158
      %p160 = scmp.ne.s32.totalorder %s152, %s154
      %p161 = scmp.eq.s32.totalorder %s34, 1
      %p162 = por %p160, %p161
      %p163 = scmp.ne.s32.totalorder %s154, %s155
      %p164 = scmp.eq.s32.totalorder %s34, 0
      %p165 = por %p163, %p164
      %p166 = scmp.ne.s32.totalorder %s154, %s155
      %p167 = scmp.eq.s32.totalorder %s35, 1
      %p168 = por %p166, %p167
      %p170 = scmp.ne.s32.totalorder %s155, %s169
      %p171 = scmp.eq.s32.totalorder %s35, 0
      %p172 = por %p170, %p171
      %s174 = sadd.s32 %s173, 1
      %p177 = scmp.eq.s32.totalorder %s29, 1
      %p178 = scmp.ne.s32.totalorder %s173, %s175
      %p179 = scmp.eq.s32.totalorder %s29, 0
      %p180 = por %p178, %p179
      %p181 = scmp.ne.s32.totalorder %s173, %s175
      %p182 = scmp.eq.s32.totalorder %s34, 1
      %p183 = por %p181, %p182
      %p184 = scmp.ne.s32.totalorder %s175, %s176
      %p185 = scmp.eq.s32.totalorder %s34, 0
      %p186 = por %p184, %p185
      %p187 = scmp.ne.s32.totalorder %s175, %s176
      %p188 = scmp.eq.s32.totalorder %s35, 1
      %p189 = por %p187, %p188
      %p191 = scmp.ne.s32.totalorder %s176, %s190
      %p192 = scmp.eq.s32.totalorder %s35, 0
      %p193 = por %p191, %p192
      %s195 = sadd.s32 %s194, 1
      %p198 = scmp.eq.s32.totalorder %s29, 1
      %p199 = scmp.ne.s32.totalorder %s194, %s196
      %p200 = scmp.eq.s32.totalorder %s29, 0
      %p201 = por %p199, %p200
      %p202 = scmp.ne.s32.totalorder %s194, %s196
      %p203 = scmp.eq.s32.totalorder %s34, 1
      %p204 = por %p202, %p203
      %p205 = scmp.ne.s32.totalorder %s196, %s197
      %p206 = scmp.eq.s32.totalorder %s34, 0
      %p207 = por %p205, %p206
      %p208 = scmp.ne.s32.totalorder %s196, %s197
      %p209 = scmp.eq.s32.totalorder %s35, 1
      %p210 = por %p208, %p209
      %p212 = scmp.ne.s32.totalorder %s197, %s211
      %p213 = scmp.eq.s32.totalorder %s35, 0
      %p214 = por %p212, %p213
      %s216 = sadd.s32 %s215, 1
      %p219 = scmp.eq.s32.totalorder %s29, 1
      %p220 = scmp.ne.s32.totalorder %s215, %s217
      %p221 = scmp.eq.s32.totalorder %s29, 0
      %p222 = por %p220, %p221
      %p223 = scmp.ne.s32.totalorder %s215, %s217
      %p224 = scmp.eq.s32.totalorder %s34, 1
      %p225 = por %p223, %p224
      %p226 = scmp.ne.s32.totalorder %s217, %s218
      %p227 = scmp.eq.s32.totalorder %s34, 0
      %p228 = por %p226, %p227
      %p229 = scmp.ne.s32.totalorder %s217, %s218
      %p230 = scmp.eq.s32.totalorder %s35, 1
      %p231 = por %p229, %p230
      %p233 = scmp.ne.s32.totalorder %s218, %s232
      %p234 = scmp.eq.s32.totalorder %s35, 0
      %p235 = por %p233, %p234
      %s237 = sadd.s32 %s236, 1
      %p240 = scmp.eq.s32.totalorder %s29, 1
      %p241 = scmp.ne.s32.totalorder %s236, %s238
      %p242 = scmp.eq.s32.totalorder %s29, 0
      %p243 = por %p241, %p242
      %p244 = scmp.ne.s32.totalorder %s236, %s238
      %p245 = scmp.eq.s32.totalorder %s34, 1
      %p246 = por %p244, %p245
      %p247 = scmp.ne.s32.totalorder %s238, %s239
      %p248 = scmp.eq.s32.totalorder %s34, 0
      %p249 = por %p247, %p248
      %p250 = scmp.ne.s32.totalorder %s238, %s239
      %p251 = scmp.eq.s32.totalorder %s35, 1
      %p252 = por %p250, %p251
      %p254 = scmp.ne.s32.totalorder %s239, %s253
      %p255 = scmp.eq.s32.totalorder %s35, 0
      %p256 = por %p254, %p255
      %s258 = sadd.s32 %s257, 1
      %p261 = scmp.eq.s32.totalorder %s29, 1
      %p262 = scmp.ne.s32.totalorder %s257, %s259
      %p263 = scmp.eq.s32.totalorder %s29, 0
      %p264 = por %p262, %p263
      %p265 = scmp.ne.s32.totalorder %s257, %s259
      %p266 = scmp.eq.s32.totalorder %s34, 1
      %p267 = por %p265, %p266
      %p268 = scmp.ne.s32.totalorder %s259, %s260
      %p269 = scmp.eq.s32.totalorder %s34, 0
      %p270 = por %p268, %p269
      %p271 = scmp.ne.s32.totalorder %s259, %s260
      %p272 = scmp.eq.s32.totalorder %s35, 1
      %p273 = por %p271, %p272
      %p275 = scmp.ne.s32.totalorder %s260, %s274
      %p276 = scmp.eq.s32.totalorder %s35, 0
      %p277 = por %p275, %p276
      %s279 = sadd.s32 %s278, 1
      %p282 = scmp.eq.s32.totalorder %s29, 1
      %p283 = scmp.ne.s32.totalorder %s278, %s280
      %p284 = scmp.eq.s32.totalorder %s29, 0
      %p285 = por %p283, %p284
      %p286 = scmp.ne.s32.totalorder %s278, %s280
      %p287 = scmp.eq.s32.totalorder %s34, 1
      %p288 = por %p286, %p287
      %p289 = scmp.ne.s32.totalorder %s280, %s281
      %p290 = scmp.eq.s32.totalorder %s34, 0
      %p291 = por %p289, %p290
      %p292 = scmp.ne.s32.totalorder %s280, %s281
      %p293 = scmp.eq.s32.totalorder %s35, 1
      %p294 = por %p292, %p293
      %p296 = scmp.ne.s32.totalorder %s281, %s295
      %p297 = scmp.eq.s32.totalorder %s35, 0
      %p298 = por %p296, %p297
      %s300 = sadd.s32 %s299, 1
      %p303 = scmp.eq.s32.totalorder %s29, 1
      %p304 = scmp.ne.s32.totalorder %s299, %s301
      %p305 = scmp.eq.s32.totalorder %s29, 0
      %p306 = por %p304, %p305
      %p307 = scmp.ne.s32.totalorder %s299, %s301
      %p308 = scmp.eq.s32.totalorder %s34, 1
      %p309 = por %p307, %p308
      %p310 = scmp.ne.s32.totalorder %s301, %s302
      %p311 = scmp.eq.s32.totalorder %s34, 0
      %p312 = por %p310, %p311
      %p313 = scmp.ne.s32.totalorder %s301, %s302
      %p314 = scmp.eq.s32.totalorder %s35, 1
      %p315 = por %p313, %p314
      %p317 = scmp.ne.s32.totalorder %s302, %s316
      %p318 = scmp.eq.s32.totalorder %s35, 0
      %p319 = por %p317, %p318
      %s321 = sadd.s32 %s320, 1
      %p324 = scmp.eq.s32.totalorder %s29, 1
      %p325 = scmp.ne.s32.totalorder %s320, %s322
      %p326 = scmp.eq.s32.totalorder %s29, 0
      %p327 = por %p325, %p326
      %p328 = scmp.ne.s32.totalorder %s320, %s322
      %p329 = scmp.eq.s32.totalorder %s34, 1
      %p330 = por %p328, %p329
      %p331 = scmp.ne.s32.totalorder %s322, %s323
      %p332 = scmp.eq.s32.totalorder %s34, 0
      %p333 = por %p331, %p332
      %p334 = scmp.ne.s32.totalorder %s322, %s323
      %p335 = scmp.eq.s32.totalorder %s35, 1
      %p336 = por %p334, %p335
      %p338 = scmp.ne.s32.totalorder %s323, %s337
      %p339 = scmp.eq.s32.totalorder %s35, 0
      %p340 = por %p338, %p339
      %s341 = ssub.s32 %s29, %s36
      %p342 = scmp.eq.s32.totalorder %s341, 0
      %s344 = sadd.s32 %s343, 1
      %s345 = scalar_select %p342, %s343, %s344
      %p348 = pneg %p342
      %p349 = scmp.eq.s32.totalorder %s29, 1
      %p350 = por %p348, %p349
      %p351 = scmp.ne.s32.totalorder %s343, %s346
      %p352 = scmp.eq.s32.totalorder %s29, 0
      %p353 = por %p351, %p352
      %p354 = scmp.ne.s32.totalorder %s343, %s346
      %p355 = scmp.eq.s32.totalorder %s34, 1
      %p356 = por %p354, %p355
      %p357 = scmp.ne.s32.totalorder %s346, %s347
      %p358 = scmp.eq.s32.totalorder %s34, 0
      %p359 = por %p357, %p358
      %p360 = scmp.ne.s32.totalorder %s346, %s347
      %p361 = scmp.eq.s32.totalorder %s35, 1
      %p362 = por %p360, %p361
      %p364 = scmp.ne.s32.totalorder %s347, %s363
      %p365 = scmp.eq.s32.totalorder %s35, 0
      %p366 = por %p364, %p365
      %p367 = scmp.le.s32.totalorder 1, %s29
      %p368 = scmp.lt.s32.totalorder %s29, 3
      %p369 = pnand %p367, %p368
      %p370 = pneg %p369
      // Predicated region
      $region9: #{tpu_custom_call.1} parent=5 // pred_check
        _
      $region10: #{tpu_custom_call.1} parent=5 // pred_check_branch
        %372 = sbr.rel (%p369) target = $region12
      $region11: #{tpu_custom_call.1} parent=5 // pred_region
        %s373 = ssub.s32 %s29, 1
        // Predicated region
        $region13: #{tpu_custom_call.1} parent=11 // pred_check
          %p374 = pneg %p102
        $region14: #{tpu_custom_call.1} parent=11 // pred_check_branch
          %376 = sbr.rel (%p374) target = $region16
        $region15: #{tpu_custom_call.1} parent=11 // pred_region
          _
        $region16: #{tpu_custom_call.1} parent=11 // pred_fallthru
          _
        // Predicated region
        $region17: #{tpu_custom_call.1} parent=11 // pred_check
          %p377 = pneg %p123
        $region18: #{tpu_custom_call.1} parent=11 // pred_check_branch
          %379 = sbr.rel (%p377) target = $region20
        $region19: #{tpu_custom_call.1} parent=11 // pred_region
          %381 = vsyncadd [#allocation6], 0
          %s383 = sshll.u32 %s3, 4
          %s384 = int_to_ptr.hbm [resolvable:$true] %s383
          %s385 = sshll.u32 [#allocation7], 4
          %s386 = int_to_ptr.vmem [resolvable:$true] %s385
          %388 = dma.hbm_to_vmem [thread:$0]  %s384, 16, %s386, [#allocation6]
        $region20: #{tpu_custom_call.1} parent=11 // pred_fallthru
          _
        // Predicated region
        $region21: #{tpu_custom_call.1} parent=11 // pred_check
          %p389 = pneg %p144
        $region22: #{tpu_custom_call.1} parent=11 // pred_check_branch
          %391 = sbr.rel (%p389) target = $region24
        $region23: #{tpu_custom_call.1} parent=11 // pred_region
          _
        $region24: #{tpu_custom_call.1} parent=11 // pred_fallthru
          _
        // Predicated region
        $region25: #{tpu_custom_call.1} parent=11 // pred_check
          %p392 = pneg %p165
        $region26: #{tpu_custom_call.1} parent=11 // pred_check_branch
          %394 = sbr.rel (%p392) target = $region28
        $region27: #{tpu_custom_call.1} parent=11 // pred_region
          _
        $region28: #{tpu_custom_call.1} parent=11 // pred_fallthru
          _
        // Predicated region
        $region29: #{tpu_custom_call.1} parent=11 // pred_check
          %p395 = pneg %p186
        $region30: #{tpu_custom_call.1} parent=11 // pred_check_branch
          %397 = sbr.rel (%p395) target = $region32
        $region31: #{tpu_custom_call.1} parent=11 // pred_region
          _
        $region32: #{tpu_custom_call.1} parent=11 // pred_fallthru
          _
        // Predicated region
        $region33: #{tpu_custom_call.1} parent=11 // pred_check
          %p398 = pneg %p207
        $region34: #{tpu_custom_call.1} parent=11 // pred_check_branch
          %400 = sbr.rel (%p398) target = $region36
        $region35: #{tpu_custom_call.1} parent=11 // pred_region
          _
        $region36: #{tpu_custom_call.1} parent=11 // pred_fallthru
          _
        // Predicated region
        $region37: #{tpu_custom_call.1} parent=11 // pred_check
          %p401 = pneg %p228
        $region38: #{tpu_custom_call.1} parent=11 // pred_check_branch
          %403 = sbr.rel (%p401) target = $region40
        $region39: #{tpu_custom_call.1} parent=11 // pred_region
          _
        $region40: #{tpu_custom_call.1} parent=11 // pred_fallthru
          _
        // Predicated region
        $region41: #{tpu_custom_call.1} parent=11 // pred_check
          %p404 = pneg %p249
        $region42: #{tpu_custom_call.1} parent=11 // pred_check_branch
          %406 = sbr.rel (%p404) target = $region44
        $region43: #{tpu_custom_call.1} parent=11 // pred_region
          _
        $region44: #{tpu_custom_call.1} parent=11 // pred_fallthru
          _
        // Predicated region
        $region45: #{tpu_custom_call.1} parent=11 // pred_check
          %p407 = pneg %p270
        $region46: #{tpu_custom_call.1} parent=11 // pred_check_branch
          %409 = sbr.rel (%p407) target = $region48
        $region47: #{tpu_custom_call.1} parent=11 // pred_region
          _
        $region48: #{tpu_custom_call.1} parent=11 // pred_fallthru
          _
        // Predicated region
        $region49: #{tpu_custom_call.1} parent=11 // pred_check
          %p410 = pneg %p291
        $region50: #{tpu_custom_call.1} parent=11 // pred_check_branch
          %412 = sbr.rel (%p410) target = $region52
        $region51: #{tpu_custom_call.1} parent=11 // pred_region
          _
        $region52: #{tpu_custom_call.1} parent=11 // pred_fallthru
          _
        // Predicated region
        $region53: #{tpu_custom_call.1} parent=11 // pred_check
          %p413 = pneg %p312
        $region54: #{tpu_custom_call.1} parent=11 // pred_check_branch
          %415 = sbr.rel (%p413) target = $region56
        $region55: #{tpu_custom_call.1} parent=11 // pred_region
          _
        $region56: #{tpu_custom_call.1} parent=11 // pred_fallthru
          _
        // Predicated region
        $region57: #{tpu_custom_call.1} parent=11 // pred_check
          %p416 = pneg %p333
        $region58: #{tpu_custom_call.1} parent=11 // pred_check_branch
          %418 = sbr.rel (%p416) target = $region60
        $region59: #{tpu_custom_call.1} parent=11 // pred_region
          _
        $region60: #{tpu_custom_call.1} parent=11 // pred_fallthru
          _
      $region12: #{tpu_custom_call.1} parent=5 // pred_fallthru
        _
      %p419 = scmp.lt.s32.totalorder %s29, 2
      // Predicated region
      $region61: #{tpu_custom_call.1} parent=5 // pred_check
        %p420 = pneg %p419
      $region62: #{tpu_custom_call.1} parent=5 // pred_check_branch
        %422 = sbr.rel (%p420) target = $region64
      $region63: #{tpu_custom_call.1} parent=5 // pred_region
        // Predicated region
        $region65: #{tpu_custom_call.1} parent=63 // pred_check
          %p423 = pneg %p49
        $region66: #{tpu_custom_call.1} parent=63 // pred_check_branch
          %425 = sbr.rel (%p423) target = $region68
        $region67: #{tpu_custom_call.1} parent=63 // pred_region
          %s426 = sand.u32 %s39, 1
          %s427 = scalar_lea.sflag [#allocation3], %s426
          %s428 = sand.u32 %s39, 1
          %s429 = smul.addr %s428, 8
          %s430 = scalar_lea.vmem [#allocation2], %s429
          %432 = vsyncadd %s427, 0
          %s433 = smul.addr %s29, 8
          %s434 = scalar_lea.hbm %s0, %s433
          %s436 = sshll.u32 %s434, 4
          %s437 = int_to_ptr.hbm [resolvable:$true] %s436
          %s438 = sshll.u32 %s430, 4
          %s439 = int_to_ptr.vmem [resolvable:$true] %s438
          %441 = dma.hbm_to_vmem [thread:$0]  %s437, 128, %s439, %s427
        $region68: #{tpu_custom_call.1} parent=63 // pred_fallthru
          _
        // Predicated region
        $region69: #{tpu_custom_call.1} parent=63 // pred_check
          %p442 = pneg %p75
        $region70: #{tpu_custom_call.1} parent=63 // pred_check_branch
          %444 = sbr.rel (%p442) target = $region72
        $region71: #{tpu_custom_call.1} parent=63 // pred_region
          %s445 = sand.u32 %s29, 1
          %s446 = scalar_lea.sflag [#allocation6], %s445
          %s447 = sand.u32 %s65, 1
          %s448 = scalar_lea.vmem [#allocation5], %s447
          %450 = vsyncadd %s446, 0
          %s451 = scalar_lea.hbm %s1, %s29
          %s453 = sshll.u32 %s451, 4
          %s454 = int_to_ptr.hbm [resolvable:$true] %s453
          %s455 = sshll.u32 %s448, 4
          %s456 = int_to_ptr.vmem [resolvable:$true] %s455
          %458 = dma.hbm_to_vmem [thread:$0]  %s454, 16, %s456, %s446
        $region72: #{tpu_custom_call.1} parent=63 // pred_fallthru
          _
      $region64: #{tpu_custom_call.1} parent=5 // pred_fallthru
        _
      %p459 = scmp.le.s32.totalorder 1, %s29
      %p460 = scmp.lt.s32.totalorder %s29, 3
      %p461 = pnand %p459, %p460
      %p462 = pneg %p461
      // Predicated region
      $region73: #{tpu_custom_call.1} parent=5 // pred_check
        _
      $region74: #{tpu_custom_call.1} parent=5 // pred_check_branch
        %464 = sbr.rel (%p461) target = $region76
      $region75: #{tpu_custom_call.1} parent=5 // pred_region
        %s465 = ssub.s32 %s29, 1
        %s466 = sand.u32 %s42, 1
        %s467 = scalar_lea.sflag [#allocation3], %s466
        %s468 = sand.u32 %s42, 1
        %s469 = smul.addr %s468, 8
        %s470 = scalar_lea.vmem [#allocation2], %s469
        // Predicated region
        $region77: #{tpu_custom_call.1} parent=75 // pred_check
          %p471 = pneg %p55
        $region78: #{tpu_custom_call.1} parent=75 // pred_check_branch
          %473 = sbr.rel (%p471) target = $region80
        $region79: #{tpu_custom_call.1} parent=75 // pred_region
          %475 = dma.done %s467, 128
        $region80: #{tpu_custom_call.1} parent=75 // pred_fallthru
          _
        %s476 = sand.u32 %s34, 1
        %s477 = scalar_lea.sflag [#allocation6], %s476
        %s478 = sand.u32 %s68, 1
        %s479 = scalar_lea.vmem [#allocation5], %s478
        // Predicated region
        $region81: #{tpu_custom_call.1} parent=75 // pred_check
          %p480 = pneg %p81
        $region82: #{tpu_custom_call.1} parent=75 // pred_check_branch
          %482 = sbr.rel (%p480) target = $region84
        $region83: #{tpu_custom_call.1} parent=75 // pred_region
          %484 = dma.done %s477, 16
        $region84: #{tpu_custom_call.1} parent=75 // pred_fallthru
          _
        // Predicated region
        $region85: #{tpu_custom_call.1} parent=75 // pred_check
          %p485 = pneg %p123
        $region86: #{tpu_custom_call.1} parent=75 // pred_check_branch
          %487 = sbr.rel (%p485) target = $region88
        $region87: #{tpu_custom_call.1} parent=75 // pred_region
          %489 = dma.done [#allocation6], 16
        $region88: #{tpu_custom_call.1} parent=75 // pred_fallthru
          _
        %s490 = sand.u32 %s42, 1
        %s491 = scalar_lea.sflag [#allocation3], %s490
        %s492 = sand.u32 %s42, 1
        %s493 = smul.addr %s492, 8
        %s494 = scalar_lea.vmem [#allocation2], %s493
        %p495 = pneg %p55
        %p496 = pneg %p52
        %s497 = sand.u32 %s34, 1
        %s498 = scalar_lea.sflag [#allocation6], %s497
        %s499 = sand.u32 %s68, 1
        %s500 = scalar_lea.vmem [#allocation5], %s499
        %p501 = pneg %p81
        %p502 = pneg %p78
        %p503 = pneg %p102
        %p504 = pneg %p99
        %p505 = pneg %p123
        %p506 = pneg %p120
        %p507 = pneg %p144
        %p508 = pneg %p141
        %p509 = pneg %p165
        %p510 = pneg %p162
        %p511 = pneg %p186
        %p512 = pneg %p183
        %p513 = pneg %p207
        %p514 = pneg %p204
        %p515 = pneg %p228
        %p516 = pneg %p225
        %p517 = pneg %p249
        %p518 = pneg %p246
        %p519 = pneg %p270
        %p520 = pneg %p267
        %p521 = pneg %p291
        %p522 = pneg %p288
        %p523 = pneg %p312
        %p524 = pneg %p309
        %p525 = pneg %p333
        %p526 = pneg %p330
        %p527 = pneg %p359
        %p528 = pneg %p356
        %s529 = sand.u32 %s346, 1
        %s530 = scalar_lea.sflag [#allocation4], %s529
        %s531 = sand.u32 %s346, 1
        %s532 = smul.addr %s531, 8
        %s533 = scalar_lea.vmem [#allocation8], %s532
        %v534 = vld [vmem:[%s470] sm:$0xff]
        %v535 = vld [vmem:[%s479] sm:$0x1]
        %vm536 = vcmp.eq.f32.partialorder %v535, 0.0
        %v537 = vsel %vm536, -1e+09, 0.0
        %v538 = vld [vmem:[%s2] sm:$0x1]
        %v539 = vld [vmem:[#allocation7] sm:$0x1]
        %vm540 = vcmask 261120
        %v541 = vsel %vm540, %v534, 0.0
        %542 = vadd.xlane.f32.xlu0 %v541
        %v543 = vpop.xlane.xlu0 %542
        %v544 = vrcp.pop 32.0
        %v545 = vmul.f32 32.0, %v544
        %v546 = vsub.f32 1.0, %v545
        %v547 = vmul.f32 %v544, %v546
        %v548 = vadd.f32 %v544, %v547
        %vm549 = vweird.f32 %v544
        %v550 = vsel %vm549, %v544, %v548
        %v551 = vmul.f32 %v543, %v550
        %v552 = vsub.f32 %v534, %v551
        %v553 = vmul.f32 %v552, %v552
        %v554 = vsel %vm540, %v553, 0.0
        %555 = vadd.xlane.f32.xlu0 %v554
        %v556 = vpop.xlane.xlu0 %555
        %v557 = vrcp.pop 31.0
        %v558 = vmul.f32 31.0, %v557
        %v559 = vsub.f32 1.0, %v558
        %v560 = vmul.f32 %v557, %v559
        %v561 = vadd.f32 %v557, %v560
        %vm562 = vweird.f32 %v557
        %v563 = vsel %vm562, %v557, %v561
        %v564 = vmul.f32 %v556, %v563
        %v565 = vrsqrt.pop %v564
        %v566 = vmul.f32 %v565, %v564
        %v567 = vmul.f32 %v566, %v565
        %v568 = vmul.f32 0.5, %v567
        %v569 = vsub.f32 1.5, %v568
        %v570 = vmul.f32 %v565, %v569
        %v571 = vmul.f32 %v564, %v570
        %vm572 = vcmp.eq.f32.partialorder %v564, inf
        %v573 = vsel %vm572, %v564, %v571
        %vm574 = vcmp.eq.f32.partialorder %v564, 0.0
        %v575 = vand.u32 %v564, 2147483648
        %v576 = vsel %vm574, %v575, %v573
        %v578 = vperm.slane %v538, 0
        %v580 = vmul.f32 %v578, %v552
        %v581 = vadd.f32 %v576, 1e-06
        %v582 = vrcp.pop %v581
        %v583 = vmul.f32 %v581, %v582
        %v584 = vsub.f32 1.0, %v583
        %v585 = vmul.f32 %v582, %v584
        %v586 = vadd.f32 %v582, %v585
        %vm587 = vweird.f32 %v581
        %vm588 = vweird.f32 %v582
        %vm589 = vmor %vm587, %vm588
        %v590 = vsel %vm589, %v582, %v586
        %v591 = vand.u32 2147483647, %v581
        %vm592 = vcmp.eq.f32.partialorder %v591, 8.507059e+37
        %v593 = vand.u32 %v581, 2147483648
        %v594 = vor.u32 1.1754944e-38, %v593
        %v595 = vsel %vm592, %v594, %v590
        %v596 = vmul.f32 %v580, %v595
        %v598 = vperm.slane %v539, 0
        %v600 = vadd.f32 %v596, %v598
        %v601 = vld [vmem:[%s4] sm:$0xff]
        %v602 = vld [vmem:[%s4 + $0x8] sm:$0xff]
        %v603 = vld [vmem:[%s4 + $0x10] sm:$0xff]
        %v604 = vld [vmem:[%s4 + $0x18] sm:$0xff]
        %v605 = vld [vmem:[%s5] sm:$0x1]
        %v607 = vperm.slane %v605, 0
        %v610 = vsel %vm540, %v600, 0
        %612 = vmatpush.msra.mxu0 0.0
        %613 = vmatpush.msra.mxu0 0.0
        %614 = vmatpush.msra.mxu0 0.0
        %615 = vmatpush.msra.mxu0 0.0
        %616 = vmatpush.msra.mxu0 0.0
        %617 = vmatpush.msra.mxu0 0.0
        %618 = vmatpush.msra.mxu0 0.0
        %619 = vmatpush.msra.mxu0 0.0
        %620 = vmatpush.msra.mxu0 0.0
        %621 = vmatpush.msra.mxu0 0.0
        %622 = vmatpush.msra.mxu0 0.0
        %623 = vmatpush.msra.mxu0 0.0
        %624 = vmatpush.msra.mxu0 %v604
        %625 = vmatpush.msra.mxu0 %v603
        %626 = vmatpush.msra.mxu0 %v602
        %627 = vmatpush.msra.mxu0 %v601
        %628 = vmatmul.f32.gmra.mxu0 %v610
        %v629 = vpop.f32.mrf.mxu0
        %v630 = vadd.f32 %v607, %v629
        %631 = vdwg.mxu0
        %v633 = vperm.slane %v537, 0
        %636 = vrot.lane.b32.xlu0 %v630, 96
        %v637 = vpop.permute.xlu0 %636
        %vm638 = vcmask 64512
        %v639 = vsel %vm638, %v630, 0
        %v641 = vsel %vm638, %v637, 0
        %643 = vmatpush.xpose.msra.mxu0 0.0
        %644 = vmatpush.xpose.msra.mxu0 0.0
        %645 = vmatpush.xpose.msra.mxu0 0.0
        %646 = vmatpush.xpose.msra.mxu0 0.0
        %647 = vmatpush.xpose.msra.mxu0 0.0
        %648 = vmatpush.xpose.msra.mxu0 0.0
        %649 = vmatpush.xpose.msra.mxu0 0.0
        %650 = vmatpush.xpose.msra.mxu0 0.0
        %651 = vmatpush.xpose.msra.mxu0 0.0
        %652 = vmatpush.xpose.msra.mxu0 0.0
        %653 = vmatpush.xpose.msra.mxu0 0.0
        %654 = vmatpush.xpose.msra.mxu0 0.0
        %655 = vmatpush.xpose.msra.mxu0 0.0
        %656 = vmatpush.xpose.msra.mxu0 0.0
        %657 = vmatpush.xpose.msra.mxu0 0.0
        %658 = vmatpush.xpose.msra.mxu0 %v641
        %659 = vmatmul.f32.gmra.mxu0 %v639
        %v660 = vpop.f32.mrf.mxu0
        %v661 = vadd.f32 %v633, %v660
        %662 = vdwg.mxu0
        %v663 = vsel %vm638, %v661, -inf
        %664 = vmax.xlane.f32.xlu0 %v663
        %v665 = vpop.xlane.xlu0 %664
        %v666 = vsub.f32 %v661, %v665
        %v667 = vmul.f32 %v666, 1.442695
        %v668 = vpow.pop %v667
        %v669 = vsel %vm638, %v668, 0.0
        %670 = vadd.xlane.f32.xlu0 %v669
        %v671 = vpop.xlane.xlu0 %670
        %v672 = vrcp.pop %v671
        %v673 = vmul.f32 %v671, %v672
        %v674 = vsub.f32 1.0, %v673
        %v675 = vmul.f32 %v672, %v674
        %v676 = vadd.f32 %v672, %v675
        %vm677 = vweird.f32 %v671
        %vm678 = vweird.f32 %v672
        %vm679 = vmor %vm677, %vm678
        %v680 = vsel %vm679, %v672, %v676
        %v681 = vand.u32 2147483647, %v671
        %vm682 = vcmp.eq.f32.partialorder %v681, 8.507059e+37
        %v683 = vand.u32 %v671, 2147483648
        %v684 = vor.u32 1.1754944e-38, %v683
        %v685 = vsel %vm682, %v684, %v680
        %686 = vrot.lane.b32.xlu0 %v630, 64
        %v687 = vpop.permute.xlu0 %686
        %v690 = vsel %vm638, %v668, 0
        %692 = vmatpush.msra.mxu0 0.0
        %693 = vmatpush.msra.mxu0 0.0
        %694 = vmatpush.msra.mxu0 0.0
        %695 = vmatpush.msra.mxu0 0.0
        %696 = vmatpush.msra.mxu0 0.0
        %697 = vmatpush.msra.mxu0 0.0
        %698 = vmatpush.msra.mxu0 0.0
        %699 = vmatpush.msra.mxu0 0.0
        %700 = vmatpush.msra.mxu0 0.0
        %701 = vmatpush.msra.mxu0 0.0
        %702 = vmatpush.msra.mxu0 0.0
        %703 = vmatpush.msra.mxu0 0.0
        %704 = vmatpush.msra.mxu0 0.0
        %705 = vmatpush.msra.mxu0 0.0
        %706 = vmatpush.msra.mxu0 0.0
        %707 = vmatpush.msra.mxu0 %v687
        %708 = vmatmul.f32.gmra.mxu0 %v690
        %v709 = vpop.f32.mrf.mxu0
        %v710 = vadd.f32 0.0, %v709
        %711 = vdwg.mxu0
        %v712 = vmul.f32 %v710, %v685
        %713 = vrot.lane.b32.xlu0 %v630, 120
        %v714 = vpop.permute.xlu0 %713
        %715 = vrot.lane.b32.xlu0 %v630, 88
        %v716 = vpop.permute.xlu0 %715
        %v717 = vsel %vm638, %v714, 0
        %v719 = vsel %vm638, %v716, 0
        %721 = vmatpush.xpose.msra.mxu0 0.0
        %722 = vmatpush.xpose.msra.mxu0 0.0
        %723 = vmatpush.xpose.msra.mxu0 0.0
        %724 = vmatpush.xpose.msra.mxu0 0.0
        %725 = vmatpush.xpose.msra.mxu0 0.0
        %726 = vmatpush.xpose.msra.mxu0 0.0
        %727 = vmatpush.xpose.msra.mxu0 0.0
        %728 = vmatpush.xpose.msra.mxu0 0.0
        %729 = vmatpush.xpose.msra.mxu0 0.0
        %730 = vmatpush.xpose.msra.mxu0 0.0
        %731 = vmatpush.xpose.msra.mxu0 0.0
        %732 = vmatpush.xpose.msra.mxu0 0.0
        %733 = vmatpush.xpose.msra.mxu0 0.0
        %734 = vmatpush.xpose.msra.mxu0 0.0
        %735 = vmatpush.xpose.msra.mxu0 0.0
        %736 = vmatpush.xpose.msra.mxu0 %v719
        %737 = vmatmul.f32.gmra.mxu0 %v717
        %v738 = vpop.f32.mrf.mxu0
        %v739 = vadd.f32 %v633, %v738
        %740 = vdwg.mxu0
        %v741 = vsel %vm638, %v739, -inf
        %742 = vmax.xlane.f32.xlu0 %v741
        %v743 = vpop.xlane.xlu0 %742
        %v744 = vsub.f32 %v739, %v743
        %v745 = vmul.f32 %v744, 1.442695
        %v746 = vpow.pop %v745
        %v747 = vsel %vm638, %v746, 0.0
        %748 = vadd.xlane.f32.xlu0 %v747
        %v749 = vpop.xlane.xlu0 %748
        %v750 = vrcp.pop %v749
        %v751 = vmul.f32 %v749, %v750
        %v752 = vsub.f32 1.0, %v751
        %v753 = vmul.f32 %v750, %v752
        %v754 = vadd.f32 %v750, %v753
        %vm755 = vweird.f32 %v749
        %vm756 = vweird.f32 %v750
        %vm757 = vmor %vm755, %vm756
        %v758 = vsel %vm757, %v750, %v754
        %v759 = vand.u32 2147483647, %v749
        %vm760 = vcmp.eq.f32.partialorder %v759, 8.507059e+37
        %v761 = vand.u32 %v749, 2147483648
        %v762 = vor.u32 1.1754944e-38, %v761
        %v763 = vsel %vm760, %v762, %v758
        %764 = vrot.lane.b32.xlu0 %v630, 56
        %v765 = vpop.permute.xlu0 %764
        %v768 = vsel %vm638, %v746, 0
        %770 = vmatpush.msra.mxu0 0.0
        %771 = vmatpush.msra.mxu0 0.0
        %772 = vmatpush.msra.mxu0 0.0
        %773 = vmatpush.msra.mxu0 0.0
        %774 = vmatpush.msra.mxu0 0.0
        %775 = vmatpush.msra.mxu0 0.0
        %776 = vmatpush.msra.mxu0 0.0
        %777 = vmatpush.msra.mxu0 0.0
        %778 = vmatpush.msra.mxu0 0.0
        %779 = vmatpush.msra.mxu0 0.0
        %780 = vmatpush.msra.mxu0 0.0
        %781 = vmatpush.msra.mxu0 0.0
        %782 = vmatpush.msra.mxu0 0.0
        %783 = vmatpush.msra.mxu0 0.0
        %784 = vmatpush.msra.mxu0 0.0
        %785 = vmatpush.msra.mxu0 %v765
        %786 = vmatmul.f32.gmra.mxu0 %v768
        %v787 = vpop.f32.mrf.mxu0
        %v788 = vadd.f32 0.0, %v787
        %789 = vdwg.mxu0
        %v790 = vmul.f32 %v788, %v763
        %791 = vrot.lane.b32.xlu0 %v630, 112
        %v792 = vpop.permute.xlu0 %791
        %793 = vrot.lane.b32.xlu0 %v630, 80
        %v794 = vpop.permute.xlu0 %793
        %v795 = vsel %vm638, %v792, 0
        %v797 = vsel %vm638, %v794, 0
        %799 = vmatpush.xpose.msra.mxu0 0.0
        %800 = vmatpush.xpose.msra.mxu0 0.0
        %801 = vmatpush.xpose.msra.mxu0 0.0
        %802 = vmatpush.xpose.msra.mxu0 0.0
        %803 = vmatpush.xpose.msra.mxu0 0.0
        %804 = vmatpush.xpose.msra.mxu0 0.0
        %805 = vmatpush.xpose.msra.mxu0 0.0
        %806 = vmatpush.xpose.msra.mxu0 0.0
        %807 = vmatpush.xpose.msra.mxu0 0.0
        %808 = vmatpush.xpose.msra.mxu0 0.0
        %809 = vmatpush.xpose.msra.mxu0 0.0
        %810 = vmatpush.xpose.msra.mxu0 0.0
        %811 = vmatpush.xpose.msra.mxu0 0.0
        %812 = vmatpush.xpose.msra.mxu0 0.0
        %813 = vmatpush.xpose.msra.mxu0 0.0
        %814 = vmatpush.xpose.msra.mxu0 %v797
        %815 = vmatmul.f32.gmra.mxu0 %v795
        %v816 = vpop.f32.mrf.mxu0
        %v817 = vadd.f32 %v633, %v816
        %818 = vdwg.mxu0
        %v819 = vsel %vm638, %v817, -inf
        %820 = vmax.xlane.f32.xlu0 %v819
        %v821 = vpop.xlane.xlu0 %820
        %v822 = vsub.f32 %v817, %v821
        %v823 = vmul.f32 %v822, 1.442695
        %v824 = vpow.pop %v823
        %v825 = vsel %vm638, %v824, 0.0
        %826 = vadd.xlane.f32.xlu0 %v825
        %v827 = vpop.xlane.xlu0 %826
        %v828 = vrcp.pop %v827
        %v829 = vmul.f32 %v827, %v828
        %v830 = vsub.f32 1.0, %v829
        %v831 = vmul.f32 %v828, %v830
        %v832 = vadd.f32 %v828, %v831
        %vm833 = vweird.f32 %v827
        %vm834 = vweird.f32 %v828
        %vm835 = vmor %vm833, %vm834
        %v836 = vsel %vm835, %v828, %v832
        %v837 = vand.u32 2147483647, %v827
        %vm838 = vcmp.eq.f32.partialorder %v837, 8.507059e+37
        %v839 = vand.u32 %v827, 2147483648
        %v840 = vor.u32 1.1754944e-38, %v839
        %v841 = vsel %vm838, %v840, %v836
        %842 = vrot.lane.b32.xlu0 %v630, 48
        %v843 = vpop.permute.xlu0 %842
        %v846 = vsel %vm638, %v824, 0
        %848 = vmatpush.msra.mxu0 0.0
        %849 = vmatpush.msra.mxu0 0.0
        %850 = vmatpush.msra.mxu0 0.0
        %851 = vmatpush.msra.mxu0 0.0
        %852 = vmatpush.msra.mxu0 0.0
        %853 = vmatpush.msra.mxu0 0.0
        %854 = vmatpush.msra.mxu0 0.0
        %855 = vmatpush.msra.mxu0 0.0
        %856 = vmatpush.msra.mxu0 0.0
        %857 = vmatpush.msra.mxu0 0.0
        %858 = vmatpush.msra.mxu0 0.0
        %859 = vmatpush.msra.mxu0 0.0
        %860 = vmatpush.msra.mxu0 0.0
        %861 = vmatpush.msra.mxu0 0.0
        %862 = vmatpush.msra.mxu0 0.0
        %863 = vmatpush.msra.mxu0 %v843
        %864 = vmatmul.f32.gmra.mxu0 %v846
        %v865 = vpop.f32.mrf.mxu0
        %v866 = vadd.f32 0.0, %v865
        %867 = vdwg.mxu0
        %v868 = vmul.f32 %v866, %v841
        %869 = vrot.lane.b32.xlu0 %v630, 104
        %v870 = vpop.permute.xlu0 %869
        %871 = vrot.lane.b32.xlu0 %v630, 72
        %v872 = vpop.permute.xlu0 %871
        %v873 = vsel %vm638, %v870, 0
        %v875 = vsel %vm638, %v872, 0
        %877 = vmatpush.xpose.msra.mxu0 0.0
        %878 = vmatpush.xpose.msra.mxu0 0.0
        %879 = vmatpush.xpose.msra.mxu0 0.0
        %880 = vmatpush.xpose.msra.mxu0 0.0
        %881 = vmatpush.xpose.msra.mxu0 0.0
        %882 = vmatpush.xpose.msra.mxu0 0.0
        %883 = vmatpush.xpose.msra.mxu0 0.0
        %884 = vmatpush.xpose.msra.mxu0 0.0
        %885 = vmatpush.xpose.msra.mxu0 0.0
        %886 = vmatpush.xpose.msra.mxu0 0.0
        %887 = vmatpush.xpose.msra.mxu0 0.0
        %888 = vmatpush.xpose.msra.mxu0 0.0
        %889 = vmatpush.xpose.msra.mxu0 0.0
        %890 = vmatpush.xpose.msra.mxu0 0.0
        %891 = vmatpush.xpose.msra.mxu0 0.0
        %892 = vmatpush.xpose.msra.mxu0 %v875
        %893 = vmatmul.f32.gmra.mxu0 %v873
        %v894 = vpop.f32.mrf.mxu0
        %v895 = vadd.f32 %v633, %v894
        %896 = vdwg.mxu0
        %v897 = vsel %vm638, %v895, -inf
        %898 = vmax.xlane.f32.xlu0 %v897
        %v899 = vpop.xlane.xlu0 %898
        %v900 = vsub.f32 %v895, %v899
        %v901 = vmul.f32 %v900, 1.442695
        %v902 = vpow.pop %v901
        %v903 = vsel %vm638, %v902, 0.0
        %904 = vadd.xlane.f32.xlu0 %v903
        %v905 = vpop.xlane.xlu0 %904
        %v906 = vrcp.pop %v905
        %v907 = vmul.f32 %v905, %v906
        %v908 = vsub.f32 1.0, %v907
        %v909 = vmul.f32 %v906, %v908
        %v910 = vadd.f32 %v906, %v909
        %vm911 = vweird.f32 %v905
        %vm912 = vweird.f32 %v906
        %vm913 = vmor %vm911, %vm912
        %v914 = vsel %vm913, %v906, %v910
        %v915 = vand.u32 2147483647, %v905
        %vm916 = vcmp.eq.f32.partialorder %v915, 8.507059e+37
        %v917 = vand.u32 %v905, 2147483648
        %v918 = vor.u32 1.1754944e-38, %v917
        %v919 = vsel %vm916, %v918, %v914
        %920 = vrot.lane.b32.xlu0 %v630, 40
        %v921 = vpop.permute.xlu0 %920
        %v924 = vsel %vm638, %v902, 0
        %926 = vmatpush.msra.mxu0 0.0
        %927 = vmatpush.msra.mxu0 0.0
        %928 = vmatpush.msra.mxu0 0.0
        %929 = vmatpush.msra.mxu0 0.0
        %930 = vmatpush.msra.mxu0 0.0
        %931 = vmatpush.msra.mxu0 0.0
        %932 = vmatpush.msra.mxu0 0.0
        %933 = vmatpush.msra.mxu0 0.0
        %934 = vmatpush.msra.mxu0 0.0
        %935 = vmatpush.msra.mxu0 0.0
        %936 = vmatpush.msra.mxu0 0.0
        %937 = vmatpush.msra.mxu0 0.0
        %938 = vmatpush.msra.mxu0 0.0
        %939 = vmatpush.msra.mxu0 0.0
        %940 = vmatpush.msra.mxu0 0.0
        %941 = vmatpush.msra.mxu0 %v921
        %942 = vmatmul.f32.gmra.mxu0 %v924
        %v943 = vpop.f32.mrf.mxu0
        %v944 = vadd.f32 0.0, %v943
        %945 = vdwg.mxu0
        %v946 = vmul.f32 %v944, %v919
        %948 = vrot.lane.b32.xlu0 %v790, 8
        %v949 = vpop.permute.xlu0 %948
        %952 = vrot.lane.b32.xlu0 %v868, 16
        %v953 = vpop.permute.xlu0 %952
        %956 = vrot.lane.b32.xlu0 %v946, 24
        %v957 = vpop.permute.xlu0 %956
        %v959 = vsel %vm638, %v712, %v949
        %vm960 = vcmask 130048
        %v961 = vsel %vm960, %v959, %v953
        %vm962 = vcmask 195584
        %v963 = vsel %vm962, %v961, %v957
        %v964 = vld [vmem:[%s6] sm:$0xff]
        %v965 = vld [vmem:[%s6 + $0x8] sm:$0xff]
        %v966 = vld [vmem:[%s6 + $0x10] sm:$0xff]
        %v967 = vld [vmem:[%s6 + $0x18] sm:$0xff]
        %v968 = vld [vmem:[%s7] sm:$0x1]
        %v970 = vperm.slane %v968, 0
        %v973 = vsel %vm540, %v963, 0
        %975 = vmatpush.msra.mxu0 0.0
        %976 = vmatpush.msra.mxu0 0.0
        %977 = vmatpush.msra.mxu0 0.0
        %978 = vmatpush.msra.mxu0 0.0
        %979 = vmatpush.msra.mxu0 0.0
        %980 = vmatpush.msra.mxu0 0.0
        %981 = vmatpush.msra.mxu0 0.0
        %982 = vmatpush.msra.mxu0 0.0
        %983 = vmatpush.msra.mxu0 0.0
        %984 = vmatpush.msra.mxu0 0.0
        %985 = vmatpush.msra.mxu0 0.0
        %986 = vmatpush.msra.mxu0 0.0
        %987 = vmatpush.msra.mxu0 %v967
        %988 = vmatpush.msra.mxu0 %v966
        %989 = vmatpush.msra.mxu0 %v965
        %990 = vmatpush.msra.mxu0 %v964
        %991 = vmatmul.f32.gmra.mxu0 %v973
        %v992 = vpop.f32.mrf.mxu0
        %v993 = vadd.f32 %v970, %v992
        %994 = vdwg.mxu0
        %v995 = vadd.f32 %v534, %v993
        %v996 = vld [vmem:[%s8] sm:$0x1]
        %v997 = vld [vmem:[%s9] sm:$0x1]
        %v998 = vsel %vm540, %v995, 0.0
        %999 = vadd.xlane.f32.xlu0 %v998
        %v1000 = vpop.xlane.xlu0 %999
        %v1001 = vmul.f32 %v1000, %v550
        %v1002 = vsub.f32 %v995, %v1001
        %v1003 = vmul.f32 %v1002, %v1002
        %v1004 = vsel %vm540, %v1003, 0.0
        %1005 = vadd.xlane.f32.xlu0 %v1004
        %v1006 = vpop.xlane.xlu0 %1005
        %v1007 = vmul.f32 %v1006, %v563
        %v1008 = vrsqrt.pop %v1007
        %v1009 = vmul.f32 %v1008, %v1007
        %v1010 = vmul.f32 %v1009, %v1008
        %v1011 = vmul.f32 0.5, %v1010
        %v1012 = vsub.f32 1.5, %v1011
        %v1013 = vmul.f32 %v1008, %v1012
        %v1014 = vmul.f32 %v1007, %v1013
        %vm1015 = vcmp.eq.f32.partialorder %v1007, inf
        %v1016 = vsel %vm1015, %v1007, %v1014
        %vm1017 = vcmp.eq.f32.partialorder %v1007, 0.0
        %v1018 = vand.u32 %v1007, 2147483648
        %v1019 = vsel %vm1017, %v1018, %v1016
        %v1021 = vperm.slane %v996, 0
        %v1023 = vmul.f32 %v1021, %v1002
        %v1024 = vadd.f32 %v1019, 1e-06
        %v1025 = vrcp.pop %v1024
        %v1026 = vmul.f32 %v1024, %v1025
        %v1027 = vsub.f32 1.0, %v1026
        %v1028 = vmul.f32 %v1025, %v1027
        %v1029 = vadd.f32 %v1025, %v1028
        %vm1030 = vweird.f32 %v1024
        %vm1031 = vweird.f32 %v1025
        %vm1032 = vmor %vm1030, %vm1031
        %v1033 = vsel %vm1032, %v1025, %v1029
        %v1034 = vand.u32 2147483647, %v1024
        %vm1035 = vcmp.eq.f32.partialorder %v1034, 8.507059e+37
        %v1036 = vand.u32 %v1024, 2147483648
        %v1037 = vor.u32 1.1754944e-38, %v1036
        %v1038 = vsel %vm1035, %v1037, %v1033
        %v1039 = vmul.f32 %v1023, %v1038
        %v1041 = vperm.slane %v997, 0
        %v1043 = vadd.f32 %v1039, %v1041
        %v1044 = vld [vmem:[%s10] sm:$0xff]
        %v1045 = vld [vmem:[%s10 + $0x8] sm:$0xff]
        %v1046 = vld [vmem:[%s10 + $0x10] sm:$0xff]
        %v1047 = vld [vmem:[%s10 + $0x18] sm:$0xff]
        %v1048 = vld [vmem:[%s11] sm:$0x1]
        %v1050 = vperm.slane %v1048, 0
        %v1053 = vsel %vm540, %v1043, 0
        %1055 = vmatpush.msra.mxu0 0.0
        %1056 = vmatpush.msra.mxu0 0.0
        %1057 = vmatpush.msra.mxu0 0.0
        %1058 = vmatpush.msra.mxu0 0.0
        %1059 = vmatpush.msra.mxu0 0.0
        %1060 = vmatpush.msra.mxu0 0.0
        %1061 = vmatpush.msra.mxu0 0.0
        %1062 = vmatpush.msra.mxu0 0.0
        %1063 = vmatpush.msra.mxu0 0.0
        %1064 = vmatpush.msra.mxu0 0.0
        %1065 = vmatpush.msra.mxu0 0.0
        %1066 = vmatpush.msra.mxu0 0.0
        %1067 = vmatpush.msra.mxu0 %v1047
        %1068 = vmatpush.msra.mxu0 %v1046
        %1069 = vmatpush.msra.mxu0 %v1045
        %1070 = vmatpush.msra.mxu0 %v1044
        %1071 = vmatmul.f32.gmra.mxu0 %v1053
        %v1072 = vpop.f32.mrf.mxu0
        %v1073 = vadd.f32 %v1050, %v1072
        %1074 = vdwg.mxu0
        %v1075 = vmax.f32 %v1073, 0.0
        %v1076 = vld [vmem:[%s12] sm:$0xff]
        %v1077 = vld [vmem:[%s12 + $0x8] sm:$0xff]
        %v1078 = vld [vmem:[%s12 + $0x10] sm:$0xff]
        %v1079 = vld [vmem:[%s12 + $0x18] sm:$0xff]
        %v1080 = vld [vmem:[%s12 + $0x20] sm:$0xff]
        %v1081 = vld [vmem:[%s12 + $0x28] sm:$0xff]
        %v1082 = vld [vmem:[%s12 + $0x30] sm:$0xff]
        %v1083 = vld [vmem:[%s12 + $0x38] sm:$0xff]
        %v1084 = vld [vmem:[%s13] sm:$0x1]
        %v1086 = vperm.slane %v1084, 0
        %vm1088 = vcmask 523264
        %v1090 = vsel %vm1088, %v1075, 0
        %1092 = vmatpush.msra.mxu0 0.0
        %1093 = vmatpush.msra.mxu0 0.0
        %1094 = vmatpush.msra.mxu0 0.0
        %1095 = vmatpush.msra.mxu0 0.0
        %1096 = vmatpush.msra.mxu0 0.0
        %1097 = vmatpush.msra.mxu0 0.0
        %1098 = vmatpush.msra.mxu0 0.0
        %1099 = vmatpush.msra.mxu0 0.0
        %1100 = vmatpush.msra.mxu0 %v1083
        %1101 = vmatpush.msra.mxu0 %v1082
        %1102 = vmatpush.msra.mxu0 %v1081
        %1103 = vmatpush.msra.mxu0 %v1080
        %1104 = vmatpush.msra.mxu0 %v1079
        %1105 = vmatpush.msra.mxu0 %v1078
        %1106 = vmatpush.msra.mxu0 %v1077
        %1107 = vmatpush.msra.mxu0 %v1076
        %1108 = vmatmul.f32.gmra.mxu0 %v1090
        %v1109 = vpop.f32.mrf.mxu0
        %v1110 = vadd.f32 %v1086, %v1109
        %1111 = vdwg.mxu0
        %v1112 = vadd.f32 %v995, %v1110
        %1113 = vst.msk [vmem:[%s533] sm:$0xff] %vm540, %v1112
        %s1114 = sand.u32 %s346, 1
        %s1115 = scalar_lea.sflag [#allocation4], %s1114
        %s1116 = sand.u32 %s346, 1
        %s1117 = smul.addr %s1116, 8
        %s1118 = scalar_lea.vmem [#allocation8], %s1117
        // Predicated region
        $region89: #{tpu_custom_call.1} parent=75 // pred_check
          %p1119 = pneg %p356
        $region90: #{tpu_custom_call.1} parent=75 // pred_check_branch
          %1121 = sbr.rel (%p1119) target = $region92
        $region91: #{tpu_custom_call.1} parent=75 // pred_region
          %1123 = vsyncadd %s1115, 0
          %s1124 = smul.addr %s34, 8
          %s1125 = scalar_lea.hbm %s14, %s1124
          %s1127 = sshll.u32 %s1118, 4
          %s1128 = int_to_ptr.vmem [resolvable:$true] %s1127
          %s1129 = sshll.u32 %s1125, 4
          %s1130 = int_to_ptr.hbm [resolvable:$true] %s1129
          %1132 = dma.vmem_to_hbm [thread:$0]  %s1128, 128, %s1130, %s1115
        $region92: #{tpu_custom_call.1} parent=75 // pred_fallthru
          _
      $region76: #{tpu_custom_call.1} parent=5 // pred_fallthru
        _
      %p1133 = scmp.le.s32.totalorder 2, %s29
      // Predicated region
      $region93: #{tpu_custom_call.1} parent=5 // pred_check
        %p1134 = pneg %p1133
      $region94: #{tpu_custom_call.1} parent=5 // pred_check_branch
        %1136 = sbr.rel (%p1134) target = $region96
      $region95: #{tpu_custom_call.1} parent=5 // pred_region
        %s1137 = ssub.s32 %s29, 2
        // Predicated region
        $region97: #{tpu_custom_call.1} parent=95 // pred_check
          %p1138 = pneg %p362
        $region98: #{tpu_custom_call.1} parent=95 // pred_check_branch
          %1140 = sbr.rel (%p1138) target = $region100
        $region99: #{tpu_custom_call.1} parent=95 // pred_region
          %s1141 = sand.u32 %s347, 1
          %s1142 = scalar_lea.sflag [#allocation4], %s1141
          %s1143 = sand.u32 %s347, 1
          %s1144 = smul.addr %s1143, 8
          %s1145 = scalar_lea.vmem [#allocation8], %s1144
          %1147 = dma.done %s1142, 128
        $region100: #{tpu_custom_call.1} parent=95 // pred_fallthru
          _
      $region96: #{tpu_custom_call.1} parent=5 // pred_fallthru
        _
    $region6: #{tpu_custom_call.1} parent=1 // loop_footer
      %s33 = sadd.s32 1, %s29
    $region7: #{tpu_custom_call.1} parent=1 // loop_footer_branch
      %28 = sbr.rel target = $region3
    $region8: #{tpu_custom_call.1} parent=1 // loop_exit
      _
    %1148 = vsyncpa [#allocation3], 1
    %s1149 = scalar_lea.sflag [#allocation3], 1
    %1150 = vsyncpa %s1149, 1
    %1151 = vsyncpa [#allocation6], 1
    %s1152 = scalar_lea.sflag [#allocation6], 1
    %1153 = vsyncpa %s1152, 1
    %1154 = vsyncpa [#allocation4], 1
    %s1155 = scalar_lea.sflag [#allocation4], 1
    %1156 = vsyncpa %s1155, 1

// kernel: tpu_custom_call.1
$region0: #{tpu_custom_call.1}
  #allocation0 [shape = 'u32[]', space=smem, size = 0x4, offset = 0x4, fixed_abs, tag = 'smem constant byte address 0x4 - core index']
  #allocation1 [shape = 'u32[72,128]{1,0:T(1,128)}', space=vmem, size = 0x9000, scoped, tag = 'internal scratch']
  %s0 = inlined_call_operand.hbm [shape: f32[2,8,32], index: 0, kind: input, shape index: {}]
  %s1 = inlined_call_operand.hbm [shape: f32[2,1,8], index: 1, kind: input, shape index: {}]
  %s2 = inlined_call_operand.vmem [shape: f32[1,32], index: 2, kind: input, shape index: {}]
  %s3 = inlined_call_operand.hbm [shape: f32[1,32], index: 3, kind: input, shape index: {}]
  %s4 = inlined_call_operand.vmem [shape: f32[32,96], index: 4, kind: input, shape index: {}]
  %s5 = inlined_call_operand.vmem [shape: f32[1,96], index: 5, kind: input, shape index: {}]
  %s6 = inlined_call_operand.vmem [shape: f32[32,32], index: 6, kind: input, shape index: {}]
  %s7 = inlined_call_operand.vmem [shape: f32[1,32], index: 7, kind: input, shape index: {}]
  %s8 = inlined_call_operand.vmem [shape: f32[1,32], index: 8, kind: input, shape index: {}]
  %s9 = inlined_call_operand.vmem [shape: f32[1,32], index: 9, kind: input, shape index: {}]
  %s10 = inlined_call_operand.vmem [shape: f32[32,64], index: 10, kind: input, shape index: {}]
  %s11 = inlined_call_operand.vmem [shape: f32[1,64], index: 11, kind: input, shape index: {}]
  %s12 = inlined_call_operand.vmem [shape: f32[64,32], index: 12, kind: input, shape index: {}]
  %s13 = inlined_call_operand.vmem [shape: f32[1,32], index: 13, kind: input, shape index: {}]
  %s14 = inlined_call_operand.hbm [shape: f32[2,8,32], index: 14, kind: output, shape index: {}]
  %s15 = sld [smem:[#allocation0]]
  $region101: #{tpu_custom_call.1} parent=0
    _
  %s17 = ssub.s32 1, %s15
  %s18 = scalar_select 0, %s17, %s15
  $region1: #{tpu_custom_call.1} parent=0
    #allocation2 [shape = 'u8[8192]{0}', space=vmem, size = 0x2000, scoped, tag = 'input window, operand 0']
    #allocation3 [shape = 's32[2]{0}', space=sflag, size = 0x8, scoped, tag = 'scoped memory for tpu_custom_call.1']
    #allocation4 [shape = 's32[2]{0}', space=sflag, size = 0x8, scoped, tag = 'scoped memory for tpu_custom_call.1']
    #allocation5 [shape = 'u8[1024]{0}', space=vmem, size = 0x400, scoped, tag = 'input window, operand 1']
    #allocation6 [shape = 's32[2]{0}', space=sflag, size = 0x8, scoped, tag = 'scoped memory for tpu_custom_call.1']
    #allocation7 [shape = 'u8[512]{0}', space=vmem, size = 0x400, scoped, tag = 'input window, operand 3, single buffered']
    #allocation8 [shape = 'u8[8192]{0}', space=vmem, size = 0x2000, scoped, tag = 'output window, operand 0']
    %19 = vsyncpa [#allocation3], 0
    %s20 = scalar_lea.sflag [#allocation3], 1
    %21 = vsyncpa %s20, 0
    %22 = vsyncpa [#allocation6], 0
    %s23 = scalar_lea.sflag [#allocation6], 1
    %24 = vsyncpa %s23, 0
    %25 = vsyncpa [#allocation4], 0
    %s26 = scalar_lea.sflag [#allocation4], 1
    %27 = vsyncpa %s26, 0
    loop: start=0, step=1, limit=4
    $region2: #{tpu_custom_call.1} parent=1 // loop_pre_header
      _
    $region3: #{tpu_custom_call.1} parent=1 // loop_header
      %s29 = sphi 0, %s33
      %p30 = scmp.ge.s32.totalorder %s29, 4
      %s39 = sphi 0, %s41
      %s42 = sphi 0, %s39
      %s43 = sphi 0, %s42
      %s59 = sphi 0, %s43
      %s65 = sphi 0, %s67
      %s68 = sphi 0, %s65
      %s69 = sphi 0, %s68
      %s85 = sphi 0, %s69
      %s89 = sphi 0, %s89
      %s91 = sphi 0, %s89
      %s92 = sphi 0, %s91
      %s106 = sphi 0, %s92
      %s110 = sphi 0, %s110
      %s112 = sphi 0, %s110
      %s113 = sphi 0, %s112
      %s127 = sphi 0, %s113
      %s131 = sphi 0, %s131
      %s133 = sphi 0, %s131
      %s134 = sphi 0, %s133
      %s148 = sphi 0, %s134
      %s152 = sphi 0, %s152
      %s154 = sphi 0, %s152
      %s155 = sphi 0, %s154
      %s169 = sphi 0, %s155
      %s173 = sphi 0, %s173
      %s175 = sphi 0, %s173
      %s176 = sphi 0, %s175
      %s190 = sphi 0, %s176
      %s194 = sphi 0, %s194
      %s196 = sphi 0, %s194
      %s197 = sphi 0, %s196
      %s211 = sphi 0, %s197
      %s215 = sphi 0, %s215
      %s217 = sphi 0, %s215
      %s218 = sphi 0, %s217
      %s232 = sphi 0, %s218
      %s236 = sphi 0, %s236
      %s238 = sphi 0, %s236
      %s239 = sphi 0, %s238
      %s253 = sphi 0, %s239
      %s257 = sphi 0, %s257
      %s259 = sphi 0, %s257
      %s260 = sphi 0, %s259
      %s274 = sphi 0, %s260
      %s278 = sphi 0, %s278
      %s280 = sphi 0, %s278
      %s281 = sphi 0, %s280
      %s295 = sphi 0, %s281
      %s299 = sphi 0, %s299
      %s301 = sphi 0, %s299
      %s302 = sphi 0, %s301
      %s316 = sphi 0, %s302
      %s320 = sphi 0, %s320
      %s322 = sphi 0, %s320
      %s323 = sphi 0, %s322
      %s337 = sphi 0, %s323
      %s343 = sphi 0, %s345
      %s346 = sphi 0, %s343
      %s347 = sphi 0, %s346
      %s363 = sphi 0, %s347
    $region4: #{tpu_custom_call.1} parent=1 // loop_header_branch
      %32 = sbr.rel (%p30) target = $region8
    $region5: #{tpu_custom_call.1} parent=1 // loop_body
      %s34 = ssub.s32 %s29, 1
      %s35 = ssub.s32 %s29, 2
      %s36 = sadd.s32 %s29, 1
      %s37 = ssub.s32 %s29, %s36
      %p38 = scmp.eq.s32.totalorder %s37, 0
      %s40 = sadd.s32 %s39, 1
      %s41 = scalar_select %p38, %s39, %s40
      %p44 = pneg %p38
      %p45 = scmp.eq.s32.totalorder %s29, 1
      %p46 = por %p44, %p45
      %p47 = scmp.ne.s32.totalorder %s39, %s42
      %p48 = scmp.eq.s32.totalorder %s29, 0
      %p49 = por %p47, %p48
      %p50 = scmp.ne.s32.totalorder %s39, %s42
      %p51 = scmp.eq.s32.totalorder %s34, 1
      %p52 = por %p50, %p51
      %p53 = scmp.ne.s32.totalorder %s42, %s43
      %p54 = scmp.eq.s32.totalorder %s34, 0
      %p55 = por %p53, %p54
      %p56 = scmp.ne.s32.totalorder %s42, %s43
      %p57 = scmp.eq.s32.totalorder %s35, 1
      %p58 = por %p56, %p57
      %p60 = scmp.ne.s32.totalorder %s43, %s59
      %p61 = scmp.eq.s32.totalorder %s35, 0
      %p62 = por %p60, %p61
      %s63 = ssub.s32 %s29, %s36
      %p64 = scmp.eq.s32.totalorder %s63, 0
      %s66 = sadd.s32 %s65, 1
      %s67 = scalar_select %p64, %s65, %s66
      %p70 = pneg %p64
      %p71 = scmp.eq.s32.totalorder %s29, 1
      %p72 = por %p70, %p71
      %p73 = scmp.ne.s32.totalorder %s65, %s68
      %p74 = scmp.eq.s32.totalorder %s29, 0
      %p75 = por %p73, %p74
      %p76 = scmp.ne.s32.totalorder %s65, %s68
      %p77 = scmp.eq.s32.totalorder %s34, 1
      %p78 = por %p76, %p77
      %p79 = scmp.ne.s32.totalorder %s68, %s69
      %p80 = scmp.eq.s32.totalorder %s34, 0
      %p81 = por %p79, %p80
      %p82 = scmp.ne.s32.totalorder %s68, %s69
      %p83 = scmp.eq.s32.totalorder %s35, 1
      %p84 = por %p82, %p83
      %p86 = scmp.ne.s32.totalorder %s69, %s85
      %p87 = scmp.eq.s32.totalorder %s35, 0
      %p88 = por %p86, %p87
      %s90 = sadd.s32 %s89, 1
      %p93 = scmp.eq.s32.totalorder %s29, 1
      %p94 = scmp.ne.s32.totalorder %s89, %s91
      %p95 = scmp.eq.s32.totalorder %s29, 0
      %p96 = por %p94, %p95
      %p97 = scmp.ne.s32.totalorder %s89, %s91
      %p98 = scmp.eq.s32.totalorder %s34, 1
      %p99 = por %p97, %p98
      %p100 = scmp.ne.s32.totalorder %s91, %s92
      %p101 = scmp.eq.s32.totalorder %s34, 0
      %p102 = por %p100, %p101
      %p103 = scmp.ne.s32.totalorder %s91, %s92
      %p104 = scmp.eq.s32.totalorder %s35, 1
      %p105 = por %p103, %p104
      %p107 = scmp.ne.s32.totalorder %s92, %s106
      %p108 = scmp.eq.s32.totalorder %s35, 0
      %p109 = por %p107, %p108
      %s111 = sadd.s32 %s110, 1
      %p114 = scmp.eq.s32.totalorder %s29, 1
      %p115 = scmp.ne.s32.totalorder %s110, %s112
      %p116 = scmp.eq.s32.totalorder %s29, 0
      %p117 = por %p115, %p116
      %p118 = scmp.ne.s32.totalorder %s110, %s112
      %p119 = scmp.eq.s32.totalorder %s34, 1
      %p120 = por %p118, %p119
      %p121 = scmp.ne.s32.totalorder %s112, %s113
      %p122 = scmp.eq.s32.totalorder %s34, 0
      %p123 = por %p121, %p122
      %p124 = scmp.ne.s32.totalorder %s112, %s113
      %p125 = scmp.eq.s32.totalorder %s35, 1
      %p126 = por %p124, %p125
      %p128 = scmp.ne.s32.totalorder %s113, %s127
      %p129 = scmp.eq.s32.totalorder %s35, 0
      %p130 = por %p128, %p129
      %s132 = sadd.s32 %s131, 1
      %p135 = scmp.eq.s32.totalorder %s29, 1
      %p136 = scmp.ne.s32.totalorder %s131, %s133
      %p137 = scmp.eq.s32.totalorder %s29, 0
      %p138 = por %p136, %p137
      %p139 = scmp.ne.s32.totalorder %s131, %s133
      %p140 = scmp.eq.s32.totalorder %s34, 1
      %p141 = por %p139, %p140
      %p142 = scmp.ne.s32.totalorder %s133, %s134
      %p143 = scmp.eq.s32.totalorder %s34, 0
      %p144 = por %p142, %p143
      %p145 = scmp.ne.s32.totalorder %s133, %s134
      %p146 = scmp.eq.s32.totalorder %s35, 1
      %p147 = por %p145, %p146
      %p149 = scmp.ne.s32.totalorder %s134, %s148
      %p150 = scmp.eq.s32.totalorder %s35, 0
      %p151 = por %p149, %p150
      %s153 = sadd.s32 %s152, 1
      %p156 = scmp.eq.s32.totalorder %s29, 1
      %p157 = scmp.ne.s32.totalorder %s152, %s154
      %p158 = scmp.eq.s32.totalorder %s29, 0
      %p159 = por %p157, %p158
      %p160 = scmp.ne.s32.totalorder %s152, %s154
      %p161 = scmp.eq.s32.totalorder %s34, 1
      %p162 = por %p160, %p161
      %p163 = scmp.ne.s32.totalorder %s154, %s155
      %p164 = scmp.eq.s32.totalorder %s34, 0
      %p165 = por %p163, %p164
      %p166 = scmp.ne.s32.totalorder %s154, %s155
      %p167 = scmp.eq.s32.totalorder %s35, 1
      %p168 = por %p166, %p167
      %p170 = scmp.ne.s32.totalorder %s155, %s169
      %p171 = scmp.eq.s32.totalorder %s35, 0
      %p172 = por %p170, %p171
      %s174 = sadd.s32 %s173, 1
      %p177 = scmp.eq.s32.totalorder %s29, 1
      %p178 = scmp.ne.s32.totalorder %s173, %s175
      %p179 = scmp.eq.s32.totalorder %s29, 0
      %p180 = por %p178, %p179
      %p181 = scmp.ne.s32.totalorder %s173, %s175
      %p182 = scmp.eq.s32.totalorder %s34, 1
      %p183 = por %p181, %p182
      %p184 = scmp.ne.s32.totalorder %s175, %s176
      %p185 = scmp.eq.s32.totalorder %s34, 0
      %p186 = por %p184, %p185
      %p187 = scmp.ne.s32.totalorder %s175, %s176
      %p188 = scmp.eq.s32.totalorder %s35, 1
      %p189 = por %p187, %p188
      %p191 = scmp.ne.s32.totalorder %s176, %s190
      %p192 = scmp.eq.s32.totalorder %s35, 0
      %p193 = por %p191, %p192
      %s195 = sadd.s32 %s194, 1
      %p198 = scmp.eq.s32.totalorder %s29, 1
      %p199 = scmp.ne.s32.totalorder %s194, %s196
      %p200 = scmp.eq.s32.totalorder %s29, 0
      %p201 = por %p199, %p200
      %p202 = scmp.ne.s32.totalorder %s194, %s196
      %p203 = scmp.eq.s32.totalorder %s34, 1
      %p204 = por %p202, %p203
      %p205 = scmp.ne.s32.totalorder %s196, %s197
      %p206 = scmp.eq.s32.totalorder %s34, 0
      %p207 = por %p205, %p206
      %p208 = scmp.ne.s32.totalorder %s196, %s197
      %p209 = scmp.eq.s32.totalorder %s35, 1
      %p210 = por %p208, %p209
      %p212 = scmp.ne.s32.totalorder %s197, %s211
      %p213 = scmp.eq.s32.totalorder %s35, 0
      %p214 = por %p212, %p213
      %s216 = sadd.s32 %s215, 1
      %p219 = scmp.eq.s32.totalorder %s29, 1
      %p220 = scmp.ne.s32.totalorder %s215, %s217
      %p221 = scmp.eq.s32.totalorder %s29, 0
      %p222 = por %p220, %p221
      %p223 = scmp.ne.s32.totalorder %s215, %s217
      %p224 = scmp.eq.s32.totalorder %s34, 1
      %p225 = por %p223, %p224
      %p226 = scmp.ne.s32.totalorder %s217, %s218
      %p227 = scmp.eq.s32.totalorder %s34, 0
      %p228 = por %p226, %p227
      %p229 = scmp.ne.s32.totalorder %s217, %s218
      %p230 = scmp.eq.s32.totalorder %s35, 1
      %p231 = por %p229, %p230
      %p233 = scmp.ne.s32.totalorder %s218, %s232
      %p234 = scmp.eq.s32.totalorder %s35, 0
      %p235 = por %p233, %p234
      %s237 = sadd.s32 %s236, 1
      %p240 = scmp.eq.s32.totalorder %s29, 1
      %p241 = scmp.ne.s32.totalorder %s236, %s238
      %p242 = scmp.eq.s32.totalorder %s29, 0
      %p243 = por %p241, %p242
      %p244 = scmp.ne.s32.totalorder %s236, %s238
      %p245 = scmp.eq.s32.totalorder %s34, 1
      %p246 = por %p244, %p245
      %p247 = scmp.ne.s32.totalorder %s238, %s239
      %p248 = scmp.eq.s32.totalorder %s34, 0
      %p249 = por %p247, %p248
      %p250 = scmp.ne.s32.totalorder %s238, %s239
      %p251 = scmp.eq.s32.totalorder %s35, 1
      %p252 = por %p250, %p251
      %p254 = scmp.ne.s32.totalorder %s239, %s253
      %p255 = scmp.eq.s32.totalorder %s35, 0
      %p256 = por %p254, %p255
      %s258 = sadd.s32 %s257, 1
      %p261 = scmp.eq.s32.totalorder %s29, 1
      %p262 = scmp.ne.s32.totalorder %s257, %s259
      %p263 = scmp.eq.s32.totalorder %s29, 0
      %p264 = por %p262, %p263
      %p265 = scmp.ne.s32.totalorder %s257, %s259
      %p266 = scmp.eq.s32.totalorder %s34, 1
      %p267 = por %p265, %p266
      %p268 = scmp.ne.s32.totalorder %s259, %s260
      %p269 = scmp.eq.s32.totalorder %s34, 0
      %p270 = por %p268, %p269
      %p271 = scmp.ne.s32.totalorder %s259, %s260
      %p272 = scmp.eq.s32.totalorder %s35, 1
      %p273 = por %p271, %p272
      %p275 = scmp.ne.s32.totalorder %s260, %s274
      %p276 = scmp.eq.s32.totalorder %s35, 0
      %p277 = por %p275, %p276
      %s279 = sadd.s32 %s278, 1
      %p282 = scmp.eq.s32.totalorder %s29, 1
      %p283 = scmp.ne.s32.totalorder %s278, %s280
      %p284 = scmp.eq.s32.totalorder %s29, 0
      %p285 = por %p283, %p284
      %p286 = scmp.ne.s32.totalorder %s278, %s280
      %p287 = scmp.eq.s32.totalorder %s34, 1
      %p288 = por %p286, %p287
      %p289 = scmp.ne.s32.totalorder %s280, %s281
      %p290 = scmp.eq.s32.totalorder %s34, 0
      %p291 = por %p289, %p290
      %p292 = scmp.ne.s32.totalorder %s280, %s281
      %p293 = scmp.eq.s32.totalorder %s35, 1
      %p294 = por %p292, %p293
      %p296 = scmp.ne.s32.totalorder %s281, %s295
      %p297 = scmp.eq.s32.totalorder %s35, 0
      %p298 = por %p296, %p297
      %s300 = sadd.s32 %s299, 1
      %p303 = scmp.eq.s32.totalorder %s29, 1
      %p304 = scmp.ne.s32.totalorder %s299, %s301
      %p305 = scmp.eq.s32.totalorder %s29, 0
      %p306 = por %p304, %p305
      %p307 = scmp.ne.s32.totalorder %s299, %s301
      %p308 = scmp.eq.s32.totalorder %s34, 1
      %p309 = por %p307, %p308
      %p310 = scmp.ne.s32.totalorder %s301, %s302
      %p311 = scmp.eq.s32.totalorder %s34, 0
      %p312 = por %p310, %p311
      %p313 = scmp.ne.s32.totalorder %s301, %s302
      %p314 = scmp.eq.s32.totalorder %s35, 1
      %p315 = por %p313, %p314
      %p317 = scmp.ne.s32.totalorder %s302, %s316
      %p318 = scmp.eq.s32.totalorder %s35, 0
      %p319 = por %p317, %p318
      %s321 = sadd.s32 %s320, 1
      %p324 = scmp.eq.s32.totalorder %s29, 1
      %p325 = scmp.ne.s32.totalorder %s320, %s322
      %p326 = scmp.eq.s32.totalorder %s29, 0
      %p327 = por %p325, %p326
      %p328 = scmp.ne.s32.totalorder %s320, %s322
      %p329 = scmp.eq.s32.totalorder %s34, 1
      %p330 = por %p328, %p329
      %p331 = scmp.ne.s32.totalorder %s322, %s323
      %p332 = scmp.eq.s32.totalorder %s34, 0
      %p333 = por %p331, %p332
      %p334 = scmp.ne.s32.totalorder %s322, %s323
      %p335 = scmp.eq.s32.totalorder %s35, 1
      %p336 = por %p334, %p335
      %p338 = scmp.ne.s32.totalorder %s323, %s337
      %p339 = scmp.eq.s32.totalorder %s35, 0
      %p340 = por %p338, %p339
      %s341 = ssub.s32 %s29, %s36
      %p342 = scmp.eq.s32.totalorder %s341, 0
      %s344 = sadd.s32 %s343, 1
      %s345 = scalar_select %p342, %s343, %s344
      %p348 = pneg %p342
      %p349 = scmp.eq.s32.totalorder %s29, 1
      %p350 = por %p348, %p349
      %p351 = scmp.ne.s32.totalorder %s343, %s346
      %p352 = scmp.eq.s32.totalorder %s29, 0
      %p353 = por %p351, %p352
      %p354 = scmp.ne.s32.totalorder %s343, %s346
      %p355 = scmp.eq.s32.totalorder %s34, 1
      %p356 = por %p354, %p355
      %p357 = scmp.ne.s32.totalorder %s346, %s347
      %p358 = scmp.eq.s32.totalorder %s34, 0
      %p359 = por %p357, %p358
      %p360 = scmp.ne.s32.totalorder %s346, %s347
      %p361 = scmp.eq.s32.totalorder %s35, 1
      %p362 = por %p360, %p361
      %p364 = scmp.ne.s32.totalorder %s347, %s363
      %p365 = scmp.eq.s32.totalorder %s35, 0
      %p366 = por %p364, %p365
      %p367 = scmp.le.s32.totalorder 1, %s29
      %p368 = scmp.lt.s32.totalorder %s29, 3
      %p369 = pnand %p367, %p368
      %p370 = pneg %p369
      // Predicated region
      $region9: #{tpu_custom_call.1} parent=5 // pred_check
        _
      $region10: #{tpu_custom_call.1} parent=5 // pred_check_branch
        %372 = sbr.rel (%p369) target = $region12
      $region11: #{tpu_custom_call.1} parent=5 // pred_region
        %s373 = ssub.s32 %s29, 1
        // Predicated region
        $region13: #{tpu_custom_call.1} parent=11 // pred_check
          %p374 = pneg %p102
        $region14: #{tpu_custom_call.1} parent=11 // pred_check_branch
          %376 = sbr.rel (%p374) target = $region16
        $region15: #{tpu_custom_call.1} parent=11 // pred_region
          _
        $region16: #{tpu_custom_call.1} parent=11 // pred_fallthru
          _
        // Predicated region
        $region17: #{tpu_custom_call.1} parent=11 // pred_check
          %p377 = pneg %p123
        $region18: #{tpu_custom_call.1} parent=11 // pred_check_branch
          %379 = sbr.rel (%p377) target = $region20
        $region19: #{tpu_custom_call.1} parent=11 // pred_region
          %381 = vsyncadd [#allocation6], 0
          %s383 = sshll.u32 %s3, 4
          %s384 = int_to_ptr.hbm [resolvable:$true] %s383
          %s385 = sshll.u32 [#allocation7], 4
          %s386 = int_to_ptr.vmem [resolvable:$true] %s385
          %388 = dma.hbm_to_vmem [thread:$0]  %s384, 16, %s386, [#allocation6]
        $region20: #{tpu_custom_call.1} parent=11 // pred_fallthru
          _
        // Predicated region
        $region21: #{tpu_custom_call.1} parent=11 // pred_check
          %p389 = pneg %p144
        $region22: #{tpu_custom_call.1} parent=11 // pred_check_branch
          %391 = sbr.rel (%p389) target = $region24
        $region23: #{tpu_custom_call.1} parent=11 // pred_region
          _
        $region24: #{tpu_custom_call.1} parent=11 // pred_fallthru
          _
        // Predicated region
        $region25: #{tpu_custom_call.1} parent=11 // pred_check
          %p392 = pneg %p165
        $region26: #{tpu_custom_call.1} parent=11 // pred_check_branch
          %394 = sbr.rel (%p392) target = $region28
        $region27: #{tpu_custom_call.1} parent=11 // pred_region
          _
        $region28: #{tpu_custom_call.1} parent=11 // pred_fallthru
          _
        // Predicated region
        $region29: #{tpu_custom_call.1} parent=11 // pred_check
          %p395 = pneg %p186
        $region30: #{tpu_custom_call.1} parent=11 // pred_check_branch
          %397 = sbr.rel (%p395) target = $region32
        $region31: #{tpu_custom_call.1} parent=11 // pred_region
          _
        $region32: #{tpu_custom_call.1} parent=11 // pred_fallthru
          _
        // Predicated region
        $region33: #{tpu_custom_call.1} parent=11 // pred_check
          %p398 = pneg %p207
        $region34: #{tpu_custom_call.1} parent=11 // pred_check_branch
          %400 = sbr.rel (%p398) target = $region36
        $region35: #{tpu_custom_call.1} parent=11 // pred_region
          _
        $region36: #{tpu_custom_call.1} parent=11 // pred_fallthru
          _
        // Predicated region
        $region37: #{tpu_custom_call.1} parent=11 // pred_check
          %p401 = pneg %p228
        $region38: #{tpu_custom_call.1} parent=11 // pred_check_branch
          %403 = sbr.rel (%p401) target = $region40
        $region39: #{tpu_custom_call.1} parent=11 // pred_region
          _
        $region40: #{tpu_custom_call.1} parent=11 // pred_fallthru
          _
        // Predicated region
        $region41: #{tpu_custom_call.1} parent=11 // pred_check
          %p404 = pneg %p249
        $region42: #{tpu_custom_call.1} parent=11 // pred_check_branch
          %406 = sbr.rel (%p404) target = $region44
        $region43: #{tpu_custom_call.1} parent=11 // pred_region
          _
        $region44: #{tpu_custom_call.1} parent=11 // pred_fallthru
          _
        // Predicated region
        $region45: #{tpu_custom_call.1} parent=11 // pred_check
          %p407 = pneg %p270
        $region46: #{tpu_custom_call.1} parent=11 // pred_check_branch
          %409 = sbr.rel (%p407) target = $region48
        $region47: #{tpu_custom_call.1} parent=11 // pred_region
          _
        $region48: #{tpu_custom_call.1} parent=11 // pred_fallthru
          _
        // Predicated region
        $region49: #{tpu_custom_call.1} parent=11 // pred_check
          %p410 = pneg %p291
        $region50: #{tpu_custom_call.1} parent=11 // pred_check_branch
          %412 = sbr.rel (%p410) target = $region52
        $region51: #{tpu_custom_call.1} parent=11 // pred_region
          _
        $region52: #{tpu_custom_call.1} parent=11 // pred_fallthru
          _
        // Predicated region
        $region53: #{tpu_custom_call.1} parent=11 // pred_check
          %p413 = pneg %p312
        $region54: #{tpu_custom_call.1} parent=11 // pred_check_branch
          %415 = sbr.rel (%p413) target = $region56
        $region55: #{tpu_custom_call.1} parent=11 // pred_region
          _
        $region56: #{tpu_custom_call.1} parent=11 // pred_fallthru
          _
        // Predicated region
        $region57: #{tpu_custom_call.1} parent=11 // pred_check
          %p416 = pneg %p333
        $region58: #{tpu_custom_call.1} parent=11 // pred_check_branch
          %418 = sbr.rel (%p416) target = $region60
        $region59: #{tpu_custom_call.1} parent=11 // pred_region
          _
        $region60: #{tpu_custom_call.1} parent=11 // pred_fallthru
          _
      $region12: #{tpu_custom_call.1} parent=5 // pred_fallthru
        _
      %p419 = scmp.lt.s32.totalorder %s29, 2
      // Predicated region
      $region61: #{tpu_custom_call.1} parent=5 // pred_check
        %p420 = pneg %p419
      $region62: #{tpu_custom_call.1} parent=5 // pred_check_branch
        %422 = sbr.rel (%p420) target = $region64
      $region63: #{tpu_custom_call.1} parent=5 // pred_region
        // Predicated region
        $region65: #{tpu_custom_call.1} parent=63 // pred_check
          %p423 = pneg %p49
        $region66: #{tpu_custom_call.1} parent=63 // pred_check_branch
          %425 = sbr.rel (%p423) target = $region68
        $region67: #{tpu_custom_call.1} parent=63 // pred_region
          %s426 = sand.u32 %s39, 1
          %s427 = scalar_lea.sflag [#allocation3], %s426
          %s428 = sand.u32 %s39, 1
          %s429 = smul.addr %s428, 8
          %s430 = scalar_lea.vmem [#allocation2], %s429
          %432 = vsyncadd %s427, 0
          %s433 = smul.addr %s29, 8
          %s434 = scalar_lea.hbm %s0, %s433
          %s436 = sshll.u32 %s434, 4
          %s437 = int_to_ptr.hbm [resolvable:$true] %s436
          %s438 = sshll.u32 %s430, 4
          %s439 = int_to_ptr.vmem [resolvable:$true] %s438
          %441 = dma.hbm_to_vmem [thread:$0]  %s437, 128, %s439, %s427
        $region68: #{tpu_custom_call.1} parent=63 // pred_fallthru
          _
        // Predicated region
        $region69: #{tpu_custom_call.1} parent=63 // pred_check
          %p442 = pneg %p75
        $region70: #{tpu_custom_call.1} parent=63 // pred_check_branch
          %444 = sbr.rel (%p442) target = $region72
        $region71: #{tpu_custom_call.1} parent=63 // pred_region
          %s445 = sand.u32 %s29, 1
          %s446 = scalar_lea.sflag [#allocation6], %s445
          %s447 = sand.u32 %s65, 1
          %s448 = scalar_lea.vmem [#allocation5], %s447
          %450 = vsyncadd %s446, 0
          %s451 = scalar_lea.hbm %s1, %s29
          %s453 = sshll.u32 %s451, 4
          %s454 = int_to_ptr.hbm [resolvable:$true] %s453
          %s455 = sshll.u32 %s448, 4
          %s456 = int_to_ptr.vmem [resolvable:$true] %s455
          %458 = dma.hbm_to_vmem [thread:$0]  %s454, 16, %s456, %s446
        $region72: #{tpu_custom_call.1} parent=63 // pred_fallthru
          _
      $region64: #{tpu_custom_call.1} parent=5 // pred_fallthru
        _
      %p459 = scmp.le.s32.totalorder 1, %s29
      %p460 = scmp.lt.s32.totalorder %s29, 3
      %p461 = pnand %p459, %p460
      %p462 = pneg %p461
      // Predicated region
      $region73: #{tpu_custom_call.1} parent=5 // pred_check
        _
      $region74: #{tpu_custom_call.1} parent=5 // pred_check_branch
        %464 = sbr.rel (%p461) target = $region76
      $region75: #{tpu_custom_call.1} parent=5 // pred_region
        %s465 = ssub.s32 %s29, 1
        %s466 = sand.u32 %s42, 1
        %s467 = scalar_lea.sflag [#allocation3], %s466
        %s468 = sand.u32 %s42, 1
        %s469 = smul.addr %s468, 8
        %s470 = scalar_lea.vmem [#allocation2], %s469
        // Predicated region
        $region77: #{tpu_custom_call.1} parent=75 // pred_check
          %p471 = pneg %p55
        $region78: #{tpu_custom_call.1} parent=75 // pred_check_branch
          %473 = sbr.rel (%p471) target = $region80
        $region79: #{tpu_custom_call.1} parent=75 // pred_region
          %475 = dma.done %s467, 128
        $region80: #{tpu_custom_call.1} parent=75 // pred_fallthru
          _
        %s476 = sand.u32 %s34, 1
        %s477 = scalar_lea.sflag [#allocation6], %s476
        %s478 = sand.u32 %s68, 1
        %s479 = scalar_lea.vmem [#allocation5], %s478
        // Predicated region
        $region81: #{tpu_custom_call.1} parent=75 // pred_check
          %p480 = pneg %p81
        $region82: #{tpu_custom_call.1} parent=75 // pred_check_branch
          %482 = sbr.rel (%p480) target = $region84
        $region83: #{tpu_custom_call.1} parent=75 // pred_region
          %484 = dma.done %s477, 16
        $region84: #{tpu_custom_call.1} parent=75 // pred_fallthru
          _
        // Predicated region
        $region85: #{tpu_custom_call.1} parent=75 // pred_check
          %p485 = pneg %p123
        $region86: #{tpu_custom_call.1} parent=75 // pred_check_branch
          %487 = sbr.rel (%p485) target = $region88
        $region87: #{tpu_custom_call.1} parent=75 // pred_region
          %489 = dma.done [#allocation6], 16
        $region88: #{tpu_custom_call.1} parent=75 // pred_fallthru
          _
        %s490 = sand.u32 %s42, 1
        %s491 = scalar_lea.sflag [#allocation3], %s490
        %s492 = sand.u32 %s42, 1
        %s493 = smul.addr %s492, 8
        %s494 = scalar_lea.vmem [#allocation2], %s493
        %p495 = pneg %p55
        %p496 = pneg %p52
        %s497 = sand.u32 %s34, 1
        %s498 = scalar_lea.sflag [#allocation6], %s497
        %s499 = sand.u32 %s68, 1
        %s500 = scalar_lea.vmem [#allocation5], %s499
        %p501 = pneg %p81
        %p502 = pneg %p78
        %p503 = pneg %p102
        %p504 = pneg %p99
        %p505 = pneg %p123
        %p506 = pneg %p120
        %p507 = pneg %p144
        %p508 = pneg %p141
        %p509 = pneg %p165
        %p510 = pneg %p162
        %p511 = pneg %p186
        %p512 = pneg %p183
        %p513 = pneg %p207
        %p514 = pneg %p204
        %p515 = pneg %p228
        %p516 = pneg %p225
        %p517 = pneg %p249
        %p518 = pneg %p246
        %p519 = pneg %p270
        %p520 = pneg %p267
        %p521 = pneg %p291
        %p522 = pneg %p288
        %p523 = pneg %p312
        %p524 = pneg %p309
        %p525 = pneg %p333
        %p526 = pneg %p330
        %p527 = pneg %p359
        %p528 = pneg %p356
        %s529 = sand.u32 %s346, 1
        %s530 = scalar_lea.sflag [#allocation4], %s529
        %s531 = sand.u32 %s346, 1
        %s532 = smul.addr %s531, 8
        %s533 = scalar_lea.vmem [#allocation8], %s532
        %v534 = vld [vmem:[%s470] sm:$0xff]
        %v535 = vld [vmem:[%s479] sm:$0x1]
        %vm536 = vcmp.eq.f32.partialorder %v535, 0.0
        %v537 = vsel %vm536, -1e+09, 0.0
        %v538 = vld [vmem:[%s2] sm:$0x1]
        %v539 = vld [vmem:[#allocation7] sm:$0x1]
        %vm540 = vcmask 261120
        %v541 = vsel %vm540, %v534, 0.0
        %542 = vadd.xlane.f32.xlu0 %v541
        %v543 = vpop.xlane.xlu0 %542
        %v544 = vrcp.pop 32.0
        %v545 = vmul.f32 32.0, %v544
        %v546 = vsub.f32 1.0, %v545
        %v547 = vmul.f32 %v544, %v546
        %v548 = vadd.f32 %v544, %v547
        %vm549 = vweird.f32 %v544
        %v550 = vsel %vm549, %v544, %v548
        %v551 = vmul.f32 %v543, %v550
        %v552 = vsub.f32 %v534, %v551
        %v553 = vmul.f32 %v552, %v552
        %v554 = vsel %vm540, %v553, 0.0
        %555 = vadd.xlane.f32.xlu0 %v554
        %v556 = vpop.xlane.xlu0 %555
        %v557 = vrcp.pop 31.0
        %v558 = vmul.f32 31.0, %v557
        %v559 = vsub.f32 1.0, %v558
        %v560 = vmul.f32 %v557, %v559
        %v561 = vadd.f32 %v557, %v560
        %vm562 = vweird.f32 %v557
        %v563 = vsel %vm562, %v557, %v561
        %v564 = vmul.f32 %v556, %v563
        %v565 = vrsqrt.pop %v564
        %v566 = vmul.f32 %v565, %v564
        %v567 = vmul.f32 %v566, %v565
        %v568 = vmul.f32 0.5, %v567
        %v569 = vsub.f32 1.5, %v568
        %v570 = vmul.f32 %v565, %v569
        %v571 = vmul.f32 %v564, %v570
        %vm572 = vcmp.eq.f32.partialorder %v564, inf
        %v573 = vsel %vm572, %v564, %v571
        %vm574 = vcmp.eq.f32.partialorder %v564, 0.0
        %v575 = vand.u32 %v564, 2147483648
        %v576 = vsel %vm574, %v575, %v573
        %v578 = vperm.slane %v538, 0
        %v580 = vmul.f32 %v578, %v552
        %v581 = vadd.f32 %v576, 1e-06
        %v582 = vrcp.pop %v581
        %v583 = vmul.f32 %v581, %v582
        %v584 = vsub.f32 1.0, %v583
        %v585 = vmul.f32 %v582, %v584
        %v586 = vadd.f32 %v582, %v585
        %vm587 = vweird.f32 %v581
        %vm588 = vweird.f32 %v582
        %vm589 = vmor %vm587, %vm588
        %v590 = vsel %vm589, %v582, %v586
        %v591 = vand.u32 2147483647, %v581
        %vm592 = vcmp.eq.f32.partialorder %v591, 8.507059e+37
        %v593 = vand.u32 %v581, 2147483648
        %v594 = vor.u32 1.1754944e-38, %v593
        %v595 = vsel %vm592, %v594, %v590
        %v596 = vmul.f32 %v580, %v595
        %v598 = vperm.slane %v539, 0
        %v600 = vadd.f32 %v596, %v598
        %v601 = vld [vmem:[%s4] sm:$0xff]
        %v602 = vld [vmem:[%s4 + $0x8] sm:$0xff]
        %v603 = vld [vmem:[%s4 + $0x10] sm:$0xff]
        %v604 = vld [vmem:[%s4 + $0x18] sm:$0xff]
        %v605 = vld [vmem:[%s5] sm:$0x1]
        %v607 = vperm.slane %v605, 0
        %v610 = vsel %vm540, %v600, 0
        %612 = vmatpush.msra.mxu0 0.0
        %613 = vmatpush.msra.mxu0 0.0
        %614 = vmatpush.msra.mxu0 0.0
        %615 = vmatpush.msra.mxu0 0.0
        %616 = vmatpush.msra.mxu0 0.0
        %617 = vmatpush.msra.mxu0 0.0
        %618 = vmatpush.msra.mxu0 0.0
        %619 = vmatpush.msra.mxu0 0.0
        %620 = vmatpush.msra.mxu0 0.0
        %621 = vmatpush.msra.mxu0 0.0
        %622 = vmatpush.msra.mxu0 0.0
        %623 = vmatpush.msra.mxu0 0.0
        %624 = vmatpush.msra.mxu0 %v604
        %625 = vmatpush.msra.mxu0 %v603
        %626 = vmatpush.msra.mxu0 %v602
        %627 = vmatpush.msra.mxu0 %v601
        %628 = vmatmul.f32.gmra.mxu0 %v610
        %v629 = vpop.f32.mrf.mxu0
        %v630 = vadd.f32 %v607, %v629
        %631 = vdwg.mxu0
        %v633 = vperm.slane %v537, 0
        %636 = vrot.lane.b32.xlu0 %v630, 96
        %v637 = vpop.permute.xlu0 %636
        %vm638 = vcmask 64512
        %v639 = vsel %vm638, %v630, 0
        %v641 = vsel %vm638, %v637, 0
        %643 = vmatpush.xpose.msra.mxu0 0.0
        %644 = vmatpush.xpose.msra.mxu0 0.0
        %645 = vmatpush.xpose.msra.mxu0 0.0
        %646 = vmatpush.xpose.msra.mxu0 0.0
        %647 = vmatpush.xpose.msra.mxu0 0.0
        %648 = vmatpush.xpose.msra.mxu0 0.0
        %649 = vmatpush.xpose.msra.mxu0 0.0
        %650 = vmatpush.xpose.msra.mxu0 0.0
        %651 = vmatpush.xpose.msra.mxu0 0.0
        %652 = vmatpush.xpose.msra.mxu0 0.0
        %653 = vmatpush.xpose.msra.mxu0 0.0
        %654 = vmatpush.xpose.msra.mxu0 0.0
        %655 = vmatpush.xpose.msra.mxu0 0.0
        %656 = vmatpush.xpose.msra.mxu0 0.0
        %657 = vmatpush.xpose.msra.mxu0 0.0
        %658 = vmatpush.xpose.msra.mxu0 %v641
        %659 = vmatmul.f32.gmra.mxu0 %v639
        %v660 = vpop.f32.mrf.mxu0
        %v661 = vadd.f32 %v633, %v660
        %662 = vdwg.mxu0
        %v663 = vsel %vm638, %v661, -inf
        %664 = vmax.xlane.f32.xlu0 %v663
        %v665 = vpop.xlane.xlu0 %664
        %v666 = vsub.f32 %v661, %v665
        %v667 = vmul.f32 %v666, 1.442695
        %v668 = vpow.pop %v667
        %v669 = vsel %vm638, %v668, 0.0
        %670 = vadd.xlane.f32.xlu0 %v669
        %v671 = vpop.xlane.xlu0 %670
        %v672 = vrcp.pop %v671
        %v673 = vmul.f32 %v671, %v672
        %v674 = vsub.f32 1.0, %v673
        %v675 = vmul.f32 %v672, %v674
        %v676 = vadd.f32 %v672, %v675
        %vm677 = vweird.f32 %v671
        %vm678 = vweird.f32 %v672
        %vm679 = vmor %vm677, %vm678
        %v680 = vsel %vm679, %v672, %v676
        %v681 = vand.u32 2147483647, %v671
        %vm682 = vcmp.eq.f32.partialorder %v681, 8.507059e+37
        %v683 = vand.u32 %v671, 2147483648
        %v684 = vor.u32 1.1754944e-38, %v683
        %v685 = vsel %vm682, %v684, %v680
        %686 = vrot.lane.b32.xlu0 %v630, 64
        %v687 = vpop.permute.xlu0 %686
        %v690 = vsel %vm638, %v668, 0
        %692 = vmatpush.msra.mxu0 0.0
        %693 = vmatpush.msra.mxu0 0.0
        %694 = vmatpush.msra.mxu0 0.0
        %695 = vmatpush.msra.mxu0 0.0
        %696 = vmatpush.msra.mxu0 0.0
        %697 = vmatpush.msra.mxu0 0.0
        %698 = vmatpush.msra.mxu0 0.0
        %699 = vmatpush.msra.mxu0 0.0
        %700 = vmatpush.msra.mxu0 0.0
        %701 = vmatpush.msra.mxu0 0.0
        %702 = vmatpush.msra.mxu0 0.0
        %703 = vmatpush.msra.mxu0 0.0
        %704 = vmatpush.msra.mxu0 0.0
        %705 = vmatpush.msra.mxu0 0.0
        %706 = vmatpush.msra.mxu0 0.0
        %707 = vmatpush.msra.mxu0 %v687
        %708 = vmatmul.f32.gmra.mxu0 %v690
        %v709 = vpop.f32.mrf.mxu0
        %v710 = vadd.f32 0.0, %v709
        %711 = vdwg.mxu0
        %v712 = vmul.f32 %v710, %v685
        %713 = vrot.lane.b32.xlu0 %v630, 120
        %v714 = vpop.permute.xlu0 %713
        %715 = vrot.lane.b32.xlu0 %v630, 88
        %v716 = vpop.permute.xlu0 %715
        %v717 = vsel %vm638, %v714, 0
        %v719 = vsel %vm638, %v716, 0
        %721 = vmatpush.xpose.msra.mxu0 0.0
        %722 = vmatpush.xpose.msra.mxu0 0.0
        %723 = vmatpush.xpose.msra.mxu0 0.0
        %724 = vmatpush.xpose.msra.mxu0 0.0
        %725 = vmatpush.xpose.msra.mxu0 0.0
        %726 = vmatpush.xpose.msra.mxu0 0.0
        %727 = vmatpush.xpose.msra.mxu0 0.0
        %728 = vmatpush.xpose.msra.mxu0 0.0
        %729 = vmatpush.xpose.msra.mxu0 0.0
        %730 = vmatpush.xpose.msra.mxu0 0.0
        %731 = vmatpush.xpose.msra.mxu0 0.0
        %732 = vmatpush.xpose.msra.mxu0 0.0
        %733 = vmatpush.xpose.msra.mxu0 0.0
        %734 = vmatpush.xpose.msra.mxu0 0.0
        %735 = vmatpush.xpose.msra.mxu0 0.0
        %736 = vmatpush.xpose.msra.mxu0 %v719
        %737 = vmatmul.f32.gmra.mxu0 %v717
        %v738 = vpop.f32.mrf.mxu0
        %v739 = vadd.f32 %v633, %v738
        %740 = vdwg.mxu0
        %v741 = vsel %vm638, %v739, -inf
        %742 = vmax.xlane.f32.xlu0 %v741
        %v743 = vpop.xlane.xlu0 %742
        %v744 = vsub.f32 %v739, %v743
        %v745 = vmul.f32 %v744, 1.442695
        %v746 = vpow.pop %v745
        %v747 = vsel %vm638, %v746, 0.0
        %748 = vadd.xlane.f32.xlu0 %v747
        %v749 = vpop.xlane.xlu0 %748
        %v750 = vrcp.pop %v749
        %v751 = vmul.f32 %v749, %v750
        %v752 = vsub.f32 1.0, %v751
        %v753 = vmul.f32 %v750, %v752
        %v754 = vadd.f32 %v750, %v753
        %vm755 = vweird.f32 %v749
        %vm756 = vweird.f32 %v750
        %vm757 = vmor %vm755, %vm756
        %v758 = vsel %vm757, %v750, %v754
        %v759 = vand.u32 2147483647, %v749
        %vm760 = vcmp.eq.f32.partialorder %v759, 8.507059e+37
        %v761 = vand.u32 %v749, 2147483648
        %v762 = vor.u32 1.1754944e-38, %v761
        %v763 = vsel %vm760, %v762, %v758
        %764 = vrot.lane.b32.xlu0 %v630, 56
        %v765 = vpop.permute.xlu0 %764
        %v768 = vsel %vm638, %v746, 0
        %770 = vmatpush.msra.mxu0 0.0
        %771 = vmatpush.msra.mxu0 0.0
        %772 = vmatpush.msra.mxu0 0.0
        %773 = vmatpush.msra.mxu0 0.0
        %774 = vmatpush.msra.mxu0 0.0
        %775 = vmatpush.msra.mxu0 0.0
        %776 = vmatpush.msra.mxu0 0.0
        %777 = vmatpush.msra.mxu0 0.0
        %778 = vmatpush.msra.mxu0 0.0
        %779 = vmatpush.msra.mxu0 0.0
        %780 = vmatpush.msra.mxu0 0.0
        %781 = vmatpush.msra.mxu0 0.0
        %782 = vmatpush.msra.mxu0 0.0
        %783 = vmatpush.msra.mxu0 0.0
        %784 = vmatpush.msra.mxu0 0.0
        %785 = vmatpush.msra.mxu0 %v765
        %786 = vmatmul.f32.gmra.mxu0 %v768
        %v787 = vpop.f32.mrf.mxu0
        %v788 = vadd.f32 0.0, %v787
        %789 = vdwg.mxu0
        %v790 = vmul.f32 %v788, %v763
        %791 = vrot.lane.b32.xlu0 %v630, 112
        %v792 = vpop.permute.xlu0 %791
        %793 = vrot.lane.b32.xlu0 %v630, 80
        %v794 = vpop.permute.xlu0 %793
        %v795 = vsel %vm638, %v792, 0
        %v797 = vsel %vm638, %v794, 0
        %799 = vmatpush.xpose.msra.mxu0 0.0
        %800 = vmatpush.xpose.msra.mxu0 0.0
        %801 = vmatpush.xpose.msra.mxu0 0.0
        %802 = vmatpush.xpose.msra.mxu0 0.0
        %803 = vmatpush.xpose.msra.mxu0 0.0
        %804 = vmatpush.xpose.msra.mxu0 0.0
        %805 = vmatpush.xpose.msra.mxu0 0.0
        %806 = vmatpush.xpose.msra.mxu0 0.0
        %807 = vmatpush.xpose.msra.mxu0 0.0
        %808 = vmatpush.xpose.msra.mxu0 0.0
        %809 = vmatpush.xpose.msra.mxu0 0.0
        %810 = vmatpush.xpose.msra.mxu0 0.0
        %811 = vmatpush.xpose.msra.mxu0 0.0
        %812 = vmatpush.xpose.msra.mxu0 0.0
        %813 = vmatpush.xpose.msra.mxu0 0.0
        %814 = vmatpush.xpose.msra.mxu0 %v797
        %815 = vmatmul.f32.gmra.mxu0 %v795
        %v816 = vpop.f32.mrf.mxu0
        %v817 = vadd.f32 %v633, %v816
        %818 = vdwg.mxu0
        %v819 = vsel %vm638, %v817, -inf
        %820 = vmax.xlane.f32.xlu0 %v819
        %v821 = vpop.xlane.xlu0 %820
        %v822 = vsub.f32 %v817, %v821
        %v823 = vmul.f32 %v822, 1.442695
        %v824 = vpow.pop %v823
        %v825 = vsel %vm638, %v824, 0.0
        %826 = vadd.xlane.f32.xlu0 %v825
        %v827 = vpop.xlane.xlu0 %826
        %v828 = vrcp.pop %v827
        %v829 = vmul.f32 %v827, %v828
        %v830 = vsub.f32 1.0, %v829
        %v831 = vmul.f32 %v828, %v830
        %v832 = vadd.f32 %v828, %v831
        %vm833 = vweird.f32 %v827
        %vm834 = vweird.f32 %v828
        %vm835 = vmor %vm833, %vm834
        %v836 = vsel %vm835, %v828, %v832
        %v837 = vand.u32 2147483647, %v827
        %vm838 = vcmp.eq.f32.partialorder %v837, 8.507059e+37
        %v839 = vand.u32 %v827, 2147483648
        %v840 = vor.u32 1.1754944e-38, %v839
        %v841 = vsel %vm838, %v840, %v836
        %842 = vrot.lane.b32.xlu0 %v630, 48
        %v843 = vpop.permute.xlu0 %842
        %v846 = vsel %vm638, %v824, 0
        %848 = vmatpush.msra.mxu0 0.0
        %849 = vmatpush.msra.mxu0 0.0
        %850 = vmatpush.msra.mxu0 0.0
        %851 = vmatpush.msra.mxu0 0.0
        %852 = vmatpush.msra.mxu0 0.0
        %853 = vmatpush.msra.mxu0 0.0
        %854 = vmatpush.msra.mxu0 0.0
        %855 = vmatpush.msra.mxu0 0.0
        %856 = vmatpush.msra.mxu0 0.0
        %857 = vmatpush.msra.mxu0 0.0
        %858 = vmatpush.msra.mxu0 0.0
        %859 = vmatpush.msra.mxu0 0.0
        %860 = vmatpush.msra.mxu0 0.0
        %861 = vmatpush.msra.mxu0 0.0
        %862 = vmatpush.msra.mxu0 0.0
        %863 = vmatpush.msra.mxu0 %v843
        %864 = vmatmul.f32.gmra.mxu0 %v846
        %v865 = vpop.f32.mrf.mxu0
        %v866 = vadd.f32 0.0, %v865
        %867 = vdwg.mxu0
        %v868 = vmul.f32 %v866, %v841
        %869 = vrot.lane.b32.xlu0 %v630, 104
        %v870 = vpop.permute.xlu0 %869
        %871 = vrot.lane.b32.xlu0 %v630, 72
        %v872 = vpop.permute.xlu0 %871
        %v873 = vsel %vm638, %v870, 0
        %v875 = vsel %vm638, %v872, 0
        %877 = vmatpush.xpose.msra.mxu0 0.0
        %878 = vmatpush.xpose.msra.mxu0 0.0
        %879 = vmatpush.xpose.msra.mxu0 0.0
        %880 = vmatpush.xpose.msra.mxu0 0.0
        %881 = vmatpush.xpose.msra.mxu0 0.0
        %882 = vmatpush.xpose.msra.mxu0 0.0
        %883 = vmatpush.xpose.msra.mxu0 0.0
        %884 = vmatpush.xpose.msra.mxu0 0.0
        %885 = vmatpush.xpose.msra.mxu0 0.0
        %886 = vmatpush.xpose.msra.mxu0 0.0
        %887 = vmatpush.xpose.msra.mxu0 0.0
        %888 = vmatpush.xpose.msra.mxu0 0.0
        %889 = vmatpush.xpose.msra.mxu0 0.0
        %890 = vmatpush.xpose.msra.mxu0 0.0
        %891 = vmatpush.xpose.msra.mxu0 0.0
        %892 = vmatpush.xpose.msra.mxu0 %v875
        %893 = vmatmul.f32.gmra.mxu0 %v873
        %v894 = vpop.f32.mrf.mxu0
        %v895 = vadd.f32 %v633, %v894
        %896 = vdwg.mxu0
        %v897 = vsel %vm638, %v895, -inf
        %898 = vmax.xlane.f32.xlu0 %v897
        %v899 = vpop.xlane.xlu0 %898
        %v900 = vsub.f32 %v895, %v899
        %v901 = vmul.f32 %v900, 1.442695
        %v902 = vpow.pop %v901
        %v903 = vsel %vm638, %v902, 0.0
        %904 = vadd.xlane.f32.xlu0 %v903
        %v905 = vpop.xlane.xlu0 %904
        %v906 = vrcp.pop %v905
        %v907 = vmul.f32 %v905, %v906
        %v908 = vsub.f32 1.0, %v907
        %v909 = vmul.f32 %v906, %v908
        %v910 = vadd.f32 %v906, %v909
        %vm911 = vweird.f32 %v905
        %vm912 = vweird.f32 %v906
        %vm913 = vmor %vm911, %vm912
        %v914 = vsel %vm913, %v906, %v910
        %v915 = vand.u32 2147483647, %v905
        %vm916 = vcmp.eq.f32.partialorder %v915, 8.507059e+37
        %v917 = vand.u32 %v905, 2147483648
        %v918 = vor.u32 1.1754944e-38, %v917
        %v919 = vsel %vm916, %v918, %v914
        %920 = vrot.lane.b32.xlu0 %v630, 40
        %v921 = vpop.permute.xlu0 %920
        %v924 = vsel %vm638, %v902, 0
        %926 = vmatpush.msra.mxu0 0.0
        %927 = vmatpush.msra.mxu0 0.0
        %928 = vmatpush.msra.mxu0 0.0
        %929 = vmatpush.msra.mxu0 0.0
        %930 = vmatpush.msra.mxu0 0.0
        %931 = vmatpush.msra.mxu0 0.0
        %932 = vmatpush.msra.mxu0 0.0
        %933 = vmatpush.msra.mxu0 0.0
        %934 = vmatpush.msra.mxu0 0.0
        %935 = vmatpush.msra.mxu0 0.0
        %936 = vmatpush.msra.mxu0 0.0
        %937 = vmatpush.msra.mxu0 0.0
        %938 = vmatpush.msra.mxu0 0.0
        %939 = vmatpush.msra.mxu0 0.0
        %940 = vmatpush.msra.mxu0 0.0
        %941 = vmatpush.msra.mxu0 %v921
        %942 = vmatmul.f32.gmra.mxu0 %v924
        %v943 = vpop.f32.mrf.mxu0
        %v944 = vadd.f32 0.0, %v943
        %945 = vdwg.mxu0
        %v946 = vmul.f32 %v944, %v919
        %948 = vrot.lane.b32.xlu0 %v790, 8
        %v949 = vpop.permute.xlu0 %948
        %952 = vrot.lane.b32.xlu0 %v868, 16
        %v953 = vpop.permute.xlu0 %952
        %956 = vrot.lane.b32.xlu0 %v946, 24
        %v957 = vpop.permute.xlu0 %956
        %v959 = vsel %vm638, %v712, %v949
        %vm960 = vcmask 130048
        %v961 = vsel %vm960, %v959, %v953
        %vm962 = vcmask 195584
        %v963 = vsel %vm962, %v961, %v957
        %v964 = vld [vmem:[%s6] sm:$0xff]
        %v965 = vld [vmem:[%s6 + $0x8] sm:$0xff]
        %v966 = vld [vmem:[%s6 + $0x10] sm:$0xff]
        %v967 = vld [vmem:[%s6 + $0x18] sm:$0xff]
        %v968 = vld [vmem:[%s7] sm:$0x1]
        %v970 = vperm.slane %v968, 0
        %v973 = vsel %vm540, %v963, 0
        %975 = vmatpush.msra.mxu0 0.0
        %976 = vmatpush.msra.mxu0 0.0
        %977 = vmatpush.msra.mxu0 0.0
        %978 = vmatpush.msra.mxu0 0.0
        %979 = vmatpush.msra.mxu0 0.0
        %980 = vmatpush.msra.mxu0 0.0
        %981 = vmatpush.msra.mxu0 0.0
        %982 = vmatpush.msra.mxu0 0.0
        %983 = vmatpush.msra.mxu0 0.0
        %984 = vmatpush.msra.mxu0 0.0
        %985 = vmatpush.msra.mxu0 0.0
        %986 = vmatpush.msra.mxu0 0.0
        %987 = vmatpush.msra.mxu0 %v967
        %988 = vmatpush.msra.mxu0 %v966
        %989 = vmatpush.msra.mxu0 %v965
        %990 = vmatpush.msra.mxu0 %v964
        %991 = vmatmul.f32.gmra.mxu0 %v973
        %v992 = vpop.f32.mrf.mxu0
        %v993 = vadd.f32 %v970, %v992
        %994 = vdwg.mxu0
        %v995 = vadd.f32 %v534, %v993
        %v996 = vld [vmem:[%s8] sm:$0x1]
        %v997 = vld [vmem:[%s9] sm:$0x1]
        %v998 = vsel %vm540, %v995, 0.0
        %999 = vadd.xlane.f32.xlu0 %v998
        %v1000 = vpop.xlane.xlu0 %999
        %v1001 = vmul.f32 %v1000, %v550
        %v1002 = vsub.f32 %v995, %v1001
        %v1003 = vmul.f32 %v1002, %v1002
        %v1004 = vsel %vm540, %v1003, 0.0
        %1005 = vadd.xlane.f32.xlu0 %v1004
        %v1006 = vpop.xlane.xlu0 %1005
        %v1007 = vmul.f32 %v1006, %v563
        %v1008 = vrsqrt.pop %v1007
        %v1009 = vmul.f32 %v1008, %v1007
        %v1010 = vmul.f32 %v1009, %v1008
        %v1011 = vmul.f32 0.5, %v1010
        %v1012 = vsub.f32 1.5, %v1011
        %v1013 = vmul.f32 %v1008, %v1012
        %v1014 = vmul.f32 %v1007, %v1013
        %vm1015 = vcmp.eq.f32.partialorder %v1007, inf
        %v1016 = vsel %vm1015, %v1007, %v1014
        %vm1017 = vcmp.eq.f32.partialorder %v1007, 0.0
        %v1018 = vand.u32 %v1007, 2147483648
        %v1019 = vsel %vm1017, %v1018, %v1016
        %v1021 = vperm.slane %v996, 0
        %v1023 = vmul.f32 %v1021, %v1002
        %v1024 = vadd.f32 %v1019, 1e-06
        %v1025 = vrcp.pop %v1024
        %v1026 = vmul.f32 %v1024, %v1025
        %v1027 = vsub.f32 1.0, %v1026
        %v1028 = vmul.f32 %v1025, %v1027
        %v1029 = vadd.f32 %v1025, %v1028
        %vm1030 = vweird.f32 %v1024
        %vm1031 = vweird.f32 %v1025
        %vm1032 = vmor %vm1030, %vm1031
        %v1033 = vsel %vm1032, %v1025, %v1029
        %v1034 = vand.u32 2147483647, %v1024
        %vm1035 = vcmp.eq.f32.partialorder %v1034, 8.507059e+37
        %v1036 = vand.u32 %v1024, 2147483648
        %v1037 = vor.u32 1.1754944e-38, %v1036
        %v1038 = vsel %vm1035, %v1037, %v1033
        %v1039 = vmul.f32 %v1023, %v1038
        %v1041 = vperm.slane %v997, 0
        %v1043 = vadd.f32 %v1039, %v1041
        %v1044 = vld [vmem:[%s10] sm:$0xff]
        %v1045 = vld [vmem:[%s10 + $0x8] sm:$0xff]
        %v1046 = vld [vmem:[%s10 + $0x10] sm:$0xff]
        %v1047 = vld [vmem:[%s10 + $0x18] sm:$0xff]
        %v1048 = vld [vmem:[%s11] sm:$0x1]
        %v1050 = vperm.slane %v1048, 0
        %v1053 = vsel %vm540, %v1043, 0
        %1055 = vmatpush.msra.mxu0 0.0
        %1056 = vmatpush.msra.mxu0 0.0
        %1057 = vmatpush.msra.mxu0 0.0
        %1058 = vmatpush.msra.mxu0 0.0
        %1059 = vmatpush.msra.mxu0 0.0
        %1060 = vmatpush.msra.mxu0 0.0
        %1061 = vmatpush.msra.mxu0 0.0
        %1062 = vmatpush.msra.mxu0 0.0
        %1063 = vmatpush.msra.mxu0 0.0
        %1064 = vmatpush.msra.mxu0 0.0
        %1065 = vmatpush.msra.mxu0 0.0
        %1066 = vmatpush.msra.mxu0 0.0
        %1067 = vmatpush.msra.mxu0 %v1047
        %1068 = vmatpush.msra.mxu0 %v1046
        %1069 = vmatpush.msra.mxu0 %v1045
        %1070 = vmatpush.msra.mxu0 %v1044
        %1071 = vmatmul.f32.gmra.mxu0 %v1053
        %v1072 = vpop.f32.mrf.mxu0
        %v1073 = vadd.f32 %v1050, %v1072
        %1074 = vdwg.mxu0
        %v1075 = vmax.f32 %v1073, 0.0
        %v1076 = vld [vmem:[%s12] sm:$0xff]
        %v1077 = vld [vmem:[%s12 + $0x8] sm:$0xff]
        %v1078 = vld [vmem:[%s12 + $0x10] sm:$0xff]
        %v1079 = vld [vmem:[%s12 + $0x18] sm:$0xff]
        %v1080 = vld [vmem:[%s12 + $0x20] sm:$0xff]
        %v1081 = vld [vmem:[%s12 + $0x28] sm:$0xff]
        %v1082 = vld [vmem:[%s12 + $0x30] sm:$0xff]
        %v1083 = vld [vmem:[%s12 + $0x38] sm:$0xff]
        %v1084 = vld [vmem:[%s13] sm:$0x1]
        %v1086 = vperm.slane %v1084, 0
        %vm1088 = vcmask 523264
        %v1090 = vsel %vm1088, %v1075, 0
        %1092 = vmatpush.msra.mxu0 0.0
        %1093 = vmatpush.msra.mxu0 0.0
        %1094 = vmatpush.msra.mxu0 0.0
        %1095 = vmatpush.msra.mxu0 0.0
        %1096 = vmatpush.msra.mxu0 0.0
        %1097 = vmatpush.msra.mxu0 0.0
        %1098 = vmatpush.msra.mxu0 0.0
        %1099 = vmatpush.msra.mxu0 0.0
        %1100 = vmatpush.msra.mxu0 %v1083
        %1101 = vmatpush.msra.mxu0 %v1082
        %1102 = vmatpush.msra.mxu0 %v1081
        %1103 = vmatpush.msra.mxu0 %v1080
        %1104 = vmatpush.msra.mxu0 %v1079
        %1105 = vmatpush.msra.mxu0 %v1078
        %1106 = vmatpush.msra.mxu0 %v1077
        %1107 = vmatpush.msra.mxu0 %v1076
        %1108 = vmatmul.f32.gmra.mxu0 %v1090
        %v1109 = vpop.f32.mrf.mxu0
        %v1110 = vadd.f32 %v1086, %v1109
        %1111 = vdwg.mxu0
        %v1112 = vadd.f32 %v995, %v1110
        %1113 = vst.msk [vmem:[%s533] sm:$0xff] %vm540, %v1112
        %s1114 = sand.u32 %s346, 1
        %s1115 = scalar_lea.sflag [#allocation4], %s1114
        %s1116 = sand.u32 %s346, 1
        %s1117 = smul.addr %s1116, 8
        %s1118 = scalar_lea.vmem [#allocation8], %s1117
        // Predicated region
        $region89: #{tpu_custom_call.1} parent=75 // pred_check
          %p1119 = pneg %p356
        $region90: #{tpu_custom_call.1} parent=75 // pred_check_branch
          %1121 = sbr.rel (%p1119) target = $region92
        $region91: #{tpu_custom_call.1} parent=75 // pred_region
          %1123 = vsyncadd %s1115, 0
          %s1124 = smul.addr %s34, 8
          %s1125 = scalar_lea.hbm %s14, %s1124
          %s1127 = sshll.u32 %s1118, 4
          %s1128 = int_to_ptr.vmem [resolvable:$true] %s1127
          %s1129 = sshll.u32 %s1125, 4
          %s1130 = int_to_ptr.hbm [resolvable:$true] %s1129
          %1132 = dma.vmem_to_hbm [thread:$0]  %s1128, 128, %s1130, %s1115
        $region92: #{tpu_custom_call.1} parent=75 // pred_fallthru
          _
      $region76: #{tpu_custom_call.1} parent=5 // pred_fallthru
        _
      %p1133 = scmp.le.s32.totalorder 2, %s29
      // Predicated region
      $region93: #{tpu_custom_call.1} parent=5 // pred_check
        %p1134 = pneg %p1133
      $region94: #{tpu_custom_call.1} parent=5 // pred_check_branch
        %1136 = sbr.rel (%p1134) target = $region96
      $region95: #{tpu_custom_call.1} parent=5 // pred_region
        %s1137 = ssub.s32 %s29, 2
        // Predicated region
        $region97: #{tpu_custom_call.1} parent=95 // pred_check
          %p1138 = pneg %p362
        $region98: #{tpu_custom_call.1} parent=95 // pred_check_branch
          %1140 = sbr.rel (%p1138) target = $region100
        $region99: #{tpu_custom_call.1} parent=95 // pred_region
          %s1141 = sand.u32 %s347, 1
          %s1142 = scalar_lea.sflag [#allocation4], %s1141
          %s1143 = sand.u32 %s347, 1
          %s1144 = smul.addr %s1143, 8
          %s1145 = scalar_lea.vmem [#allocation8], %s1144
          %1147 = dma.done %s1142, 128
        $region100: #{tpu_custom_call.1} parent=95 // pred_fallthru
          _
      $region96: #{tpu_custom_call.1} parent=5 // pred_fallthru
        _
    $region6: #{tpu_custom_call.1} parent=1 // loop_footer
      %s33 = sadd.s32 1, %s29
    $region7: #{tpu_custom_call.1} parent=1 // loop_footer_branch
      %28 = sbr.rel target = $region3
    $region8: #{tpu_custom_call.1} parent=1 // loop_exit
      _
    %1148 = vsyncpa [#allocation3], 1
    %s1149 = scalar_lea.sflag [#allocation3], 1
    %1150 = vsyncpa %s1149, 1
    %1151 = vsyncpa [#allocation6], 1
    %s1152 = scalar_lea.sflag [#allocation6], 1
    %1153 = vsyncpa %s1152, 1
    %1154 = vsyncpa [#allocation4], 1
    %s1155 = scalar_lea.sflag [#allocation4], 1
    %1156 = vsyncpa %s1155, 1

</llo_original>
